<compile_context>
chip_gen: v7x
topology: tpu7x:2x2x1
jax: 0.10.0
libtpu: 0.0.40
codegen_flags: <defaults>
</compile_context>

<pallas_src>
import functools

import jax
import jax.numpy as jnp
from jax import lax
from jax.experimental import pallas as pl
from jax.experimental.pallas import tpu as pltpu

EPS = 1e-5

_TAPS = tuple((dy, dx) for dy in range(3) for dx in range(3))   # t == dy*3 + dx


def _vmem_limit_bytes():
    # ~3/4 of physical VMEM (96 MiB on v5e/v6e, 48 MiB per TC on v7x), safe fallback.
    try:
        cap = pltpu.get_tpu_info().vmem_capacity_bytes
        return int(min(cap * 3 // 4, 100 * 1024 * 1024))
    except Exception:
        return 32 * 1024 * 1024


# ---------------------------------------------------------------------------
# Fused kernel: one image per grid step.
#   inputs : x (parity-plane NHWC tile), per-tap weights (9, Cin, Cout) bf16,
#            folded BN scale/bias (1, Cout) f32  [+ downsample conv/BN]
#   output : (1, Ho*Wo, Cout) f32
#   scratch: (Ho+2, Wo+2, Cout) bf16 halo buffer for the conv1 activation
# ---------------------------------------------------------------------------
def _residual_block_kernel(*refs, stride, down_sample, Ho, Wo):
    if down_sample:
        (x_ref, w1_ref, s1_ref, b1_ref, w2_ref, s2_ref, b2_ref,
         wd_ref, sd_ref, bd_ref, o_ref, h1_ref) = refs
    else:
        (x_ref, w1_ref, s1_ref, b1_ref, w2_ref, s2_ref, b2_ref,
         o_ref, h1_ref) = refs

    Mo = Ho * Wo
    Cout = o_ref.shape[-1]

    # ---- conv1 (and downsample conv): 9 per-tap MXU matmuls, f32 accumulation.
    #      The activation tile is read from HBM exactly once (pipelined input block);
    #      taps are unit-stride VMEM views, cast to bf16 only for the MXU.
    acc1 = jnp.zeros((Mo, Cout), jnp.float32)
    accd = jnp.zeros((Mo, Cout), jnp.float32) if down_sample else None
    for t, (dy, dx) in enumerate(_TAPS):
        blk = (dy % stride) * stride + (dx % stride)        # parity plane (space-to-depth)
        r0, c0 = dy // stride, dx // stride
        tap = x_ref[blk, r0:r0 + Ho, c0:c0 + Wo, :]
        tap = tap.reshape(Mo, tap.shape[-1]).astype(jnp.bfloat16)
        acc1 = acc1 + jnp.dot(tap, w1_ref[t], preferred_element_type=jnp.float32)
        if down_sample:
            accd = accd + jnp.dot(tap, wd_ref[t], preferred_element_type=jnp.float32)

    # BN1 + ReLU (f32 epilogue); the intermediate activation stays in VMEM as bf16.
    h1 = jnp.maximum(acc1 * s1_ref[...] + b1_ref[...], 0.0)
    h1_ref[...] = jnp.zeros_like(h1_ref)                                  # zero halo
    h1_ref[1:Ho + 1, 1:Wo + 1, :] = h1.reshape(Ho, Wo, Cout).astype(h1_ref.dtype)

    # Residual path, kept in f32.
    if down_sample:
        res = accd * sd_ref[...] + bd_ref[...]
    else:
        res = x_ref[0, 1:Ho + 1, 1:Wo + 1, :].reshape(Mo, Cout).astype(jnp.float32)

    # ---- conv2 + BN2 + residual add + ReLU ----
    acc2 = jnp.zeros((Mo, Cout), jnp.float32)
    for t, (dy, dx) in enumerate(_TAPS):
        tap2 = h1_ref[dy:dy + Ho, dx:dx + Wo, :].reshape(Mo, Cout)
        acc2 = acc2 + jnp.dot(tap2, w2_ref[t], preferred_element_type=jnp.float32)
    out = acc2 * s2_ref[...] + b2_ref[...] + res
    o_ref[0] = jnp.maximum(out, 0.0).astype(o_ref.dtype)


# ---------------------------------------------------------------------------
# Host-side prep (single cheap passes: transpose / pad / parity split / BN fold)
# ---------------------------------------------------------------------------
def _prep_input(x_nhwc, stride, dtype):
    """Zero-pad spatially; for stride 2, space-to-depth by row/col parity so every
    3x3 tap is a unit-stride VMEM slice.  Returns (N*stride^2, Hq, Wq, Cin)."""
    N, H, W, Cin = x_nhwc.shape
    Ho = (H - 1) // stride + 1
    Wo = (W - 1) // stride + 1
    xp = jnp.pad(x_nhwc.astype(dtype), ((0, 0), (1, 1), (1, 1), (0, 0)))
    if stride == 1:
        return xp, Ho, Wo
    assert stride == 2, "only stride 1 and 2 are supported"   # TODO(synk): general stride
    Hp, Wp = H + 2, W + 2
    Hq, Wq = (Hp + 1) // 2, (Wp + 1) // 2
    xp = jnp.pad(xp, ((0, 0), (0, 2 * Hq - Hp), (0, 2 * Wq - Wp), (0, 0)))
    xp = xp.reshape(N, Hq, 2, Wq, 2, Cin).transpose(0, 2, 4, 1, 3, 5)
    return xp.reshape(N * 4, Hq, Wq, Cin), Ho, Wo


def _prep_conv_w(w_oihw):
    # (O, I, 3, 3) -> (3, 3, I, O) -> (9, I, O), bf16 (MXU operand only)
    O, I = w_oihw.shape[0], w_oihw.shape[1]
    return jnp.transpose(w_oihw, (2, 3, 1, 0)).reshape(9, I, O).astype(jnp.bfloat16)


def _fold_bn(bn):
    gamma, beta, mean, var = bn
    scale = (gamma / jnp.sqrt(var + EPS)).astype(jnp.float32)
    bias = (beta - mean * scale).astype(jnp.float32)
    return scale.reshape(1, -1), bias.reshape(1, -1)


def residual_block_forward(x_nchw, params, *, stride=1, down_sample=False):
    """Pallas implementation of ResidualBlock.forward (NCHW in / NCHW out, eval-mode BN)."""
    N, Cin, H, W = x_nchw.shape
    Cout = params['conv1_w'].shape[0]

    x = jnp.transpose(x_nchw, (0, 2, 3, 1))                   # NCHW -> NHWC
    # Identity shortcut needs the exact f32 input; conv-only paths stream bf16.
    x_dtype = jnp.bfloat16 if down_sample else jnp.float32
    x_prep, Ho, Wo = _prep_input(x, stride, x_dtype)
    Mo = Ho * Wo
    s2n = stride * stride
    Hq, Wq = x_prep.shape[1], x_prep.shape[2]

    w1 = _prep_conv_w(params['conv1_w'])
    sc1, bi1 = _fold_bn(params['bn1'])
    w2 = _prep_conv_w(params['conv2_w'])
    sc2, bi2 = _fold_bn(params['bn2'])

    in_specs = [
        pl.BlockSpec((s2n, Hq, Wq, Cin), lambda n: (n, 0, 0, 0)),
        # Grid-constant block indices: weights / BN vectors DMA'd once, VMEM-resident.
        pl.BlockSpec((9, Cin, Cout), lambda n: (0, 0, 0)),
        pl.BlockSpec((1, Cout), lambda n: (0, 0)),
        pl.BlockSpec((1, Cout), lambda n: (0, 0)),
        pl.BlockSpec((9, Cout, Cout), lambda n: (0, 0, 0)),
        pl.BlockSpec((1, Cout), lambda n: (0, 0)),
        pl.BlockSpec((1, Cout), lambda n: (0, 0)),
    ]
    args = [x_prep, w1, sc1, bi1, w2, sc2, bi2]

    if down_sample:
        wd = _prep_conv_w(params['down_conv_w'])
        scd, bid = _fold_bn(params['down_bn'])
        in_specs += [
            pl.BlockSpec((9, Cin, Cout), lambda n: (0, 0, 0)),
            pl.BlockSpec((1, Cout), lambda n: (0, 0)),
            pl.BlockSpec((1, Cout), lambda n: (0, 0)),
        ]
        args += [wd, scd, bid]
    else:
        assert stride == 1 and Cin == Cout, "identity shortcut needs stride=1, Cin==Cout"

    flops = 2 * N * Mo * 9 * (Cin * Cout + Cout * Cout
                              + (Cin * Cout if down_sample else 0))
    bytes_accessed = int(sum(a.size * a.dtype.itemsize for a in args) + N * Mo * Cout * 4)

    kernel = functools.partial(_residual_block_kernel, stride=stride,
                               down_sample=down_sample, Ho=Ho, Wo=Wo)

    out2d = pl.pallas_call(
        kernel,
        out_shape=jax.ShapeDtypeStruct((N, Mo, Cout), jnp.float32),
        grid_spec=pltpu.PrefetchScalarGridSpec(
            num_scalar_prefetch=0,
            grid=(N,),        # one image per step; even N splits evenly over v7x's 2 TCs
            in_specs=in_specs,
            out_specs=pl.BlockSpec((1, Mo, Cout), lambda n: (n, 0, 0)),
            scratch_shapes=[pltpu.VMEM((Ho + 2, Wo + 2, Cout), jnp.bfloat16)],
        ),
        compiler_params=pltpu.CompilerParams(
            dimension_semantics=("parallel",),
            vmem_limit_bytes=_vmem_limit_bytes(),
        ),
        cost_estimate=pl.CostEstimate(flops=flops, transcendentals=0,
                                      bytes_accessed=bytes_accessed),
    )(*args)

    out = out2d.reshape(N, Ho, Wo, Cout)
    return jnp.transpose(out, (0, 3, 1, 2))                   # NHWC -> NCHW


# ---------------------------------------------------------------------------
# Pure-JAX reference (conv operands bf16-quantized to match the kernel; BN /
# residual / ReLU in f32, eval-mode BN)
# ---------------------------------------------------------------------------
def _ref_conv(x, w, stride):
    return lax.conv_general_dilated(
        x.astype(jnp.bfloat16), w.astype(jnp.bfloat16), (stride, stride), ((1, 1), (1, 1)),
        dimension_numbers=('NCHW', 'OIHW', 'NCHW'),
        preferred_element_type=jnp.float32)


def _ref_bn(x, bn):
    gamma, beta, mean, var = bn
    inv = gamma / jnp.sqrt(var + EPS)
    return x * inv[None, :, None, None] + (beta - mean * inv)[None, :, None, None]


def residual_block_ref(x, params, *, stride=1, down_sample=False):
    out = jax.nn.relu(_ref_bn(_ref_conv(x, params['conv1_w'], stride), params['bn1']))
    out = _ref_bn(_ref_conv(out, params['conv2_w'], 1), params['bn2'])
    res = x
    if down_sample:
        res = _ref_bn(_ref_conv(x, params['down_conv_w'], stride), params['down_bn'])
    return jax.nn.relu(out + res)


# ---------------------------------------------------------------------------
def _init_bn(key, c):
    k1, k2, k3, k4 = jax.random.split(key, 4)
    gamma = 1.0 + 0.1 * jax.random.normal(k1, (c,), jnp.float32)
    beta = 0.1 * jax.random.normal(k2, (c,), jnp.float32)
    mean = 0.1 * jax.random.normal(k3, (c,), jnp.float32)
    var = jax.random.uniform(k4, (c,), jnp.float32, minval=0.5, maxval=1.5)
    return (gamma, beta, mean, var)


if __name__ == "__main__":
    key = jax.random.PRNGKey(0)
    kx, k1, k2, k3, kb1, kb2, kb3 = jax.random.split(key, 7)

    N, Cin, H, W = 2, 4, 16, 16
    Cout = 8
    stride = 2
    x = jax.random.normal(kx, (N, Cin, H, W), jnp.float32)

    # --- down-sample block: in=4, out=8, stride=2, down_sample=True ---
    params = {
        'conv1_w': 0.2 * jax.random.normal(k1, (Cout, Cin, 3, 3), jnp.float32),
        'bn1': _init_bn(kb1, Cout),
        'conv2_w': 0.2 * jax.random.normal(k2, (Cout, Cout, 3, 3), jnp.float32),
        'bn2': _init_bn(kb2, Cout),
        'down_conv_w': 0.2 * jax.random.normal(k3, (Cout, Cin, 3, 3), jnp.float32),
        'down_bn': _init_bn(kb3, Cout),
    }
    fwd_ds = jax.jit(functools.partial(residual_block_forward, stride=stride, down_sample=True))
    out = fwd_ds(x, params)
    jax.block_until_ready(out)
    ref = residual_block_ref(x, params, stride=stride, down_sample=True)
    assert out.shape == ref.shape == (N, Cout, H // stride, W // stride)
    assert jnp.allclose(out, ref, atol=5e-3, rtol=5e-3), float(jnp.max(jnp.abs(out - ref)))

    # --- identity-shortcut block: in=out=4, stride=1, down_sample=False ---
    params_id = {
        'conv1_w': 0.2 * jax.random.normal(k1, (Cin, Cin, 3, 3), jnp.float32),
        'bn1': _init_bn(kb1, Cin),
        'conv2_w': 0.2 * jax.random.normal(k2, (Cin, Cin, 3, 3), jnp.float32),
        'bn2': _init_bn(kb2, Cin),
    }
    fwd_id = jax.jit(functools.partial(residual_block_forward, stride=1, down_sample=False))
    out2 = fwd_id(x, params_id)
    jax.block_until_ready(out2)
    ref2 = residual_block_ref(x, params_id, stride=1, down_sample=False)
    assert out2.shape == ref2.shape == (N, Cin, H, W)
    assert jnp.allclose(out2, ref2, atol=5e-3, rtol=5e-3), float(jnp.max(jnp.abs(out2 - ref2)))

    print("KERNEL_OK")
</pallas_src>

<mosaic_0001>
module attributes {stable_mosaic.version = 11 : i64} {
  func.func @_residual_block_kernel(%arg0: i32, %arg1: memref<4x9x9x4xbf16, #tpu.memory_space<vmem>>, %arg2: memref<9x4x8xbf16, #tpu.memory_space<vmem>>, %arg3: memref<1x8xf32, #tpu.memory_space<vmem>>, %arg4: memref<1x8xf32, #tpu.memory_space<vmem>>, %arg5: memref<9x8x8xbf16, #tpu.memory_space<vmem>>, %arg6: memref<1x8xf32, #tpu.memory_space<vmem>>, %arg7: memref<1x8xf32, #tpu.memory_space<vmem>>, %arg8: memref<9x4x8xbf16, #tpu.memory_space<vmem>>, %arg9: memref<1x8xf32, #tpu.memory_space<vmem>>, %arg10: memref<1x8xf32, #tpu.memory_space<vmem>>, %arg11: memref<1x64x8xf32, #tpu.memory_space<vmem>>, %arg12: memref<10x10x8xbf16, #tpu.memory_space<vmem>>) attributes {dimension_semantics = [#tpu.dimension_semantics<parallel>], iteration_bounds = array<i64: 2>, scalar_prefetch = 0 : i64, scratch_operands = 1 : i64, tpu.core_type = #tpu.core_type<tc>, window_params = [{transform_indices = @transform_0, window_bounds = array<i64: 4, 9, 9, 4>}, {pipeline_mode = #tpu.pipeline_mode<synchronous>, transform_indices = @transform_1, window_bounds = array<i64: 9, 4, 8>}, {pipeline_mode = #tpu.pipeline_mode<synchronous>, transform_indices = @transform_2, window_bounds = array<i64: 1, 8>}, {pipeline_mode = #tpu.pipeline_mode<synchronous>, transform_indices = @transform_3, window_bounds = array<i64: 1, 8>}, {pipeline_mode = #tpu.pipeline_mode<synchronous>, transform_indices = @transform_4, window_bounds = array<i64: 9, 8, 8>}, {pipeline_mode = #tpu.pipeline_mode<synchronous>, transform_indices = @transform_5, window_bounds = array<i64: 1, 8>}, {pipeline_mode = #tpu.pipeline_mode<synchronous>, transform_indices = @transform_6, window_bounds = array<i64: 1, 8>}, {pipeline_mode = #tpu.pipeline_mode<synchronous>, transform_indices = @transform_7, window_bounds = array<i64: 9, 4, 8>}, {pipeline_mode = #tpu.pipeline_mode<synchronous>, transform_indices = @transform_8, window_bounds = array<i64: 1, 8>}, {pipeline_mode = #tpu.pipeline_mode<synchronous>, transform_indices = @transform_9, window_bounds = array<i64: 1, 8>}, {transform_indices = @transform_10, window_bounds = array<i64: 1, 64, 8>}]} {
    %cst = arith.constant 0.000000e+00 : f32
    %0 = vector.broadcast %cst : f32 to vector<64x8xf32>
    %cst_0 = arith.constant 0.000000e+00 : f32
    %1 = vector.broadcast %cst_0 : f32 to vector<64x8xf32>
    %c0 = arith.constant 0 : index
    %c0_1 = arith.constant 0 : index
    %c0_2 = arith.constant 0 : index
    %c0_3 = arith.constant 0 : index
    %2 = vector.load %arg1[%c0, %c0_1, %c0_2, %c0_3] : memref<4x9x9x4xbf16, #tpu.memory_space<vmem>>, vector<1x8x8x4xbf16>
    %3 = vector.shape_cast %2 : vector<1x8x8x4xbf16> to vector<8x8x4xbf16>
    %4 = vector.shape_cast %3 : vector<8x8x4xbf16> to vector<64x4xbf16>
    %c0_4 = arith.constant 0 : index
    %c0_5 = arith.constant 0 : index
    %c0_6 = arith.constant 0 : index
    %5 = vector.load %arg2[%c0_4, %c0_5, %c0_6] : memref<9x4x8xbf16, #tpu.memory_space<vmem>>, vector<1x4x8xbf16>
    %6 = vector.shape_cast %5 : vector<1x4x8xbf16> to vector<4x8xbf16>
    %cst_7 = arith.constant dense<0.000000e+00> : vector<64x8xf32>
    %7 = tpu.matmul %4, %6, %cst_7 {dimension_numbers = #tpu.dot_dimension_numbers<[1], [0], [0], [1], [0, 0, 1, 1], [], []>} : vector<64x4xbf16>, vector<4x8xbf16>, vector<64x8xf32> -> vector<64x8xf32>
    %8 = arith.addf %0, %7 : vector<64x8xf32>
    %c0_8 = arith.constant 0 : index
    %c0_9 = arith.constant 0 : index
    %c0_10 = arith.constant 0 : index
    %9 = vector.load %arg8[%c0_8, %c0_9, %c0_10] : memref<9x4x8xbf16, #tpu.memory_space<vmem>>, vector<1x4x8xbf16>
    %10 = vector.shape_cast %9 : vector<1x4x8xbf16> to vector<4x8xbf16>
    %cst_11 = arith.constant dense<0.000000e+00> : vector<64x8xf32>
    %11 = tpu.matmul %4, %10, %cst_11 {dimension_numbers = #tpu.dot_dimension_numbers<[1], [0], [0], [1], [0, 0, 1, 1], [], []>} : vector<64x4xbf16>, vector<4x8xbf16>, vector<64x8xf32> -> vector<64x8xf32>
    %12 = arith.addf %1, %11 : vector<64x8xf32>
    %c1 = arith.constant 1 : index
    %c0_12 = arith.constant 0 : index
    %c0_13 = arith.constant 0 : index
    %c0_14 = arith.constant 0 : index
    %13 = vector.load %arg1[%c1, %c0_12, %c0_13, %c0_14] : memref<4x9x9x4xbf16, #tpu.memory_space<vmem>>, vector<1x8x8x4xbf16>
    %14 = vector.shape_cast %13 : vector<1x8x8x4xbf16> to vector<8x8x4xbf16>
    %15 = vector.shape_cast %14 : vector<8x8x4xbf16> to vector<64x4xbf16>
    %c1_15 = arith.constant 1 : index
    %c0_16 = arith.constant 0 : index
    %c0_17 = arith.constant 0 : index
    %16 = vector.load %arg2[%c1_15, %c0_16, %c0_17] : memref<9x4x8xbf16, #tpu.memory_space<vmem>>, vector<1x4x8xbf16>
    %17 = vector.shape_cast %16 : vector<1x4x8xbf16> to vector<4x8xbf16>
    %cst_18 = arith.constant dense<0.000000e+00> : vector<64x8xf32>
    %18 = tpu.matmul %15, %17, %cst_18 {dimension_numbers = #tpu.dot_dimension_numbers<[1], [0], [0], [1], [0, 0, 1, 1], [], []>} : vector<64x4xbf16>, vector<4x8xbf16>, vector<64x8xf32> -> vector<64x8xf32>
    %19 = arith.addf %8, %18 : vector<64x8xf32>
    %c1_19 = arith.constant 1 : index
    %c0_20 = arith.constant 0 : index
    %c0_21 = arith.constant 0 : index
    %20 = vector.load %arg8[%c1_19, %c0_20, %c0_21] : memref<9x4x8xbf16, #tpu.memory_space<vmem>>, vector<1x4x8xbf16>
    %21 = vector.shape_cast %20 : vector<1x4x8xbf16> to vector<4x8xbf16>
    %cst_22 = arith.constant dense<0.000000e+00> : vector<64x8xf32>
    %22 = tpu.matmul %15, %21, %cst_22 {dimension_numbers = #tpu.dot_dimension_numbers<[1], [0], [0], [1], [0, 0, 1, 1], [], []>} : vector<64x4xbf16>, vector<4x8xbf16>, vector<64x8xf32> -> vector<64x8xf32>
    %23 = arith.addf %12, %22 : vector<64x8xf32>
    %c0_23 = arith.constant 0 : index
    %c0_24 = arith.constant 0 : index
    %c1_25 = arith.constant 1 : index
    %c0_26 = arith.constant 0 : index
    %24 = vector.load %arg1[%c0_23, %c0_24, %c1_25, %c0_26] : memref<4x9x9x4xbf16, #tpu.memory_space<vmem>>, vector<1x8x8x4xbf16>
    %25 = vector.shape_cast %24 : vector<1x8x8x4xbf16> to vector<8x8x4xbf16>
    %26 = vector.shape_cast %25 : vector<8x8x4xbf16> to vector<64x4xbf16>
    %c2 = arith.constant 2 : index
    %c0_27 = arith.constant 0 : index
    %c0_28 = arith.constant 0 : index
    %27 = vector.load %arg2[%c2, %c0_27, %c0_28] : memref<9x4x8xbf16, #tpu.memory_space<vmem>>, vector<1x4x8xbf16>
    %28 = vector.shape_cast %27 : vector<1x4x8xbf16> to vector<4x8xbf16>
    %cst_29 = arith.constant dense<0.000000e+00> : vector<64x8xf32>
    %29 = tpu.matmul %26, %28, %cst_29 {dimension_numbers = #tpu.dot_dimension_numbers<[1], [0], [0], [1], [0, 0, 1, 1], [], []>} : vector<64x4xbf16>, vector<4x8xbf16>, vector<64x8xf32> -> vector<64x8xf32>
    %30 = arith.addf %19, %29 : vector<64x8xf32>
    %c2_30 = arith.constant 2 : index
    %c0_31 = arith.constant 0 : index
    %c0_32 = arith.constant 0 : index
    %31 = vector.load %arg8[%c2_30, %c0_31, %c0_32] : memref<9x4x8xbf16, #tpu.memory_space<vmem>>, vector<1x4x8xbf16>
    %32 = vector.shape_cast %31 : vector<1x4x8xbf16> to vector<4x8xbf16>
    %cst_33 = arith.constant dense<0.000000e+00> : vector<64x8xf32>
    %33 = tpu.matmul %26, %32, %cst_33 {dimension_numbers = #tpu.dot_dimension_numbers<[1], [0], [0], [1], [0, 0, 1, 1], [], []>} : vector<64x4xbf16>, vector<4x8xbf16>, vector<64x8xf32> -> vector<64x8xf32>
    %34 = arith.addf %23, %33 : vector<64x8xf32>
    %c2_34 = arith.constant 2 : index
    %c0_35 = arith.constant 0 : index
    %c0_36 = arith.constant 0 : index
    %c0_37 = arith.constant 0 : index
    %35 = vector.load %arg1[%c2_34, %c0_35, %c0_36, %c0_37] : memref<4x9x9x4xbf16, #tpu.memory_space<vmem>>, vector<1x8x8x4xbf16>
    %36 = vector.shape_cast %35 : vector<1x8x8x4xbf16> to vector<8x8x4xbf16>
    %37 = vector.shape_cast %36 : vector<8x8x4xbf16> to vector<64x4xbf16>
    %c3 = arith.constant 3 : index
    %c0_38 = arith.constant 0 : index
    %c0_39 = arith.constant 0 : index
    %38 = vector.load %arg2[%c3, %c0_38, %c0_39] : memref<9x4x8xbf16, #tpu.memory_space<vmem>>, vector<1x4x8xbf16>
    %39 = vector.shape_cast %38 : vector<1x4x8xbf16> to vector<4x8xbf16>
    %cst_40 = arith.constant dense<0.000000e+00> : vector<64x8xf32>
    %40 = tpu.matmul %37, %39, %cst_40 {dimension_numbers = #tpu.dot_dimension_numbers<[1], [0], [0], [1], [0, 0, 1, 1], [], []>} : vector<64x4xbf16>, vector<4x8xbf16>, vector<64x8xf32> -> vector<64x8xf32>
    %41 = arith.addf %30, %40 : vector<64x8xf32>
    %c3_41 = arith.constant 3 : index
    %c0_42 = arith.constant 0 : index
    %c0_43 = arith.constant 0 : index
    %42 = vector.load %arg8[%c3_41, %c0_42, %c0_43] : memref<9x4x8xbf16, #tpu.memory_space<vmem>>, vector<1x4x8xbf16>
    %43 = vector.shape_cast %42 : vector<1x4x8xbf16> to vector<4x8xbf16>
    %cst_44 = arith.constant dense<0.000000e+00> : vector<64x8xf32>
    %44 = tpu.matmul %37, %43, %cst_44 {dimension_numbers = #tpu.dot_dimension_numbers<[1], [0], [0], [1], [0, 0, 1, 1], [], []>} : vector<64x4xbf16>, vector<4x8xbf16>, vector<64x8xf32> -> vector<64x8xf32>
    %45 = arith.addf %34, %44 : vector<64x8xf32>
    %c3_45 = arith.constant 3 : index
    %c0_46 = arith.constant 0 : index
    %c0_47 = arith.constant 0 : index
    %c0_48 = arith.constant 0 : index
    %46 = vector.load %arg1[%c3_45, %c0_46, %c0_47, %c0_48] : memref<4x9x9x4xbf16, #tpu.memory_space<vmem>>, vector<1x8x8x4xbf16>
    %47 = vector.shape_cast %46 : vector<1x8x8x4xbf16> to vector<8x8x4xbf16>
    %48 = vector.shape_cast %47 : vector<8x8x4xbf16> to vector<64x4xbf16>
    %c4 = arith.constant 4 : index
    %c0_49 = arith.constant 0 : index
    %c0_50 = arith.constant 0 : index
    %49 = vector.load %arg2[%c4, %c0_49, %c0_50] : memref<9x4x8xbf16, #tpu.memory_space<vmem>>, vector<1x4x8xbf16>
    %50 = vector.shape_cast %49 : vector<1x4x8xbf16> to vector<4x8xbf16>
    %cst_51 = arith.constant dense<0.000000e+00> : vector<64x8xf32>
    %51 = tpu.matmul %48, %50, %cst_51 {dimension_numbers = #tpu.dot_dimension_numbers<[1], [0], [0], [1], [0, 0, 1, 1], [], []>} : vector<64x4xbf16>, vector<4x8xbf16>, vector<64x8xf32> -> vector<64x8xf32>
    %52 = arith.addf %41, %51 : vector<64x8xf32>
    %c4_52 = arith.constant 4 : index
    %c0_53 = arith.constant 0 : index
    %c0_54 = arith.constant 0 : index
    %53 = vector.load %arg8[%c4_52, %c0_53, %c0_54] : memref<9x4x8xbf16, #tpu.memory_space<vmem>>, vector<1x4x8xbf16>
    %54 = vector.shape_cast %53 : vector<1x4x8xbf16> to vector<4x8xbf16>
    %cst_55 = arith.constant dense<0.000000e+00> : vector<64x8xf32>
    %55 = tpu.matmul %48, %54, %cst_55 {dimension_numbers = #tpu.dot_dimension_numbers<[1], [0], [0], [1], [0, 0, 1, 1], [], []>} : vector<64x4xbf16>, vector<4x8xbf16>, vector<64x8xf32> -> vector<64x8xf32>
    %56 = arith.addf %45, %55 : vector<64x8xf32>
    %c2_56 = arith.constant 2 : index
    %c0_57 = arith.constant 0 : index
    %c1_58 = arith.constant 1 : index
    %c0_59 = arith.constant 0 : index
    %57 = vector.load %arg1[%c2_56, %c0_57, %c1_58, %c0_59] : memref<4x9x9x4xbf16, #tpu.memory_space<vmem>>, vector<1x8x8x4xbf16>
    %58 = vector.shape_cast %57 : vector<1x8x8x4xbf16> to vector<8x8x4xbf16>
    %59 = vector.shape_cast %58 : vector<8x8x4xbf16> to vector<64x4xbf16>
    %c5 = arith.constant 5 : index
    %c0_60 = arith.constant 0 : index
    %c0_61 = arith.constant 0 : index
    %60 = vector.load %arg2[%c5, %c0_60, %c0_61] : memref<9x4x8xbf16, #tpu.memory_space<vmem>>, vector<1x4x8xbf16>
    %61 = vector.shape_cast %60 : vector<1x4x8xbf16> to vector<4x8xbf16>
    %cst_62 = arith.constant dense<0.000000e+00> : vector<64x8xf32>
    %62 = tpu.matmul %59, %61, %cst_62 {dimension_numbers = #tpu.dot_dimension_numbers<[1], [0], [0], [1], [0, 0, 1, 1], [], []>} : vector<64x4xbf16>, vector<4x8xbf16>, vector<64x8xf32> -> vector<64x8xf32>
    %63 = arith.addf %52, %62 : vector<64x8xf32>
    %c5_63 = arith.constant 5 : index
    %c0_64 = arith.constant 0 : index
    %c0_65 = arith.constant 0 : index
    %64 = vector.load %arg8[%c5_63, %c0_64, %c0_65] : memref<9x4x8xbf16, #tpu.memory_space<vmem>>, vector<1x4x8xbf16>
    %65 = vector.shape_cast %64 : vector<1x4x8xbf16> to vector<4x8xbf16>
    %cst_66 = arith.constant dense<0.000000e+00> : vector<64x8xf32>
    %66 = tpu.matmul %59, %65, %cst_66 {dimension_numbers = #tpu.dot_dimension_numbers<[1], [0], [0], [1], [0, 0, 1, 1], [], []>} : vector<64x4xbf16>, vector<4x8xbf16>, vector<64x8xf32> -> vector<64x8xf32>
    %67 = arith.addf %56, %66 : vector<64x8xf32>
    %c0_67 = arith.constant 0 : index
    %c1_68 = arith.constant 1 : index
    %c0_69 = arith.constant 0 : index
    %c0_70 = arith.constant 0 : index
    %68 = vector.load %arg1[%c0_67, %c1_68, %c0_69, %c0_70] : memref<4x9x9x4xbf16, #tpu.memory_space<vmem>>, vector<1x8x8x4xbf16>
    %69 = vector.shape_cast %68 : vector<1x8x8x4xbf16> to vector<8x8x4xbf16>
    %70 = vector.shape_cast %69 : vector<8x8x4xbf16> to vector<64x4xbf16>
    %c6 = arith.constant 6 : index
    %c0_71 = arith.constant 0 : index
    %c0_72 = arith.constant 0 : index
    %71 = vector.load %arg2[%c6, %c0_71, %c0_72] : memref<9x4x8xbf16, #tpu.memory_space<vmem>>, vector<1x4x8xbf16>
    %72 = vector.shape_cast %71 : vector<1x4x8xbf16> to vector<4x8xbf16>
    %cst_73 = arith.constant dense<0.000000e+00> : vector<64x8xf32>
    %73 = tpu.matmul %70, %72, %cst_73 {dimension_numbers = #tpu.dot_dimension_numbers<[1], [0], [0], [1], [0, 0, 1, 1], [], []>} : vector<64x4xbf16>, vector<4x8xbf16>, vector<64x8xf32> -> vector<64x8xf32>
    %74 = arith.addf %63, %73 : vector<64x8xf32>
    %c6_74 = arith.constant 6 : index
    %c0_75 = arith.constant 0 : index
    %c0_76 = arith.constant 0 : index
    %75 = vector.load %arg8[%c6_74, %c0_75, %c0_76] : memref<9x4x8xbf16, #tpu.memory_space<vmem>>, vector<1x4x8xbf16>
    %76 = vector.shape_cast %75 : vector<1x4x8xbf16> to vector<4x8xbf16>
    %cst_77 = arith.constant dense<0.000000e+00> : vector<64x8xf32>
    %77 = tpu.matmul %70, %76, %cst_77 {dimension_numbers = #tpu.dot_dimension_numbers<[1], [0], [0], [1], [0, 0, 1, 1], [], []>} : vector<64x4xbf16>, vector<4x8xbf16>, vector<64x8xf32> -> vector<64x8xf32>
    %78 = arith.addf %67, %77 : vector<64x8xf32>
    %c1_78 = arith.constant 1 : index
    %c1_79 = arith.constant 1 : index
    %c0_80 = arith.constant 0 : index
    %c0_81 = arith.constant 0 : index
    %79 = vector.load %arg1[%c1_78, %c1_79, %c0_80, %c0_81] : memref<4x9x9x4xbf16, #tpu.memory_space<vmem>>, vector<1x8x8x4xbf16>
    %80 = vector.shape_cast %79 : vector<1x8x8x4xbf16> to vector<8x8x4xbf16>
    %81 = vector.shape_cast %80 : vector<8x8x4xbf16> to vector<64x4xbf16>
    %c7 = arith.constant 7 : index
    %c0_82 = arith.constant 0 : index
    %c0_83 = arith.constant 0 : index
    %82 = vector.load %arg2[%c7, %c0_82, %c0_83] : memref<9x4x8xbf16, #tpu.memory_space<vmem>>, vector<1x4x8xbf16>
    %83 = vector.shape_cast %82 : vector<1x4x8xbf16> to vector<4x8xbf16>
    %cst_84 = arith.constant dense<0.000000e+00> : vector<64x8xf32>
    %84 = tpu.matmul %81, %83, %cst_84 {dimension_numbers = #tpu.dot_dimension_numbers<[1], [0], [0], [1], [0, 0, 1, 1], [], []>} : vector<64x4xbf16>, vector<4x8xbf16>, vector<64x8xf32> -> vector<64x8xf32>
    %85 = arith.addf %74, %84 : vector<64x8xf32>
    %c7_85 = arith.constant 7 : index
    %c0_86 = arith.constant 0 : index
    %c0_87 = arith.constant 0 : index
    %86 = vector.load %arg8[%c7_85, %c0_86, %c0_87] : memref<9x4x8xbf16, #tpu.memory_space<vmem>>, vector<1x4x8xbf16>
    %87 = vector.shape_cast %86 : vector<1x4x8xbf16> to vector<4x8xbf16>
    %cst_88 = arith.constant dense<0.000000e+00> : vector<64x8xf32>
    %88 = tpu.matmul %81, %87, %cst_88 {dimension_numbers = #tpu.dot_dimension_numbers<[1], [0], [0], [1], [0, 0, 1, 1], [], []>} : vector<64x4xbf16>, vector<4x8xbf16>, vector<64x8xf32> -> vector<64x8xf32>
    %89 = arith.addf %78, %88 : vector<64x8xf32>
    %c0_89 = arith.constant 0 : index
    %c1_90 = arith.constant 1 : index
    %c1_91 = arith.constant 1 : index
    %c0_92 = arith.constant 0 : index
    %90 = vector.load %arg1[%c0_89, %c1_90, %c1_91, %c0_92] : memref<4x9x9x4xbf16, #tpu.memory_space<vmem>>, vector<1x8x8x4xbf16>
    %91 = vector.shape_cast %90 : vector<1x8x8x4xbf16> to vector<8x8x4xbf16>
    %92 = vector.shape_cast %91 : vector<8x8x4xbf16> to vector<64x4xbf16>
    %c8 = arith.constant 8 : index
    %c0_93 = arith.constant 0 : index
    %c0_94 = arith.constant 0 : index
    %93 = vector.load %arg2[%c8, %c0_93, %c0_94] : memref<9x4x8xbf16, #tpu.memory_space<vmem>>, vector<1x4x8xbf16>
    %94 = vector.shape_cast %93 : vector<1x4x8xbf16> to vector<4x8xbf16>
    %cst_95 = arith.constant dense<0.000000e+00> : vector<64x8xf32>
    %95 = tpu.matmul %92, %94, %cst_95 {dimension_numbers = #tpu.dot_dimension_numbers<[1], [0], [0], [1], [0, 0, 1, 1], [], []>} : vector<64x4xbf16>, vector<4x8xbf16>, vector<64x8xf32> -> vector<64x8xf32>
    %96 = arith.addf %85, %95 : vector<64x8xf32>
    %c8_96 = arith.constant 8 : index
    %c0_97 = arith.constant 0 : index
    %c0_98 = arith.constant 0 : index
    %97 = vector.load %arg8[%c8_96, %c0_97, %c0_98] : memref<9x4x8xbf16, #tpu.memory_space<vmem>>, vector<1x4x8xbf16>
    %98 = vector.shape_cast %97 : vector<1x4x8xbf16> to vector<4x8xbf16>
    %cst_99 = arith.constant dense<0.000000e+00> : vector<64x8xf32>
    %99 = tpu.matmul %92, %98, %cst_99 {dimension_numbers = #tpu.dot_dimension_numbers<[1], [0], [0], [1], [0, 0, 1, 1], [], []>} : vector<64x4xbf16>, vector<4x8xbf16>, vector<64x8xf32> -> vector<64x8xf32>
    %100 = arith.addf %89, %99 : vector<64x8xf32>
    %c0_100 = arith.constant 0 : index
    %c0_101 = arith.constant 0 : index
    %101 = vector.load %arg3[%c0_100, %c0_101] : memref<1x8xf32, #tpu.memory_space<vmem>>, vector<1x8xf32>
    %102 = vector.broadcast %101 : vector<1x8xf32> to vector<64x8xf32>
    %103 = arith.mulf %96, %102 : vector<64x8xf32>
    %c0_102 = arith.constant 0 : index
    %c0_103 = arith.constant 0 : index
    %104 = vector.load %arg4[%c0_102, %c0_103] : memref<1x8xf32, #tpu.memory_space<vmem>>, vector<1x8xf32>
    %105 = vector.broadcast %104 : vector<1x8xf32> to vector<64x8xf32>
    %106 = arith.addf %103, %105 : vector<64x8xf32>
    %cst_104 = arith.constant 0.000000e+00 : f32
    %107 = vector.broadcast %cst_104 : f32 to vector<64x8xf32>
    %108 = arith.maximumf %106, %107 : vector<64x8xf32>
    %cst_105 = arith.constant 0.000000e+00 : bf16
    %109 = vector.broadcast %cst_105 : bf16 to vector<10x10x8xbf16>
    %c0_106 = arith.constant 0 : index
    %c0_107 = arith.constant 0 : index
    %c0_108 = arith.constant 0 : index
    %110 = vector.load %arg12[%c0_106, %c0_107, %c0_108] : memref<10x10x8xbf16, #tpu.memory_space<vmem>>, vector<10x10x8xbf16>
    tpu.vector_store %arg12[%c0_106, %c0_107, %c0_108], %109 {strides = array<i32>} : memref<10x10x8xbf16, #tpu.memory_space<vmem>>, vector<10x10x8xbf16>,
    %111 = vector.shape_cast %108 : vector<64x8xf32> to vector<8x8x8xf32>
    %112 = arith.truncf %111 : vector<8x8x8xf32> to vector<8x8x8xbf16>
    %c1_109 = arith.constant 1 : index
    %c1_110 = arith.constant 1 : index
    %c0_111 = arith.constant 0 : index
    %113 = vector.load %arg12[%c1_109, %c1_110, %c0_111] : memref<10x10x8xbf16, #tpu.memory_space<vmem>>, vector<8x8x8xbf16>
    tpu.vector_store %arg12[%c1_109, %c1_110, %c0_111], %112 {strides = array<i32>} : memref<10x10x8xbf16, #tpu.memory_space<vmem>>, vector<8x8x8xbf16>,
    %c0_112 = arith.constant 0 : index
    %c0_113 = arith.constant 0 : index
    %114 = vector.load %arg9[%c0_112, %c0_113] : memref<1x8xf32, #tpu.memory_space<vmem>>, vector<1x8xf32>
    %115 = vector.broadcast %114 : vector<1x8xf32> to vector<64x8xf32>
    %116 = arith.mulf %100, %115 : vector<64x8xf32>
    %c0_114 = arith.constant 0 : index
    %c0_115 = arith.constant 0 : index
    %117 = vector.load %arg10[%c0_114, %c0_115] : memref<1x8xf32, #tpu.memory_space<vmem>>, vector<1x8xf32>
    %118 = vector.broadcast %117 : vector<1x8xf32> to vector<64x8xf32>
    %119 = arith.addf %116, %118 : vector<64x8xf32>
    %cst_116 = arith.constant 0.000000e+00 : f32
    %120 = vector.broadcast %cst_116 : f32 to vector<64x8xf32>
    %c0_117 = arith.constant 0 : index
    %c0_118 = arith.constant 0 : index
    %c0_119 = arith.constant 0 : index
    %121 = vector.load %arg12[%c0_117, %c0_118, %c0_119] : memref<10x10x8xbf16, #tpu.memory_space<vmem>>, vector<8x8x8xbf16>
    %122 = vector.shape_cast %121 : vector<8x8x8xbf16> to vector<64x8xbf16>
    %c0_120 = arith.constant 0 : index
    %c0_121 = arith.constant 0 : index
    %c0_122 = arith.constant 0 : index
    %123 = vector.load %arg5[%c0_120, %c0_121, %c0_122] : memref<9x8x8xbf16, #tpu.memory_space<vmem>>, vector<1x8x8xbf16>
    %124 = vector.shape_cast %123 : vector<1x8x8xbf16> to vector<8x8xbf16>
    %cst_123 = arith.constant dense<0.000000e+00> : vector<64x8xf32>
    %125 = tpu.matmul %122, %124, %cst_123 {dimension_numbers = #tpu.dot_dimension_numbers<[1], [0], [0], [1], [0, 0, 1, 1], [], []>} : vector<64x8xbf16>, vector<8x8xbf16>, vector<64x8xf32> -> vector<64x8xf32>
    %126 = arith.addf %120, %125 : vector<64x8xf32>
    %c0_124 = arith.constant 0 : index
    %c1_125 = arith.constant 1 : index
    %c0_126 = arith.constant 0 : index
    %127 = vector.load %arg12[%c0_124, %c1_125, %c0_126] : memref<10x10x8xbf16, #tpu.memory_space<vmem>>, vector<8x8x8xbf16>
    %128 = vector.shape_cast %127 : vector<8x8x8xbf16> to vector<64x8xbf16>
    %c1_127 = arith.constant 1 : index
    %c0_128 = arith.constant 0 : index
    %c0_129 = arith.constant 0 : index
    %129 = vector.load %arg5[%c1_127, %c0_128, %c0_129] : memref<9x8x8xbf16, #tpu.memory_space<vmem>>, vector<1x8x8xbf16>
    %130 = vector.shape_cast %129 : vector<1x8x8xbf16> to vector<8x8xbf16>
    %cst_130 = arith.constant dense<0.000000e+00> : vector<64x8xf32>
    %131 = tpu.matmul %128, %130, %cst_130 {dimension_numbers = #tpu.dot_dimension_numbers<[1], [0], [0], [1], [0, 0, 1, 1], [], []>} : vector<64x8xbf16>, vector<8x8xbf16>, vector<64x8xf32> -> vector<64x8xf32>
    %132 = arith.addf %126, %131 : vector<64x8xf32>
    %c0_131 = arith.constant 0 : index
    %c2_132 = arith.constant 2 : index
    %c0_133 = arith.constant 0 : index
    %133 = vector.load %arg12[%c0_131, %c2_132, %c0_133] : memref<10x10x8xbf16, #tpu.memory_space<vmem>>, vector<8x8x8xbf16>
    %134 = vector.shape_cast %133 : vector<8x8x8xbf16> to vector<64x8xbf16>
    %c2_134 = arith.constant 2 : index
    %c0_135 = arith.constant 0 : index
    %c0_136 = arith.constant 0 : index
    %135 = vector.load %arg5[%c2_134, %c0_135, %c0_136] : memref<9x8x8xbf16, #tpu.memory_space<vmem>>, vector<1x8x8xbf16>
    %136 = vector.shape_cast %135 : vector<1x8x8xbf16> to vector<8x8xbf16>
    %cst_137 = arith.constant dense<0.000000e+00> : vector<64x8xf32>
    %137 = tpu.matmul %134, %136, %cst_137 {dimension_numbers = #tpu.dot_dimension_numbers<[1], [0], [0], [1], [0, 0, 1, 1], [], []>} : vector<64x8xbf16>, vector<8x8xbf16>, vector<64x8xf32> -> vector<64x8xf32>
    %138 = arith.addf %132, %137 : vector<64x8xf32>
    %c1_138 = arith.constant 1 : index
    %c0_139 = arith.constant 0 : index
    %c0_140 = arith.constant 0 : index
    %139 = vector.load %arg12[%c1_138, %c0_139, %c0_140] : memref<10x10x8xbf16, #tpu.memory_space<vmem>>, vector<8x8x8xbf16>
    %140 = vector.shape_cast %139 : vector<8x8x8xbf16> to vector<64x8xbf16>
    %c3_141 = arith.constant 3 : index
    %c0_142 = arith.constant 0 : index
    %c0_143 = arith.constant 0 : index
    %141 = vector.load %arg5[%c3_141, %c0_142, %c0_143] : memref<9x8x8xbf16, #tpu.memory_space<vmem>>, vector<1x8x8xbf16>
    %142 = vector.shape_cast %141 : vector<1x8x8xbf16> to vector<8x8xbf16>
    %cst_144 = arith.constant dense<0.000000e+00> : vector<64x8xf32>
    %143 = tpu.matmul %140, %142, %cst_144 {dimension_numbers = #tpu.dot_dimension_numbers<[1], [0], [0], [1], [0, 0, 1, 1], [], []>} : vector<64x8xbf16>, vector<8x8xbf16>, vector<64x8xf32> -> vector<64x8xf32>
    %144 = arith.addf %138, %143 : vector<64x8xf32>
    %c1_145 = arith.constant 1 : index
    %c1_146 = arith.constant 1 : index
    %c0_147 = arith.constant 0 : index
    %145 = vector.load %arg12[%c1_145, %c1_146, %c0_147] : memref<10x10x8xbf16, #tpu.memory_space<vmem>>, vector<8x8x8xbf16>
    %146 = vector.shape_cast %145 : vector<8x8x8xbf16> to vector<64x8xbf16>
    %c4_148 = arith.constant 4 : index
    %c0_149 = arith.constant 0 : index
    %c0_150 = arith.constant 0 : index
    %147 = vector.load %arg5[%c4_148, %c0_149, %c0_150] : memref<9x8x8xbf16, #tpu.memory_space<vmem>>, vector<1x8x8xbf16>
    %148 = vector.shape_cast %147 : vector<1x8x8xbf16> to vector<8x8xbf16>
    %cst_151 = arith.constant dense<0.000000e+00> : vector<64x8xf32>
    %149 = tpu.matmul %146, %148, %cst_151 {dimension_numbers = #tpu.dot_dimension_numbers<[1], [0], [0], [1], [0, 0, 1, 1], [], []>} : vector<64x8xbf16>, vector<8x8xbf16>, vector<64x8xf32> -> vector<64x8xf32>
    %150 = arith.addf %144, %149 : vector<64x8xf32>
    %c1_152 = arith.constant 1 : index
    %c2_153 = arith.constant 2 : index
    %c0_154 = arith.constant 0 : index
    %151 = vector.load %arg12[%c1_152, %c2_153, %c0_154] : memref<10x10x8xbf16, #tpu.memory_space<vmem>>, vector<8x8x8xbf16>
    %152 = vector.shape_cast %151 : vector<8x8x8xbf16> to vector<64x8xbf16>
    %c5_155 = arith.constant 5 : index
    %c0_156 = arith.constant 0 : index
    %c0_157 = arith.constant 0 : index
    %153 = vector.load %arg5[%c5_155, %c0_156, %c0_157] : memref<9x8x8xbf16, #tpu.memory_space<vmem>>, vector<1x8x8xbf16>
    %154 = vector.shape_cast %153 : vector<1x8x8xbf16> to vector<8x8xbf16>
    %cst_158 = arith.constant dense<0.000000e+00> : vector<64x8xf32>
    %155 = tpu.matmul %152, %154, %cst_158 {dimension_numbers = #tpu.dot_dimension_numbers<[1], [0], [0], [1], [0, 0, 1, 1], [], []>} : vector<64x8xbf16>, vector<8x8xbf16>, vector<64x8xf32> -> vector<64x8xf32>
    %156 = arith.addf %150, %155 : vector<64x8xf32>
    %c2_159 = arith.constant 2 : index
    %c0_160 = arith.constant 0 : index
    %c0_161 = arith.constant 0 : index
    %157 = vector.load %arg12[%c2_159, %c0_160, %c0_161] : memref<10x10x8xbf16, #tpu.memory_space<vmem>>, vector<8x8x8xbf16>
    %158 = vector.shape_cast %157 : vector<8x8x8xbf16> to vector<64x8xbf16>
    %c6_162 = arith.constant 6 : index
    %c0_163 = arith.constant 0 : index
    %c0_164 = arith.constant 0 : index
    %159 = vector.load %arg5[%c6_162, %c0_163, %c0_164] : memref<9x8x8xbf16, #tpu.memory_space<vmem>>, vector<1x8x8xbf16>
    %160 = vector.shape_cast %159 : vector<1x8x8xbf16> to vector<8x8xbf16>
    %cst_165 = arith.constant dense<0.000000e+00> : vector<64x8xf32>
    %161 = tpu.matmul %158, %160, %cst_165 {dimension_numbers = #tpu.dot_dimension_numbers<[1], [0], [0], [1], [0, 0, 1, 1], [], []>} : vector<64x8xbf16>, vector<8x8xbf16>, vector<64x8xf32> -> vector<64x8xf32>
    %162 = arith.addf %156, %161 : vector<64x8xf32>
    %c2_166 = arith.constant 2 : index
    %c1_167 = arith.constant 1 : index
    %c0_168 = arith.constant 0 : index
    %163 = vector.load %arg12[%c2_166, %c1_167, %c0_168] : memref<10x10x8xbf16, #tpu.memory_space<vmem>>, vector<8x8x8xbf16>
    %164 = vector.shape_cast %163 : vector<8x8x8xbf16> to vector<64x8xbf16>
    %c7_169 = arith.constant 7 : index
    %c0_170 = arith.constant 0 : index
    %c0_171 = arith.constant 0 : index
    %165 = vector.load %arg5[%c7_169, %c0_170, %c0_171] : memref<9x8x8xbf16, #tpu.memory_space<vmem>>, vector<1x8x8xbf16>
    %166 = vector.shape_cast %165 : vector<1x8x8xbf16> to vector<8x8xbf16>
    %cst_172 = arith.constant dense<0.000000e+00> : vector<64x8xf32>
    %167 = tpu.matmul %164, %166, %cst_172 {dimension_numbers = #tpu.dot_dimension_numbers<[1], [0], [0], [1], [0, 0, 1, 1], [], []>} : vector<64x8xbf16>, vector<8x8xbf16>, vector<64x8xf32> -> vector<64x8xf32>
    %168 = arith.addf %162, %167 : vector<64x8xf32>
    %c2_173 = arith.constant 2 : index
    %c2_174 = arith.constant 2 : index
    %c0_175 = arith.constant 0 : index
    %169 = vector.load %arg12[%c2_173, %c2_174, %c0_175] : memref<10x10x8xbf16, #tpu.memory_space<vmem>>, vector<8x8x8xbf16>
    %170 = vector.shape_cast %169 : vector<8x8x8xbf16> to vector<64x8xbf16>
    %c8_176 = arith.constant 8 : index
    %c0_177 = arith.constant 0 : index
    %c0_178 = arith.constant 0 : index
    %171 = vector.load %arg5[%c8_176, %c0_177, %c0_178] : memref<9x8x8xbf16, #tpu.memory_space<vmem>>, vector<1x8x8xbf16>
    %172 = vector.shape_cast %171 : vector<1x8x8xbf16> to vector<8x8xbf16>
    %cst_179 = arith.constant dense<0.000000e+00> : vector<64x8xf32>
    %173 = tpu.matmul %170, %172, %cst_179 {dimension_numbers = #tpu.dot_dimension_numbers<[1], [0], [0], [1], [0, 0, 1, 1], [], []>} : vector<64x8xbf16>, vector<8x8xbf16>, vector<64x8xf32> -> vector<64x8xf32>
    %174 = arith.addf %168, %173 : vector<64x8xf32>
    %c0_180 = arith.constant 0 : index
    %c0_181 = arith.constant 0 : index
    %175 = vector.load %arg6[%c0_180, %c0_181] : memref<1x8xf32, #tpu.memory_space<vmem>>, vector<1x8xf32>
    %176 = vector.broadcast %175 : vector<1x8xf32> to vector<64x8xf32>
    %177 = arith.mulf %174, %176 : vector<64x8xf32>
    %c0_182 = arith.constant 0 : index
    %c0_183 = arith.constant 0 : index
    %178 = vector.load %arg7[%c0_182, %c0_183] : memref<1x8xf32, #tpu.memory_space<vmem>>, vector<1x8xf32>
    %179 = vector.broadcast %178 : vector<1x8xf32> to vector<64x8xf32>
    %180 = arith.addf %177, %179 : vector<64x8xf32>
    %181 = arith.addf %180, %119 : vector<64x8xf32>
    %cst_184 = arith.constant 0.000000e+00 : f32
    %182 = vector.broadcast %cst_184 : f32 to vector<64x8xf32>
    %183 = arith.maximumf %181, %182 : vector<64x8xf32>
    %c0_185 = arith.constant 0 : index
    %c0_186 = arith.constant 0 : index
    %c0_187 = arith.constant 0 : index
    %184 = vector.load %arg11[%c0_185, %c0_186, %c0_187] : memref<1x64x8xf32, #tpu.memory_space<vmem>>, vector<1x64x8xf32>
    %185 = vector.shape_cast %184 : vector<1x64x8xf32> to vector<64x8xf32>
    %186 = vector.shape_cast %183 : vector<64x8xf32> to vector<1x64x8xf32>
    tpu.vector_store %arg11[%c0_185, %c0_186, %c0_187], %186 {strides = array<i32>} : memref<1x64x8xf32, #tpu.memory_space<vmem>>, vector<1x64x8xf32>,
    return
  }
  func.func @transform_0(%arg0: i32) -> (i32, i32, i32, i32) {
    %c0_i32 = arith.constant 0 : i32
    %c0_i32_0 = arith.constant 0 : i32
    %c0_i32_1 = arith.constant 0 : i32
    %c0_i32_2 = arith.constant 0 : i32
    return %arg0, %c0_i32, %c0_i32_0, %c0_i32_1 : i32, i32, i32, i32
  }
  func.func @transform_1(%arg0: i32) -> (i32, i32, i32) {
    %c0_i32 = arith.constant 0 : i32
    %c0_i32_0 = arith.constant 0 : i32
    %c0_i32_1 = arith.constant 0 : i32
    %c0_i32_2 = arith.constant 0 : i32
    return %c0_i32, %c0_i32_0, %c0_i32_1 : i32, i32, i32
  }
  func.func @transform_2(%arg0: i32) -> (i32, i32) {
    %c0_i32 = arith.constant 0 : i32
    %c0_i32_0 = arith.constant 0 : i32
    %c0_i32_1 = arith.constant 0 : i32
    return %c0_i32, %c0_i32_0 : i32, i32
  }
  func.func @transform_3(%arg0: i32) -> (i32, i32) {
    %c0_i32 = arith.constant 0 : i32
    %c0_i32_0 = arith.constant 0 : i32
    %c0_i32_1 = arith.constant 0 : i32
    return %c0_i32, %c0_i32_0 : i32, i32
  }
  func.func @transform_4(%arg0: i32) -> (i32, i32, i32) {
    %c0_i32 = arith.constant 0 : i32
    %c0_i32_0 = arith.constant 0 : i32
    %c0_i32_1 = arith.constant 0 : i32
    %c0_i32_2 = arith.constant 0 : i32
    return %c0_i32, %c0_i32_0, %c0_i32_1 : i32, i32, i32
  }
  func.func @transform_5(%arg0: i32) -> (i32, i32) {
    %c0_i32 = arith.constant 0 : i32
    %c0_i32_0 = arith.constant 0 : i32
    %c0_i32_1 = arith.constant 0 : i32
    return %c0_i32, %c0_i32_0 : i32, i32
  }
  func.func @transform_6(%arg0: i32) -> (i32, i32) {
    %c0_i32 = arith.constant 0 : i32
    %c0_i32_0 = arith.constant 0 : i32
    %c0_i32_1 = arith.constant 0 : i32
    return %c0_i32, %c0_i32_0 : i32, i32
  }
  func.func @transform_7(%arg0: i32) -> (i32, i32, i32) {
    %c0_i32 = arith.constant 0 : i32
    %c0_i32_0 = arith.constant 0 : i32
    %c0_i32_1 = arith.constant 0 : i32
    %c0_i32_2 = arith.constant 0 : i32
    return %c0_i32, %c0_i32_0, %c0_i32_1 : i32, i32, i32
  }
  func.func @transform_8(%arg0: i32) -> (i32, i32) {
    %c0_i32 = arith.constant 0 : i32
    %c0_i32_0 = arith.constant 0 : i32
    %c0_i32_1 = arith.constant 0 : i32
    return %c0_i32, %c0_i32_0 : i32, i32
  }
  func.func @transform_9(%arg0: i32) -> (i32, i32) {
    %c0_i32 = arith.constant 0 : i32
    %c0_i32_0 = arith.constant 0 : i32
    %c0_i32_1 = arith.constant 0 : i32
    return %c0_i32, %c0_i32_0 : i32, i32
  }
  func.func @transform_10(%arg0: i32) -> (i32, i32, i32) {
    %c0_i32 = arith.constant 0 : i32
    %c0_i32_0 = arith.constant 0 : i32
    %c0_i32_1 = arith.constant 0 : i32
    return %arg0, %c0_i32, %c0_i32_0 : i32, i32, i32
  }
}

</mosaic_0001>

<llo_original>
// kernel: residual_block_forward.1
$region0: #{residual_block_forward.1}
  #allocation0 [shape = 'u32[]', space=smem, size = 0x4, offset = 0x4, fixed_abs, tag = 'smem constant byte address 0x4 - core index']
  #allocation1 [shape = 'u32[144,128]{1,0:T(1,128)}', space=vmem, size = 0x12000, scoped, tag = 'internal scratch']
  #allocation2 [shape = 'bf16[10,10,8]{2,1,0:T(8,128)(2,1)}', space=vmem, size = 0xa000, scoped, tag = 'scratch operand']
  %s0 = inlined_call_operand.vmem [shape: bf16[8,9,9,4], index: 0, kind: input, shape index: {}]
  %s1 = inlined_call_operand.vmem [shape: bf16[9,4,8], index: 1, kind: input, shape index: {}]
  %s2 = inlined_call_operand.vmem [shape: f32[1,8], index: 2, kind: input, shape index: {}]
  %s3 = inlined_call_operand.vmem [shape: f32[1,8], index: 3, kind: input, shape index: {}]
  %s4 = inlined_call_operand.vmem [shape: bf16[9,8,8], index: 4, kind: input, shape index: {}]
  %s5 = inlined_call_operand.vmem [shape: f32[1,8], index: 5, kind: input, shape index: {}]
  %s6 = inlined_call_operand.vmem [shape: f32[1,8], index: 6, kind: input, shape index: {}]
  %s7 = inlined_call_operand.vmem [shape: bf16[9,4,8], index: 7, kind: input, shape index: {}]
  %s8 = inlined_call_operand.vmem [shape: f32[1,8], index: 8, kind: input, shape index: {}]
  %s9 = inlined_call_operand.vmem [shape: f32[1,8], index: 9, kind: input, shape index: {}]
  %s10 = inlined_call_operand.vmem [shape: f32[2,64,8], index: 10, kind: output, shape index: {}]
  %s11 = sld [smem:[#allocation0]]
  $region73: #{residual_block_forward.1} parent=0
    _
  %s13 = ssub.s32 1, %s11
  %s14 = scalar_select 0, %s13, %s11
  loop: start=0, step=1, limit=4
  $region2: #{residual_block_forward.1} parent=0 // loop_pre_header
    _
  $region3: #{residual_block_forward.1} parent=0 // loop_header
    %s16 = sphi 0, %s20
    %p17 = scmp.ge.s32.totalorder %s16, 4
    %s26 = sphi 0, %s28
    %s29 = sphi 0, %s26
    %s30 = sphi 0, %s29
    %s46 = sphi 0, %s30
    %s50 = sphi 0, %s50
    %s52 = sphi 0, %s50
    %s53 = sphi 0, %s52
    %s67 = sphi 0, %s53
    %s71 = sphi 0, %s71
    %s73 = sphi 0, %s71
    %s74 = sphi 0, %s73
    %s88 = sphi 0, %s74
    %s92 = sphi 0, %s92
    %s94 = sphi 0, %s92
    %s95 = sphi 0, %s94
    %s109 = sphi 0, %s95
    %s113 = sphi 0, %s113
    %s115 = sphi 0, %s113
    %s116 = sphi 0, %s115
    %s130 = sphi 0, %s116
    %s134 = sphi 0, %s134
    %s136 = sphi 0, %s134
    %s137 = sphi 0, %s136
    %s151 = sphi 0, %s137
    %s155 = sphi 0, %s155
    %s157 = sphi 0, %s155
    %s158 = sphi 0, %s157
    %s172 = sphi 0, %s158
    %s176 = sphi 0, %s176
    %s178 = sphi 0, %s176
    %s179 = sphi 0, %s178
    %s193 = sphi 0, %s179
    %s197 = sphi 0, %s197
    %s199 = sphi 0, %s197
    %s200 = sphi 0, %s199
    %s214 = sphi 0, %s200
    %s218 = sphi 0, %s218
    %s220 = sphi 0, %s218
    %s221 = sphi 0, %s220
    %s235 = sphi 0, %s221
    %s241 = sphi 0, %s243
    %s244 = sphi 0, %s241
    %s245 = sphi 0, %s244
    %s261 = sphi 0, %s245
  $region4: #{residual_block_forward.1} parent=0 // loop_header_branch
    %19 = sbr.rel (%p17) target = $region8
  $region5: #{residual_block_forward.1} parent=0 // loop_body
    %s21 = ssub.s32 %s16, 1
    %s22 = ssub.s32 %s16, 2
    %s23 = sadd.s32 %s16, 1
    %s24 = ssub.s32 %s16, %s23
    %p25 = scmp.eq.s32.totalorder %s24, 0
    %s27 = sadd.s32 %s26, 1
    %s28 = scalar_select %p25, %s26, %s27
    %p31 = pneg %p25
    %p32 = scmp.eq.s32.totalorder %s16, 1
    %p33 = por %p31, %p32
    %p34 = scmp.ne.s32.totalorder %s26, %s29
    %p35 = scmp.eq.s32.totalorder %s16, 0
    %p36 = por %p34, %p35
    %p37 = scmp.ne.s32.totalorder %s26, %s29
    %p38 = scmp.eq.s32.totalorder %s21, 1
    %p39 = por %p37, %p38
    %p40 = scmp.ne.s32.totalorder %s29, %s30
    %p41 = scmp.eq.s32.totalorder %s21, 0
    %p42 = por %p40, %p41
    %p43 = scmp.ne.s32.totalorder %s29, %s30
    %p44 = scmp.eq.s32.totalorder %s22, 1
    %p45 = por %p43, %p44
    %p47 = scmp.ne.s32.totalorder %s30, %s46
    %p48 = scmp.eq.s32.totalorder %s22, 0
    %p49 = por %p47, %p48
    %s51 = sadd.s32 %s50, 1
    %p54 = scmp.eq.s32.totalorder %s16, 1
    %p55 = scmp.ne.s32.totalorder %s50, %s52
    %p56 = scmp.eq.s32.totalorder %s16, 0
    %p57 = por %p55, %p56
    %p58 = scmp.ne.s32.totalorder %s50, %s52
    %p59 = scmp.eq.s32.totalorder %s21, 1
    %p60 = por %p58, %p59
    %p61 = scmp.ne.s32.totalorder %s52, %s53
    %p62 = scmp.eq.s32.totalorder %s21, 0
    %p63 = por %p61, %p62
    %p64 = scmp.ne.s32.totalorder %s52, %s53
    %p65 = scmp.eq.s32.totalorder %s22, 1
    %p66 = por %p64, %p65
    %p68 = scmp.ne.s32.totalorder %s53, %s67
    %p69 = scmp.eq.s32.totalorder %s22, 0
    %p70 = por %p68, %p69
    %s72 = sadd.s32 %s71, 1
    %p75 = scmp.eq.s32.totalorder %s16, 1
    %p76 = scmp.ne.s32.totalorder %s71, %s73
    %p77 = scmp.eq.s32.totalorder %s16, 0
    %p78 = por %p76, %p77
    %p79 = scmp.ne.s32.totalorder %s71, %s73
    %p80 = scmp.eq.s32.totalorder %s21, 1
    %p81 = por %p79, %p80
    %p82 = scmp.ne.s32.totalorder %s73, %s74
    %p83 = scmp.eq.s32.totalorder %s21, 0
    %p84 = por %p82, %p83
    %p85 = scmp.ne.s32.totalorder %s73, %s74
    %p86 = scmp.eq.s32.totalorder %s22, 1
    %p87 = por %p85, %p86
    %p89 = scmp.ne.s32.totalorder %s74, %s88
    %p90 = scmp.eq.s32.totalorder %s22, 0
    %p91 = por %p89, %p90
    %s93 = sadd.s32 %s92, 1
    %p96 = scmp.eq.s32.totalorder %s16, 1
    %p97 = scmp.ne.s32.totalorder %s92, %s94
    %p98 = scmp.eq.s32.totalorder %s16, 0
    %p99 = por %p97, %p98
    %p100 = scmp.ne.s32.totalorder %s92, %s94
    %p101 = scmp.eq.s32.totalorder %s21, 1
    %p102 = por %p100, %p101
    %p103 = scmp.ne.s32.totalorder %s94, %s95
    %p104 = scmp.eq.s32.totalorder %s21, 0
    %p105 = por %p103, %p104
    %p106 = scmp.ne.s32.totalorder %s94, %s95
    %p107 = scmp.eq.s32.totalorder %s22, 1
    %p108 = por %p106, %p107
    %p110 = scmp.ne.s32.totalorder %s95, %s109
    %p111 = scmp.eq.s32.totalorder %s22, 0
    %p112 = por %p110, %p111
    %s114 = sadd.s32 %s113, 1
    %p117 = scmp.eq.s32.totalorder %s16, 1
    %p118 = scmp.ne.s32.totalorder %s113, %s115
    %p119 = scmp.eq.s32.totalorder %s16, 0
    %p120 = por %p118, %p119
    %p121 = scmp.ne.s32.totalorder %s113, %s115
    %p122 = scmp.eq.s32.totalorder %s21, 1
    %p123 = por %p121, %p122
    %p124 = scmp.ne.s32.totalorder %s115, %s116
    %p125 = scmp.eq.s32.totalorder %s21, 0
    %p126 = por %p124, %p125
    %p127 = scmp.ne.s32.totalorder %s115, %s116
    %p128 = scmp.eq.s32.totalorder %s22, 1
    %p129 = por %p127, %p128
    %p131 = scmp.ne.s32.totalorder %s116, %s130
    %p132 = scmp.eq.s32.totalorder %s22, 0
    %p133 = por %p131, %p132
    %s135 = sadd.s32 %s134, 1
    %p138 = scmp.eq.s32.totalorder %s16, 1
    %p139 = scmp.ne.s32.totalorder %s134, %s136
    %p140 = scmp.eq.s32.totalorder %s16, 0
    %p141 = por %p139, %p140
    %p142 = scmp.ne.s32.totalorder %s134, %s136
    %p143 = scmp.eq.s32.totalorder %s21, 1
    %p144 = por %p142, %p143
    %p145 = scmp.ne.s32.totalorder %s136, %s137
    %p146 = scmp.eq.s32.totalorder %s21, 0
    %p147 = por %p145, %p146
    %p148 = scmp.ne.s32.totalorder %s136, %s137
    %p149 = scmp.eq.s32.totalorder %s22, 1
    %p150 = por %p148, %p149
    %p152 = scmp.ne.s32.totalorder %s137, %s151
    %p153 = scmp.eq.s32.totalorder %s22, 0
    %p154 = por %p152, %p153
    %s156 = sadd.s32 %s155, 1
    %p159 = scmp.eq.s32.totalorder %s16, 1
    %p160 = scmp.ne.s32.totalorder %s155, %s157
    %p161 = scmp.eq.s32.totalorder %s16, 0
    %p162 = por %p160, %p161
    %p163 = scmp.ne.s32.totalorder %s155, %s157
    %p164 = scmp.eq.s32.totalorder %s21, 1
    %p165 = por %p163, %p164
    %p166 = scmp.ne.s32.totalorder %s157, %s158
    %p167 = scmp.eq.s32.totalorder %s21, 0
    %p168 = por %p166, %p167
    %p169 = scmp.ne.s32.totalorder %s157, %s158
    %p170 = scmp.eq.s32.totalorder %s22, 1
    %p171 = por %p169, %p170
    %p173 = scmp.ne.s32.totalorder %s158, %s172
    %p174 = scmp.eq.s32.totalorder %s22, 0
    %p175 = por %p173, %p174
    %s177 = sadd.s32 %s176, 1
    %p180 = scmp.eq.s32.totalorder %s16, 1
    %p181 = scmp.ne.s32.totalorder %s176, %s178
    %p182 = scmp.eq.s32.totalorder %s16, 0
    %p183 = por %p181, %p182
    %p184 = scmp.ne.s32.totalorder %s176, %s178
    %p185 = scmp.eq.s32.totalorder %s21, 1
    %p186 = por %p184, %p185
    %p187 = scmp.ne.s32.totalorder %s178, %s179
    %p188 = scmp.eq.s32.totalorder %s21, 0
    %p189 = por %p187, %p188
    %p190 = scmp.ne.s32.totalorder %s178, %s179
    %p191 = scmp.eq.s32.totalorder %s22, 1
    %p192 = por %p190, %p191
    %p194 = scmp.ne.s32.totalorder %s179, %s193
    %p195 = scmp.eq.s32.totalorder %s22, 0
    %p196 = por %p194, %p195
    %s198 = sadd.s32 %s197, 1
    %p201 = scmp.eq.s32.totalorder %s16, 1
    %p202 = scmp.ne.s32.totalorder %s197, %s199
    %p203 = scmp.eq.s32.totalorder %s16, 0
    %p204 = por %p202, %p203
    %p205 = scmp.ne.s32.totalorder %s197, %s199
    %p206 = scmp.eq.s32.totalorder %s21, 1
    %p207 = por %p205, %p206
    %p208 = scmp.ne.s32.totalorder %s199, %s200
    %p209 = scmp.eq.s32.totalorder %s21, 0
    %p210 = por %p208, %p209
    %p211 = scmp.ne.s32.totalorder %s199, %s200
    %p212 = scmp.eq.s32.totalorder %s22, 1
    %p213 = por %p211, %p212
    %p215 = scmp.ne.s32.totalorder %s200, %s214
    %p216 = scmp.eq.s32.totalorder %s22, 0
    %p217 = por %p215, %p216
    %s219 = sadd.s32 %s218, 1
    %p222 = scmp.eq.s32.totalorder %s16, 1
    %p223 = scmp.ne.s32.totalorder %s218, %s220
    %p224 = scmp.eq.s32.totalorder %s16, 0
    %p225 = por %p223, %p224
    %p226 = scmp.ne.s32.totalorder %s218, %s220
    %p227 = scmp.eq.s32.totalorder %s21, 1
    %p228 = por %p226, %p227
    %p229 = scmp.ne.s32.totalorder %s220, %s221
    %p230 = scmp.eq.s32.totalorder %s21, 0
    %p231 = por %p229, %p230
    %p232 = scmp.ne.s32.totalorder %s220, %s221
    %p233 = scmp.eq.s32.totalorder %s22, 1
    %p234 = por %p232, %p233
    %p236 = scmp.ne.s32.totalorder %s221, %s235
    %p237 = scmp.eq.s32.totalorder %s22, 0
    %p238 = por %p236, %p237
    %s239 = ssub.s32 %s16, %s23
    %p240 = scmp.eq.s32.totalorder %s239, 0
    %s242 = sadd.s32 %s241, 1
    %s243 = scalar_select %p240, %s241, %s242
    %p246 = pneg %p240
    %p247 = scmp.eq.s32.totalorder %s16, 1
    %p248 = por %p246, %p247
    %p249 = scmp.ne.s32.totalorder %s241, %s244
    %p250 = scmp.eq.s32.totalorder %s16, 0
    %p251 = por %p249, %p250
    %p252 = scmp.ne.s32.totalorder %s241, %s244
    %p253 = scmp.eq.s32.totalorder %s21, 1
    %p254 = por %p252, %p253
    %p255 = scmp.ne.s32.totalorder %s244, %s245
    %p256 = scmp.eq.s32.totalorder %s21, 0
    %p257 = por %p255, %p256
    %p258 = scmp.ne.s32.totalorder %s244, %s245
    %p259 = scmp.eq.s32.totalorder %s22, 1
    %p260 = por %p258, %p259
    %p262 = scmp.ne.s32.totalorder %s245, %s261
    %p263 = scmp.eq.s32.totalorder %s22, 0
    %p264 = por %p262, %p263
    %p265 = scmp.le.s32.totalorder 1, %s16
    %p266 = scmp.lt.s32.totalorder %s16, 3
    %p267 = pnand %p265, %p266
    %p268 = pneg %p267
    // Predicated region
    $region9: #{residual_block_forward.1} parent=5 // pred_check
      _
    $region10: #{residual_block_forward.1} parent=5 // pred_check_branch
      %270 = sbr.rel (%p267) target = $region12
    $region11: #{residual_block_forward.1} parent=5 // pred_region
      %s271 = ssub.s32 %s16, 1
      // Predicated region
      $region13: #{residual_block_forward.1} parent=11 // pred_check
        %p272 = pneg %p63
      $region14: #{residual_block_forward.1} parent=11 // pred_check_branch
        %274 = sbr.rel (%p272) target = $region16
      $region15: #{residual_block_forward.1} parent=11 // pred_region
        _
      $region16: #{residual_block_forward.1} parent=11 // pred_fallthru
        _
      // Predicated region
      $region17: #{residual_block_forward.1} parent=11 // pred_check
        %p275 = pneg %p84
      $region18: #{residual_block_forward.1} parent=11 // pred_check_branch
        %277 = sbr.rel (%p275) target = $region20
      $region19: #{residual_block_forward.1} parent=11 // pred_region
        _
      $region20: #{residual_block_forward.1} parent=11 // pred_fallthru
        _
      // Predicated region
      $region21: #{residual_block_forward.1} parent=11 // pred_check
        %p278 = pneg %p105
      $region22: #{residual_block_forward.1} parent=11 // pred_check_branch
        %280 = sbr.rel (%p278) target = $region24
      $region23: #{residual_block_forward.1} parent=11 // pred_region
        _
      $region24: #{residual_block_forward.1} parent=11 // pred_fallthru
        _
      // Predicated region
      $region25: #{residual_block_forward.1} parent=11 // pred_check
        %p281 = pneg %p126
      $region26: #{residual_block_forward.1} parent=11 // pred_check_branch
        %283 = sbr.rel (%p281) target = $region28
      $region27: #{residual_block_forward.1} parent=11 // pred_region
        _
      $region28: #{residual_block_forward.1} parent=11 // pred_fallthru
        _
      // Predicated region
      $region29: #{residual_block_forward.1} parent=11 // pred_check
        %p284 = pneg %p147
      $region30: #{residual_block_forward.1} parent=11 // pred_check_branch
        %286 = sbr.rel (%p284) target = $region32
      $region31: #{residual_block_forward.1} parent=11 // pred_region
        _
      $region32: #{residual_block_forward.1} parent=11 // pred_fallthru
        _
      // Predicated region
      $region33: #{residual_block_forward.1} parent=11 // pred_check
        %p287 = pneg %p168
      $region34: #{residual_block_forward.1} parent=11 // pred_check_branch
        %289 = sbr.rel (%p287) target = $region36
      $region35: #{residual_block_forward.1} parent=11 // pred_region
        _
      $region36: #{residual_block_forward.1} parent=11 // pred_fallthru
        _
      // Predicated region
      $region37: #{residual_block_forward.1} parent=11 // pred_check
        %p290 = pneg %p189
      $region38: #{residual_block_forward.1} parent=11 // pred_check_branch
        %292 = sbr.rel (%p290) target = $region40
      $region39: #{residual_block_forward.1} parent=11 // pred_region
        _
      $region40: #{residual_block_forward.1} parent=11 // pred_fallthru
        _
      // Predicated region
      $region41: #{residual_block_forward.1} parent=11 // pred_check
        %p293 = pneg %p210
      $region42: #{residual_block_forward.1} parent=11 // pred_check_branch
        %295 = sbr.rel (%p293) target = $region44
      $region43: #{residual_block_forward.1} parent=11 // pred_region
        _
      $region44: #{residual_block_forward.1} parent=11 // pred_fallthru
        _
      // Predicated region
      $region45: #{residual_block_forward.1} parent=11 // pred_check
        %p296 = pneg %p231
      $region46: #{residual_block_forward.1} parent=11 // pred_check_branch
        %298 = sbr.rel (%p296) target = $region48
      $region47: #{residual_block_forward.1} parent=11 // pred_region
        _
      $region48: #{residual_block_forward.1} parent=11 // pred_fallthru
        _
    $region12: #{residual_block_forward.1} parent=5 // pred_fallthru
      _
    %p299 = scmp.lt.s32.totalorder %s16, 2
    // Predicated region
    $region49: #{residual_block_forward.1} parent=5 // pred_check
      %p300 = pneg %p299
    $region50: #{residual_block_forward.1} parent=5 // pred_check_branch
      %302 = sbr.rel (%p300) target = $region52
    $region51: #{residual_block_forward.1} parent=5 // pred_region
      // Predicated region
      $region53: #{residual_block_forward.1} parent=51 // pred_check
        %p303 = pneg %p36
      $region54: #{residual_block_forward.1} parent=51 // pred_check_branch
        %305 = sbr.rel (%p303) target = $region56
      $region55: #{residual_block_forward.1} parent=51 // pred_region
        %s306 = smul.u32 4, %s16
        %p307 = scmp.lt.s32.totalorder %s306, 7
        %s308 = scalar_select %p307, %s306, 7
        %s309 = smul.addr %s308, 18
        %s310 = smul.addr %s309, 4
        %s311 = scalar_lea.vmem %s0, %s310
        %s312 = smul.u32 4, %s16
      $region56: #{residual_block_forward.1} parent=51 // pred_fallthru
        _
    $region52: #{residual_block_forward.1} parent=5 // pred_fallthru
      _
    %p313 = scmp.le.s32.totalorder 1, %s16
    %p314 = scmp.lt.s32.totalorder %s16, 3
    %p315 = pnand %p313, %p314
    %p316 = pneg %p315
    // Predicated region
    $region57: #{residual_block_forward.1} parent=5 // pred_check
      _
    $region58: #{residual_block_forward.1} parent=5 // pred_check_branch
      %318 = sbr.rel (%p315) target = $region60
    $region59: #{residual_block_forward.1} parent=5 // pred_region
      %s319 = ssub.s32 %s16, 1
      %s320 = smul.u32 4, %s21
      %p321 = scmp.lt.s32.totalorder %s320, 7
      %s322 = scalar_select %p321, %s320, 7
      %s323 = smul.addr %s322, 18
      %s324 = smul.addr %s323, 4
      %s325 = scalar_lea.vmem %s0, %s324
      %p326 = pneg %p42
      %p327 = pneg %p39
      %p328 = pneg %p63
      %p329 = pneg %p60
      %p330 = pneg %p84
      %p331 = pneg %p81
      %p332 = pneg %p105
      %p333 = pneg %p102
      %p334 = pneg %p126
      %p335 = pneg %p123
      %p336 = pneg %p147
      %p337 = pneg %p144
      %p338 = pneg %p168
      %p339 = pneg %p165
      %p340 = pneg %p189
      %p341 = pneg %p186
      %p342 = pneg %p210
      %p343 = pneg %p207
      %p344 = pneg %p231
      %p345 = pneg %p228
      %p346 = pneg %p257
      %p347 = pneg %p254
      %p348 = scmp.lt.s32.totalorder %s21, 1
      %s349 = scalar_select %p348, %s21, 1
      %s350 = smul.addr %s349, 8
      %s351 = smul.addr %s350, 8
      %s352 = scalar_lea.vmem %s10, %s351
      %s353 = smul.u32 4, %s21
      %p354 = scmp.lt.s32.totalorder %s353, 7
      %s355 = scalar_select %p354, %s353, 7
      %s356 = smul.addr %s355, 18
      %s357 = smul.addr %s356, 4
      %s358 = scalar_lea.vmem %s0, %s357
      %s359 = smul.u32 4, %s21
      %p360 = scmp.lt.s32.totalorder %s21, 1
      %s361 = scalar_select %p360, %s21, 1
      %s362 = smul.addr %s361, 8
      %s363 = smul.addr %s362, 8
      %s364 = scalar_lea.vmem %s10, %s363
      %v366 = vld [vmem:[%s358] sm:$0xf]
      %v367 = vld [vmem:[%s358 + $0x8] sm:$0xf]
      %v368 = vld [vmem:[%s358 + $0x10] sm:$0xf]
      %v369 = vld [vmem:[%s358 + $0x18] sm:$0xf]
      %v370 = vld [vmem:[%s358 + $0x20] sm:$0xf]
      %v371 = vld [vmem:[%s358 + $0x28] sm:$0xf]
      %v372 = vld [vmem:[%s358 + $0x30] sm:$0xf]
      %v373 = vld [vmem:[%s358 + $0x38] sm:$0xf]
      %v374 = vld [vmem:[%s1] sm:$0x3]
      %v375 = vld [vmem:[%s7] sm:$0x3]
      %s376 = scalar_lea.vmem %s358, 72
      %v377 = vld [vmem:[%s376] sm:$0xf]
      %v378 = vld [vmem:[%s376 + $0x8] sm:$0xf]
      %v379 = vld [vmem:[%s376 + $0x10] sm:$0xf]
      %v380 = vld [vmem:[%s376 + $0x18] sm:$0xf]
      %v381 = vld [vmem:[%s376 + $0x20] sm:$0xf]
      %v382 = vld [vmem:[%s376 + $0x28] sm:$0xf]
      %v383 = vld [vmem:[%s376 + $0x30] sm:$0xf]
      %v384 = vld [vmem:[%s376 + $0x38] sm:$0xf]
      %s385 = scalar_lea.vmem %s1, 2
      %v386 = vld [vmem:[%s385] sm:$0x3]
      %v395 = vunpack.c.l.b16 %v377
      %v396 = vunpack.c.l.b16 %v378
      %v397 = vunpack.c.l.b16 %v379
      %v398 = vunpack.c.l.b16 %v380
      %v399 = vunpack.c.l.b16 %v381
      %v400 = vunpack.c.l.b16 %v382
      %v401 = vunpack.c.l.b16 %v383
      %v402 = vunpack.c.l.b16 %v384
      %v403 = vpack.c.b16 %v396, %v395
      %v404 = vpack.c.b16 %v398, %v397
      %v405 = vpack.c.b16 %v400, %v399
      %v406 = vpack.c.b16 %v402, %v401
      %vm407 = vcmask 31744
      %v409 = vsel %vm407, %v403, 0
      %v412 = vsel %vm407, %v404, 0
      %v415 = vsel %vm407, %v405, 0
      %v418 = vsel %vm407, %v406, 0
      %vm420 = vcmask 1041408
      %v422 = vsel %vm420, %v386, 0
      %424 = vmatprep.subr.bf16.mxu0 0
      %425 = vmatpush1.bf16.msra.mxu0 %v422
      %426 = vmatprep.subr.bf16.mxu0 0
      %427 = vmatpush1.bf16.msra.mxu0 0
      %428 = vmatprep.subr.bf16.mxu0 0
      %429 = vmatpush1.bf16.msra.mxu0 0
      %430 = vmatprep.subr.bf16.mxu0 0
      %431 = vmatpush1.bf16.msra.mxu0 0
      %432 = vmatprep.subr.bf16.mxu0 0
      %433 = vmatpush1.bf16.msra.mxu0 0
      %434 = vmatprep.subr.bf16.mxu0 0
      %435 = vmatpush1.bf16.msra.mxu0 0
      %436 = vmatprep.subr.bf16.mxu0 0
      %437 = vmatpush1.bf16.msra.mxu0 0
      %438 = vmatprep.subr.bf16.mxu0 0
      %439 = vmatpush1.bf16.msra.mxu0 0
      %440 = vmatprep.subr.bf16.mxu0 0
      %441 = vmatpush1.bf16.msra.mxu0 0
      %442 = vmatprep.subr.bf16.mxu0 0
      %443 = vmatpush1.bf16.msra.mxu0 0
      %444 = vmatprep.subr.bf16.mxu0 0
      %445 = vmatpush1.bf16.msra.mxu0 0
      %446 = vmatprep.subr.bf16.mxu0 0
      %447 = vmatpush1.bf16.msra.mxu0 0
      %448 = vmatprep.subr.bf16.mxu0 0
      %449 = vmatpush1.bf16.msra.mxu0 0
      %450 = vmatprep.subr.bf16.mxu0 0
      %451 = vmatpush1.bf16.msra.mxu0 0
      %452 = vmatprep.subr.bf16.mxu0 0
      %453 = vmatpush1.bf16.msra.mxu0 0
      %454 = vmatprep.subr.bf16.mxu0 0
      %455 = vmatpush1.bf16.msra.mxu0 0
      %456 = vmatprep.mubr.bf16.mxu0 0
      %457 = vmatmul.mubr.bf16.gmra.mrb[0].mxu0 %v409
      %v458 = vpop.f32.mrb[0].mxu0
      %v459 = vadd.f32 0.0, %v458
      %v460 = vpop.f32.mrb[0].mxu0
      %v461 = vpop.f32.mrb[0].mxu0
      %v462 = vadd.f32 0.0, %v461
      %v463 = vpop.f32.mrb[0].mxu0
      %464 = vmatprep.mubr.bf16.mxu0 0
      %465 = vmatmul.mubr.bf16.gmra.mrb[0].mxu0 %v412
      %v466 = vpop.f32.mrb[0].mxu0
      %v467 = vadd.f32 0.0, %v466
      %v468 = vpop.f32.mrb[0].mxu0
      %v469 = vpop.f32.mrb[0].mxu0
      %v470 = vadd.f32 0.0, %v469
      %v471 = vpop.f32.mrb[0].mxu0
      %472 = vmatprep.mubr.bf16.mxu0 0
      %473 = vmatmul.mubr.bf16.gmra.mrb[0].mxu0 %v415
      %v474 = vpop.f32.mrb[0].mxu0
      %v475 = vadd.f32 0.0, %v474
      %v476 = vpop.f32.mrb[0].mxu0
      %v477 = vpop.f32.mrb[0].mxu0
      %v478 = vadd.f32 0.0, %v477
      %v479 = vpop.f32.mrb[0].mxu0
      %480 = vmatprep.mubr.bf16.mxu0 0
      %481 = vmatmul.mubr.bf16.gmra.mrb[0].mxu0 %v418
      %v482 = vpop.f32.mrb[0].mxu0
      %v483 = vadd.f32 0.0, %v482
      %v484 = vpop.f32.mrb[0].mxu0
      %v485 = vpop.f32.mrb[0].mxu0
      %v486 = vadd.f32 0.0, %v485
      %v487 = vpop.f32.mrb[0].mxu0
      %488 = vdwg.mxu0
      %v497 = vunpack.c.l.b16 %v366
      %v498 = vunpack.c.l.b16 %v367
      %v499 = vunpack.c.l.b16 %v368
      %v500 = vunpack.c.l.b16 %v369
      %v501 = vunpack.c.l.b16 %v370
      %v502 = vunpack.c.l.b16 %v371
      %v503 = vunpack.c.l.b16 %v372
      %v504 = vunpack.c.l.b16 %v373
      %v505 = vpack.c.b16 %v498, %v497
      %v506 = vpack.c.b16 %v500, %v499
      %v507 = vpack.c.b16 %v502, %v501
      %v508 = vpack.c.b16 %v504, %v503
      %v510 = vsel %vm407, %v505, 0
      %v513 = vsel %vm407, %v506, 0
      %v516 = vsel %vm407, %v507, 0
      %v519 = vsel %vm407, %v508, 0
      %v522 = vsel %vm420, %v374, 0
      %524 = vmatprep.subr.bf16.mxu0 0
      %525 = vmatpush1.bf16.msra.mxu0 %v522
      %526 = vmatprep.subr.bf16.mxu0 0
      %527 = vmatpush1.bf16.msra.mxu0 0
      %528 = vmatprep.subr.bf16.mxu0 0
      %529 = vmatpush1.bf16.msra.mxu0 0
      %530 = vmatprep.subr.bf16.mxu0 0
      %531 = vmatpush1.bf16.msra.mxu0 0
      %532 = vmatprep.subr.bf16.mxu0 0
      %533 = vmatpush1.bf16.msra.mxu0 0
      %534 = vmatprep.subr.bf16.mxu0 0
      %535 = vmatpush1.bf16.msra.mxu0 0
      %536 = vmatprep.subr.bf16.mxu0 0
      %537 = vmatpush1.bf16.msra.mxu0 0
      %538 = vmatprep.subr.bf16.mxu0 0
      %539 = vmatpush1.bf16.msra.mxu0 0
      %540 = vmatprep.subr.bf16.mxu0 0
      %541 = vmatpush1.bf16.msra.mxu0 0
      %542 = vmatprep.subr.bf16.mxu0 0
      %543 = vmatpush1.bf16.msra.mxu0 0
      %544 = vmatprep.subr.bf16.mxu0 0
      %545 = vmatpush1.bf16.msra.mxu0 0
      %546 = vmatprep.subr.bf16.mxu0 0
      %547 = vmatpush1.bf16.msra.mxu0 0
      %548 = vmatprep.subr.bf16.mxu0 0
      %549 = vmatpush1.bf16.msra.mxu0 0
      %550 = vmatprep.subr.bf16.mxu0 0
      %551 = vmatpush1.bf16.msra.mxu0 0
      %552 = vmatprep.subr.bf16.mxu0 0
      %553 = vmatpush1.bf16.msra.mxu0 0
      %554 = vmatprep.subr.bf16.mxu0 0
      %555 = vmatpush1.bf16.msra.mxu0 0
      %556 = vmatprep.mubr.bf16.mxu0 0
      %557 = vmatmul.mubr.bf16.gmra.mrb[0].mxu0 %v510
      %v558 = vpop.f32.mrb[0].mxu0
      %v559 = vadd.f32 %v459, %v558
      %v560 = vpop.f32.mrb[0].mxu0
      %v561 = vpop.f32.mrb[0].mxu0
      %v562 = vadd.f32 %v462, %v561
      %v563 = vpop.f32.mrb[0].mxu0
      %564 = vmatprep.mubr.bf16.mxu0 0
      %565 = vmatmul.mubr.bf16.gmra.mrb[0].mxu0 %v513
      %v566 = vpop.f32.mrb[0].mxu0
      %v567 = vadd.f32 %v467, %v566
      %v568 = vpop.f32.mrb[0].mxu0
      %v569 = vpop.f32.mrb[0].mxu0
      %v570 = vadd.f32 %v470, %v569
      %v571 = vpop.f32.mrb[0].mxu0
      %572 = vmatprep.mubr.bf16.mxu0 0
      %573 = vmatmul.mubr.bf16.gmra.mrb[0].mxu0 %v516
      %v574 = vpop.f32.mrb[0].mxu0
      %v575 = vadd.f32 %v475, %v574
      %v576 = vpop.f32.mrb[0].mxu0
      %v577 = vpop.f32.mrb[0].mxu0
      %v578 = vadd.f32 %v478, %v577
      %v579 = vpop.f32.mrb[0].mxu0
      %580 = vmatprep.mubr.bf16.mxu0 0
      %581 = vmatmul.mubr.bf16.gmra.mrb[0].mxu0 %v519
      %v582 = vpop.f32.mrb[0].mxu0
      %v583 = vadd.f32 %v483, %v582
      %v584 = vpop.f32.mrb[0].mxu0
      %v585 = vpop.f32.mrb[0].mxu0
      %v586 = vadd.f32 %v486, %v585
      %v587 = vpop.f32.mrb[0].mxu0
      %588 = vdwg.mxu0
      %s589 = scalar_lea.vmem %s7, 2
      %v590 = vld [vmem:[%s589] sm:$0x3]
      %v592 = vsel %vm420, %v590, 0
      %594 = vmatprep.subr.bf16.mxu0 0
      %595 = vmatpush1.bf16.msra.mxu0 %v592
      %596 = vmatprep.subr.bf16.mxu0 0
      %597 = vmatpush1.bf16.msra.mxu0 0
      %598 = vmatprep.subr.bf16.mxu0 0
      %599 = vmatpush1.bf16.msra.mxu0 0
      %600 = vmatprep.subr.bf16.mxu0 0
      %601 = vmatpush1.bf16.msra.mxu0 0
      %602 = vmatprep.subr.bf16.mxu0 0
      %603 = vmatpush1.bf16.msra.mxu0 0
      %604 = vmatprep.subr.bf16.mxu0 0
      %605 = vmatpush1.bf16.msra.mxu0 0
      %606 = vmatprep.subr.bf16.mxu0 0
      %607 = vmatpush1.bf16.msra.mxu0 0
      %608 = vmatprep.subr.bf16.mxu0 0
      %609 = vmatpush1.bf16.msra.mxu0 0
      %610 = vmatprep.subr.bf16.mxu0 0
      %611 = vmatpush1.bf16.msra.mxu0 0
      %612 = vmatprep.subr.bf16.mxu0 0
      %613 = vmatpush1.bf16.msra.mxu0 0
      %614 = vmatprep.subr.bf16.mxu0 0
      %615 = vmatpush1.bf16.msra.mxu0 0
      %616 = vmatprep.subr.bf16.mxu0 0
      %617 = vmatpush1.bf16.msra.mxu0 0
      %618 = vmatprep.subr.bf16.mxu0 0
      %619 = vmatpush1.bf16.msra.mxu0 0
      %620 = vmatprep.subr.bf16.mxu0 0
      %621 = vmatpush1.bf16.msra.mxu0 0
      %622 = vmatprep.subr.bf16.mxu0 0
      %623 = vmatpush1.bf16.msra.mxu0 0
      %624 = vmatprep.subr.bf16.mxu0 0
      %625 = vmatpush1.bf16.msra.mxu0 0
      %626 = vmatprep.mubr.bf16.mxu0 0
      %627 = vmatmul.mubr.bf16.gmra.mrb[0].mxu0 %v409
      %v628 = vpop.f32.mrb[0].mxu0
      %v629 = vadd.f32 0.0, %v628
      %v630 = vpop.f32.mrb[0].mxu0
      %v631 = vpop.f32.mrb[0].mxu0
      %v632 = vadd.f32 0.0, %v631
      %v633 = vpop.f32.mrb[0].mxu0
      %634 = vmatprep.mubr.bf16.mxu0 0
      %635 = vmatmul.mubr.bf16.gmra.mrb[0].mxu0 %v412
      %v636 = vpop.f32.mrb[0].mxu0
      %v637 = vadd.f32 0.0, %v636
      %v638 = vpop.f32.mrb[0].mxu0
      %v639 = vpop.f32.mrb[0].mxu0
      %v640 = vadd.f32 0.0, %v639
      %v641 = vpop.f32.mrb[0].mxu0
      %642 = vmatprep.mubr.bf16.mxu0 0
      %643 = vmatmul.mubr.bf16.gmra.mrb[0].mxu0 %v415
      %v644 = vpop.f32.mrb[0].mxu0
      %v645 = vadd.f32 0.0, %v644
      %v646 = vpop.f32.mrb[0].mxu0
      %v647 = vpop.f32.mrb[0].mxu0
      %v648 = vadd.f32 0.0, %v647
      %v649 = vpop.f32.mrb[0].mxu0
      %650 = vmatprep.mubr.bf16.mxu0 0
      %651 = vmatmul.mubr.bf16.gmra.mrb[0].mxu0 %v418
      %v652 = vpop.f32.mrb[0].mxu0
      %v653 = vadd.f32 0.0, %v652
      %v654 = vpop.f32.mrb[0].mxu0
      %v655 = vpop.f32.mrb[0].mxu0
      %v656 = vadd.f32 0.0, %v655
      %v657 = vpop.f32.mrb[0].mxu0
      %658 = vdwg.mxu0
      %v660 = vsel %vm420, %v375, 0
      %662 = vmatprep.subr.bf16.mxu0 0
      %663 = vmatpush1.bf16.msra.mxu0 %v660
      %664 = vmatprep.subr.bf16.mxu0 0
      %665 = vmatpush1.bf16.msra.mxu0 0
      %666 = vmatprep.subr.bf16.mxu0 0
      %667 = vmatpush1.bf16.msra.mxu0 0
      %668 = vmatprep.subr.bf16.mxu0 0
      %669 = vmatpush1.bf16.msra.mxu0 0
      %670 = vmatprep.subr.bf16.mxu0 0
      %671 = vmatpush1.bf16.msra.mxu0 0
      %672 = vmatprep.subr.bf16.mxu0 0
      %673 = vmatpush1.bf16.msra.mxu0 0
      %674 = vmatprep.subr.bf16.mxu0 0
      %675 = vmatpush1.bf16.msra.mxu0 0
      %676 = vmatprep.subr.bf16.mxu0 0
      %677 = vmatpush1.bf16.msra.mxu0 0
      %678 = vmatprep.subr.bf16.mxu0 0
      %679 = vmatpush1.bf16.msra.mxu0 0
      %680 = vmatprep.subr.bf16.mxu0 0
      %681 = vmatpush1.bf16.msra.mxu0 0
      %682 = vmatprep.subr.bf16.mxu0 0
      %683 = vmatpush1.bf16.msra.mxu0 0
      %684 = vmatprep.subr.bf16.mxu0 0
      %685 = vmatpush1.bf16.msra.mxu0 0
      %686 = vmatprep.subr.bf16.mxu0 0
      %687 = vmatpush1.bf16.msra.mxu0 0
      %688 = vmatprep.subr.bf16.mxu0 0
      %689 = vmatpush1.bf16.msra.mxu0 0
      %690 = vmatprep.subr.bf16.mxu0 0
      %691 = vmatpush1.bf16.msra.mxu0 0
      %692 = vmatprep.subr.bf16.mxu0 0
      %693 = vmatpush1.bf16.msra.mxu0 0
      %694 = vmatprep.mubr.bf16.mxu0 0
      %695 = vmatmul.mubr.bf16.gmra.mrb[0].mxu0 %v510
      %v696 = vpop.f32.mrb[0].mxu0
      %v697 = vadd.f32 %v629, %v696
      %v698 = vpop.f32.mrb[0].mxu0
      %v699 = vpop.f32.mrb[0].mxu0
      %v700 = vadd.f32 %v632, %v699
      %v701 = vpop.f32.mrb[0].mxu0
      %702 = vmatprep.mubr.bf16.mxu0 0
      %703 = vmatmul.mubr.bf16.gmra.mrb[0].mxu0 %v513
      %v704 = vpop.f32.mrb[0].mxu0
      %v705 = vadd.f32 %v637, %v704
      %v706 = vpop.f32.mrb[0].mxu0
      %v707 = vpop.f32.mrb[0].mxu0
      %v708 = vadd.f32 %v640, %v707
      %v709 = vpop.f32.mrb[0].mxu0
      %710 = vmatprep.mubr.bf16.mxu0 0
      %711 = vmatmul.mubr.bf16.gmra.mrb[0].mxu0 %v516
      %v712 = vpop.f32.mrb[0].mxu0
      %v713 = vadd.f32 %v645, %v712
      %v714 = vpop.f32.mrb[0].mxu0
      %v715 = vpop.f32.mrb[0].mxu0
      %v716 = vadd.f32 %v648, %v715
      %v717 = vpop.f32.mrb[0].mxu0
      %718 = vmatprep.mubr.bf16.mxu0 0
      %719 = vmatmul.mubr.bf16.gmra.mrb[0].mxu0 %v519
      %v720 = vpop.f32.mrb[0].mxu0
      %v721 = vadd.f32 %v653, %v720
      %v722 = vpop.f32.mrb[0].mxu0
      %v723 = vpop.f32.mrb[0].mxu0
      %v724 = vadd.f32 %v656, %v723
      %v725 = vpop.f32.mrb[0].mxu0
      %726 = vdwg.mxu0
      %v727 = vld [vmem:[%s358] sm:$0xf]
      %v728 = vld [vmem:[%s358 + $0x4] sm:$0x1]
      %v729 = vld [vmem:[%s358 + $0x8] sm:$0xf]
      %v730 = vld [vmem:[%s358 + $0xc] sm:$0x1]
      %v731 = vld [vmem:[%s358 + $0x10] sm:$0xf]
      %v732 = vld [vmem:[%s358 + $0x14] sm:$0x1]
      %v733 = vld [vmem:[%s358 + $0x18] sm:$0xf]
      %v734 = vld [vmem:[%s358 + $0x1c] sm:$0x1]
      %v735 = vld [vmem:[%s358 + $0x20] sm:$0xf]
      %v736 = vld [vmem:[%s358 + $0x24] sm:$0x1]
      %v737 = vld [vmem:[%s358 + $0x28] sm:$0xf]
      %v738 = vld [vmem:[%s358 + $0x2c] sm:$0x1]
      %v739 = vld [vmem:[%s358 + $0x30] sm:$0xf]
      %v740 = vld [vmem:[%s358 + $0x34] sm:$0x1]
      %v741 = vld [vmem:[%s358 + $0x38] sm:$0xf]
      %v742 = vld [vmem:[%s358 + $0x3c] sm:$0x1]
      %vm743 = vsmask.f32 3328
      %vm744 = vsmask.f32 7440
      %vm745 = vmor %vm743, %vm744
      %v747 = vshrl.u32 %v727, 16
      %v749 = vrot.slane %v747, 4
      %v750 = vshll.u32 %v727, 16
      %v752 = vrot.slane %v750, 5
      %v753 = vor.u32 %v749, %v752
      %v754 = vrot.slane %v753, 4
      %v756 = vshll.u32 %v728, 16
      %v758 = vrot.slane %v756, 5
      %v759 = vsel %vm745, %v754, %v758
      %v761 = vshrl.u32 %v729, 16
      %v763 = vrot.slane %v761, 4
      %v764 = vshll.u32 %v729, 16
      %v766 = vrot.slane %v764, 5
      %v767 = vor.u32 %v763, %v766
      %v768 = vrot.slane %v767, 4
      %v770 = vshll.u32 %v730, 16
      %v772 = vrot.slane %v770, 5
      %v773 = vsel %vm745, %v768, %v772
      %v775 = vshrl.u32 %v731, 16
      %v777 = vrot.slane %v775, 4
      %v778 = vshll.u32 %v731, 16
      %v780 = vrot.slane %v778, 5
      %v781 = vor.u32 %v777, %v780
      %v782 = vrot.slane %v781, 4
      %v784 = vshll.u32 %v732, 16
      %v786 = vrot.slane %v784, 5
      %v787 = vsel %vm745, %v782, %v786
      %v789 = vshrl.u32 %v733, 16
      %v791 = vrot.slane %v789, 4
      %v792 = vshll.u32 %v733, 16
      %v794 = vrot.slane %v792, 5
      %v795 = vor.u32 %v791, %v794
      %v796 = vrot.slane %v795, 4
      %v798 = vshll.u32 %v734, 16
      %v800 = vrot.slane %v798, 5
      %v801 = vsel %vm745, %v796, %v800
      %v803 = vshrl.u32 %v735, 16
      %v805 = vrot.slane %v803, 4
      %v806 = vshll.u32 %v735, 16
      %v808 = vrot.slane %v806, 5
      %v809 = vor.u32 %v805, %v808
      %v810 = vrot.slane %v809, 4
      %v812 = vshll.u32 %v736, 16
      %v814 = vrot.slane %v812, 5
      %v815 = vsel %vm745, %v810, %v814
      %v817 = vshrl.u32 %v737, 16
      %v819 = vrot.slane %v817, 4
      %v820 = vshll.u32 %v737, 16
      %v822 = vrot.slane %v820, 5
      %v823 = vor.u32 %v819, %v822
      %v824 = vrot.slane %v823, 4
      %v826 = vshll.u32 %v738, 16
      %v828 = vrot.slane %v826, 5
      %v829 = vsel %vm745, %v824, %v828
      %v831 = vshrl.u32 %v739, 16
      %v833 = vrot.slane %v831, 4
      %v834 = vshll.u32 %v739, 16
      %v836 = vrot.slane %v834, 5
      %v837 = vor.u32 %v833, %v836
      %v838 = vrot.slane %v837, 4
      %v840 = vshll.u32 %v740, 16
      %v842 = vrot.slane %v840, 5
      %v843 = vsel %vm745, %v838, %v842
      %v845 = vshrl.u32 %v741, 16
      %v847 = vrot.slane %v845, 4
      %v848 = vshll.u32 %v741, 16
      %v850 = vrot.slane %v848, 5
      %v851 = vor.u32 %v847, %v850
      %v852 = vrot.slane %v851, 4
      %v854 = vshll.u32 %v742, 16
      %v856 = vrot.slane %v854, 5
      %v857 = vsel %vm745, %v852, %v856
      %s858 = scalar_lea.vmem %s1, 4
      %v859 = vld [vmem:[%s858] sm:$0x3]
      %v860 = vunpack.c.l.b16 %v759
      %v861 = vunpack.c.l.b16 %v773
      %v862 = vunpack.c.l.b16 %v787
      %v863 = vunpack.c.l.b16 %v801
      %v864 = vunpack.c.l.b16 %v815
      %v865 = vunpack.c.l.b16 %v829
      %v866 = vunpack.c.l.b16 %v843
      %v867 = vunpack.c.l.b16 %v857
      %v868 = vpack.c.b16 %v861, %v860
      %v869 = vpack.c.b16 %v863, %v862
      %v870 = vpack.c.b16 %v865, %v864
      %v871 = vpack.c.b16 %v867, %v866
      %v873 = vsel %vm407, %v868, 0
      %v876 = vsel %vm407, %v869, 0
      %v879 = vsel %vm407, %v870, 0
      %v882 = vsel %vm407, %v871, 0
      %v885 = vsel %vm420, %v859, 0
      %887 = vmatprep.subr.bf16.mxu0 0
      %888 = vmatpush1.bf16.msra.mxu0 %v885
      %889 = vmatprep.subr.bf16.mxu0 0
      %890 = vmatpush1.bf16.msra.mxu0 0
      %891 = vmatprep.subr.bf16.mxu0 0
      %892 = vmatpush1.bf16.msra.mxu0 0
      %893 = vmatprep.subr.bf16.mxu0 0
      %894 = vmatpush1.bf16.msra.mxu0 0
      %895 = vmatprep.subr.bf16.mxu0 0
      %896 = vmatpush1.bf16.msra.mxu0 0
      %897 = vmatprep.subr.bf16.mxu0 0
      %898 = vmatpush1.bf16.msra.mxu0 0
      %899 = vmatprep.subr.bf16.mxu0 0
      %900 = vmatpush1.bf16.msra.mxu0 0
      %901 = vmatprep.subr.bf16.mxu0 0
      %902 = vmatpush1.bf16.msra.mxu0 0
      %903 = vmatprep.subr.bf16.mxu0 0
      %904 = vmatpush1.bf16.msra.mxu0 0
      %905 = vmatprep.subr.bf16.mxu0 0
      %906 = vmatpush1.bf16.msra.mxu0 0
      %907 = vmatprep.subr.bf16.mxu0 0
      %908 = vmatpush1.bf16.msra.mxu0 0
      %909 = vmatprep.subr.bf16.mxu0 0
      %910 = vmatpush1.bf16.msra.mxu0 0
      %911 = vmatprep.subr.bf16.mxu0 0
      %912 = vmatpush1.bf16.msra.mxu0 0
      %913 = vmatprep.subr.bf16.mxu0 0
      %914 = vmatpush1.bf16.msra.mxu0 0
      %915 = vmatprep.subr.bf16.mxu0 0
      %916 = vmatpush1.bf16.msra.mxu0 0
      %917 = vmatprep.subr.bf16.mxu0 0
      %918 = vmatpush1.bf16.msra.mxu0 0
      %919 = vmatprep.mubr.bf16.mxu0 0
      %920 = vmatmul.mubr.bf16.gmra.mrb[0].mxu0 %v873
      %v921 = vpop.f32.mrb[0].mxu0
      %v922 = vadd.f32 0.0, %v921
      %v923 = vpop.f32.mrb[0].mxu0
      %v924 = vpop.f32.mrb[0].mxu0
      %v925 = vadd.f32 0.0, %v924
      %v926 = vpop.f32.mrb[0].mxu0
      %927 = vmatprep.mubr.bf16.mxu0 0
      %928 = vmatmul.mubr.bf16.gmra.mrb[0].mxu0 %v876
      %v929 = vpop.f32.mrb[0].mxu0
      %v930 = vadd.f32 0.0, %v929
      %v931 = vpop.f32.mrb[0].mxu0
      %v932 = vpop.f32.mrb[0].mxu0
      %v933 = vadd.f32 0.0, %v932
      %v934 = vpop.f32.mrb[0].mxu0
      %935 = vmatprep.mubr.bf16.mxu0 0
      %936 = vmatmul.mubr.bf16.gmra.mrb[0].mxu0 %v879
      %v937 = vpop.f32.mrb[0].mxu0
      %v938 = vadd.f32 0.0, %v937
      %v939 = vpop.f32.mrb[0].mxu0
      %v940 = vpop.f32.mrb[0].mxu0
      %v941 = vadd.f32 0.0, %v940
      %v942 = vpop.f32.mrb[0].mxu0
      %943 = vmatprep.mubr.bf16.mxu0 0
      %944 = vmatmul.mubr.bf16.gmra.mrb[0].mxu0 %v882
      %v945 = vpop.f32.mrb[0].mxu0
      %v946 = vadd.f32 0.0, %v945
      %v947 = vpop.f32.mrb[0].mxu0
      %v948 = vpop.f32.mrb[0].mxu0
      %v949 = vadd.f32 0.0, %v948
      %v950 = vpop.f32.mrb[0].mxu0
      %951 = vdwg.mxu0
      %v952 = vadd.f32 %v559, %v922
      %v953 = vadd.f32 %v562, %v925
      %v954 = vadd.f32 %v567, %v930
      %v955 = vadd.f32 %v570, %v933
      %v956 = vadd.f32 %v575, %v938
      %v957 = vadd.f32 %v578, %v941
      %v958 = vadd.f32 %v583, %v946
      %v959 = vadd.f32 %v586, %v949
      %s960 = scalar_lea.vmem %s7, 4
      %v961 = vld [vmem:[%s960] sm:$0x3]
      %v963 = vsel %vm420, %v961, 0
      %965 = vmatprep.subr.bf16.mxu0 0
      %966 = vmatpush1.bf16.msra.mxu0 %v963
      %967 = vmatprep.subr.bf16.mxu0 0
      %968 = vmatpush1.bf16.msra.mxu0 0
      %969 = vmatprep.subr.bf16.mxu0 0
      %970 = vmatpush1.bf16.msra.mxu0 0
      %971 = vmatprep.subr.bf16.mxu0 0
      %972 = vmatpush1.bf16.msra.mxu0 0
      %973 = vmatprep.subr.bf16.mxu0 0
      %974 = vmatpush1.bf16.msra.mxu0 0
      %975 = vmatprep.subr.bf16.mxu0 0
      %976 = vmatpush1.bf16.msra.mxu0 0
      %977 = vmatprep.subr.bf16.mxu0 0
      %978 = vmatpush1.bf16.msra.mxu0 0
      %979 = vmatprep.subr.bf16.mxu0 0
      %980 = vmatpush1.bf16.msra.mxu0 0
      %981 = vmatprep.subr.bf16.mxu0 0
      %982 = vmatpush1.bf16.msra.mxu0 0
      %983 = vmatprep.subr.bf16.mxu0 0
      %984 = vmatpush1.bf16.msra.mxu0 0
      %985 = vmatprep.subr.bf16.mxu0 0
      %986 = vmatpush1.bf16.msra.mxu0 0
      %987 = vmatprep.subr.bf16.mxu0 0
      %988 = vmatpush1.bf16.msra.mxu0 0
      %989 = vmatprep.subr.bf16.mxu0 0
      %990 = vmatpush1.bf16.msra.mxu0 0
      %991 = vmatprep.subr.bf16.mxu0 0
      %992 = vmatpush1.bf16.msra.mxu0 0
      %993 = vmatprep.subr.bf16.mxu0 0
      %994 = vmatpush1.bf16.msra.mxu0 0
      %995 = vmatprep.subr.bf16.mxu0 0
      %996 = vmatpush1.bf16.msra.mxu0 0
      %997 = vmatprep.mubr.bf16.mxu0 0
      %998 = vmatmul.mubr.bf16.gmra.mrb[0].mxu0 %v873
      %v999 = vpop.f32.mrb[0].mxu0
      %v1000 = vadd.f32 0.0, %v999
      %v1001 = vpop.f32.mrb[0].mxu0
      %v1002 = vpop.f32.mrb[0].mxu0
      %v1003 = vadd.f32 0.0, %v1002
      %v1004 = vpop.f32.mrb[0].mxu0
      %1005 = vmatprep.mubr.bf16.mxu0 0
      %1006 = vmatmul.mubr.bf16.gmra.mrb[0].mxu0 %v876
      %v1007 = vpop.f32.mrb[0].mxu0
      %v1008 = vadd.f32 0.0, %v1007
      %v1009 = vpop.f32.mrb[0].mxu0
      %v1010 = vpop.f32.mrb[0].mxu0
      %v1011 = vadd.f32 0.0, %v1010
      %v1012 = vpop.f32.mrb[0].mxu0
      %1013 = vmatprep.mubr.bf16.mxu0 0
      %1014 = vmatmul.mubr.bf16.gmra.mrb[0].mxu0 %v879
      %v1015 = vpop.f32.mrb[0].mxu0
      %v1016 = vadd.f32 0.0, %v1015
      %v1017 = vpop.f32.mrb[0].mxu0
      %v1018 = vpop.f32.mrb[0].mxu0
      %v1019 = vadd.f32 0.0, %v1018
      %v1020 = vpop.f32.mrb[0].mxu0
      %1021 = vmatprep.mubr.bf16.mxu0 0
      %1022 = vmatmul.mubr.bf16.gmra.mrb[0].mxu0 %v882
      %v1023 = vpop.f32.mrb[0].mxu0
      %v1024 = vadd.f32 0.0, %v1023
      %v1025 = vpop.f32.mrb[0].mxu0
      %v1026 = vpop.f32.mrb[0].mxu0
      %v1027 = vadd.f32 0.0, %v1026
      %v1028 = vpop.f32.mrb[0].mxu0
      %1029 = vdwg.mxu0
      %v1030 = vadd.f32 %v697, %v1000
      %v1031 = vadd.f32 %v700, %v1003
      %v1032 = vadd.f32 %v705, %v1008
      %v1033 = vadd.f32 %v708, %v1011
      %v1034 = vadd.f32 %v713, %v1016
      %v1035 = vadd.f32 %v716, %v1019
      %v1036 = vadd.f32 %v721, %v1024
      %v1037 = vadd.f32 %v724, %v1027
      %s1038 = scalar_lea.vmem %s358, 144
      %v1039 = vld [vmem:[%s1038] sm:$0xf]
      %v1040 = vld [vmem:[%s1038 + $0x8] sm:$0xf]
      %v1041 = vld [vmem:[%s1038 + $0x10] sm:$0xf]
      %v1042 = vld [vmem:[%s1038 + $0x18] sm:$0xf]
      %v1043 = vld [vmem:[%s1038 + $0x20] sm:$0xf]
      %v1044 = vld [vmem:[%s1038 + $0x28] sm:$0xf]
      %v1045 = vld [vmem:[%s1038 + $0x30] sm:$0xf]
      %v1046 = vld [vmem:[%s1038 + $0x38] sm:$0xf]
      %s1047 = scalar_lea.vmem %s1, 6
      %v1048 = vld [vmem:[%s1047] sm:$0x3]
      %v1057 = vunpack.c.l.b16 %v1039
      %v1058 = vunpack.c.l.b16 %v1040
      %v1059 = vunpack.c.l.b16 %v1041
      %v1060 = vunpack.c.l.b16 %v1042
      %v1061 = vunpack.c.l.b16 %v1043
      %v1062 = vunpack.c.l.b16 %v1044
      %v1063 = vunpack.c.l.b16 %v1045
      %v1064 = vunpack.c.l.b16 %v1046
      %v1065 = vpack.c.b16 %v1058, %v1057
      %v1066 = vpack.c.b16 %v1060, %v1059
      %v1067 = vpack.c.b16 %v1062, %v1061
      %v1068 = vpack.c.b16 %v1064, %v1063
      %v1070 = vsel %vm407, %v1065, 0
      %v1073 = vsel %vm407, %v1066, 0
      %v1076 = vsel %vm407, %v1067, 0
      %v1079 = vsel %vm407, %v1068, 0
      %v1082 = vsel %vm420, %v1048, 0
      %1084 = vmatprep.subr.bf16.mxu0 0
      %1085 = vmatpush1.bf16.msra.mxu0 %v1082
      %1086 = vmatprep.subr.bf16.mxu0 0
      %1087 = vmatpush1.bf16.msra.mxu0 0
      %1088 = vmatprep.subr.bf16.mxu0 0
      %1089 = vmatpush1.bf16.msra.mxu0 0
      %1090 = vmatprep.subr.bf16.mxu0 0
      %1091 = vmatpush1.bf16.msra.mxu0 0
      %1092 = vmatprep.subr.bf16.mxu0 0
      %1093 = vmatpush1.bf16.msra.mxu0 0
      %1094 = vmatprep.subr.bf16.mxu0 0
      %1095 = vmatpush1.bf16.msra.mxu0 0
      %1096 = vmatprep.subr.bf16.mxu0 0
      %1097 = vmatpush1.bf16.msra.mxu0 0
      %1098 = vmatprep.subr.bf16.mxu0 0
      %1099 = vmatpush1.bf16.msra.mxu0 0
      %1100 = vmatprep.subr.bf16.mxu0 0
      %1101 = vmatpush1.bf16.msra.mxu0 0
      %1102 = vmatprep.subr.bf16.mxu0 0
      %1103 = vmatpush1.bf16.msra.mxu0 0
      %1104 = vmatprep.subr.bf16.mxu0 0
      %1105 = vmatpush1.bf16.msra.mxu0 0
      %1106 = vmatprep.subr.bf16.mxu0 0
      %1107 = vmatpush1.bf16.msra.mxu0 0
      %1108 = vmatprep.subr.bf16.mxu0 0
      %1109 = vmatpush1.bf16.msra.mxu0 0
      %1110 = vmatprep.subr.bf16.mxu0 0
      %1111 = vmatpush1.bf16.msra.mxu0 0
      %1112 = vmatprep.subr.bf16.mxu0 0
      %1113 = vmatpush1.bf16.msra.mxu0 0
      %1114 = vmatprep.subr.bf16.mxu0 0
      %1115 = vmatpush1.bf16.msra.mxu0 0
      %1116 = vmatprep.mubr.bf16.mxu0 0
      %1117 = vmatmul.mubr.bf16.gmra.mrb[0].mxu0 %v1070
      %v1118 = vpop.f32.mrb[0].mxu0
      %v1119 = vadd.f32 0.0, %v1118
      %v1120 = vpop.f32.mrb[0].mxu0
      %v1121 = vpop.f32.mrb[0].mxu0
      %v1122 = vadd.f32 0.0, %v1121
      %v1123 = vpop.f32.mrb[0].mxu0
      %1124 = vmatprep.mubr.bf16.mxu0 0
      %1125 = vmatmul.mubr.bf16.gmra.mrb[0].mxu0 %v1073
      %v1126 = vpop.f32.mrb[0].mxu0
      %v1127 = vadd.f32 0.0, %v1126
      %v1128 = vpop.f32.mrb[0].mxu0
      %v1129 = vpop.f32.mrb[0].mxu0
      %v1130 = vadd.f32 0.0, %v1129
      %v1131 = vpop.f32.mrb[0].mxu0
      %1132 = vmatprep.mubr.bf16.mxu0 0
      %1133 = vmatmul.mubr.bf16.gmra.mrb[0].mxu0 %v1076
      %v1134 = vpop.f32.mrb[0].mxu0
      %v1135 = vadd.f32 0.0, %v1134
      %v1136 = vpop.f32.mrb[0].mxu0
      %v1137 = vpop.f32.mrb[0].mxu0
      %v1138 = vadd.f32 0.0, %v1137
      %v1139 = vpop.f32.mrb[0].mxu0
      %1140 = vmatprep.mubr.bf16.mxu0 0
      %1141 = vmatmul.mubr.bf16.gmra.mrb[0].mxu0 %v1079
      %v1142 = vpop.f32.mrb[0].mxu0
      %v1143 = vadd.f32 0.0, %v1142
      %v1144 = vpop.f32.mrb[0].mxu0
      %v1145 = vpop.f32.mrb[0].mxu0
      %v1146 = vadd.f32 0.0, %v1145
      %v1147 = vpop.f32.mrb[0].mxu0
      %1148 = vdwg.mxu0
      %v1149 = vadd.f32 %v952, %v1119
      %v1150 = vadd.f32 %v953, %v1122
      %v1151 = vadd.f32 %v954, %v1127
      %v1152 = vadd.f32 %v955, %v1130
      %v1153 = vadd.f32 %v956, %v1135
      %v1154 = vadd.f32 %v957, %v1138
      %v1155 = vadd.f32 %v958, %v1143
      %v1156 = vadd.f32 %v959, %v1146
      %s1157 = scalar_lea.vmem %s7, 6
      %v1158 = vld [vmem:[%s1157] sm:$0x3]
      %v1160 = vsel %vm420, %v1158, 0
      %1162 = vmatprep.subr.bf16.mxu0 0
      %1163 = vmatpush1.bf16.msra.mxu0 %v1160
      %1164 = vmatprep.subr.bf16.mxu0 0
      %1165 = vmatpush1.bf16.msra.mxu0 0
      %1166 = vmatprep.subr.bf16.mxu0 0
      %1167 = vmatpush1.bf16.msra.mxu0 0
      %1168 = vmatprep.subr.bf16.mxu0 0
      %1169 = vmatpush1.bf16.msra.mxu0 0
      %1170 = vmatprep.subr.bf16.mxu0 0
      %1171 = vmatpush1.bf16.msra.mxu0 0
      %1172 = vmatprep.subr.bf16.mxu0 0
      %1173 = vmatpush1.bf16.msra.mxu0 0
      %1174 = vmatprep.subr.bf16.mxu0 0
      %1175 = vmatpush1.bf16.msra.mxu0 0
      %1176 = vmatprep.subr.bf16.mxu0 0
      %1177 = vmatpush1.bf16.msra.mxu0 0
      %1178 = vmatprep.subr.bf16.mxu0 0
      %1179 = vmatpush1.bf16.msra.mxu0 0
      %1180 = vmatprep.subr.bf16.mxu0 0
      %1181 = vmatpush1.bf16.msra.mxu0 0
      %1182 = vmatprep.subr.bf16.mxu0 0
      %1183 = vmatpush1.bf16.msra.mxu0 0
      %1184 = vmatprep.subr.bf16.mxu0 0
      %1185 = vmatpush1.bf16.msra.mxu0 0
      %1186 = vmatprep.subr.bf16.mxu0 0
      %1187 = vmatpush1.bf16.msra.mxu0 0
      %1188 = vmatprep.subr.bf16.mxu0 0
      %1189 = vmatpush1.bf16.msra.mxu0 0
      %1190 = vmatprep.subr.bf16.mxu0 0
      %1191 = vmatpush1.bf16.msra.mxu0 0
      %1192 = vmatprep.subr.bf16.mxu0 0
      %1193 = vmatpush1.bf16.msra.mxu0 0
      %1194 = vmatprep.mubr.bf16.mxu0 0
      %1195 = vmatmul.mubr.bf16.gmra.mrb[0].mxu0 %v1070
      %v1196 = vpop.f32.mrb[0].mxu0
      %v1197 = vadd.f32 0.0, %v1196
      %v1198 = vpop.f32.mrb[0].mxu0
      %v1199 = vpop.f32.mrb[0].mxu0
      %v1200 = vadd.f32 0.0, %v1199
      %v1201 = vpop.f32.mrb[0].mxu0
      %1202 = vmatprep.mubr.bf16.mxu0 0
      %1203 = vmatmul.mubr.bf16.gmra.mrb[0].mxu0 %v1073
      %v1204 = vpop.f32.mrb[0].mxu0
      %v1205 = vadd.f32 0.0, %v1204
      %v1206 = vpop.f32.mrb[0].mxu0
      %v1207 = vpop.f32.mrb[0].mxu0
      %v1208 = vadd.f32 0.0, %v1207
      %v1209 = vpop.f32.mrb[0].mxu0
      %1210 = vmatprep.mubr.bf16.mxu0 0
      %1211 = vmatmul.mubr.bf16.gmra.mrb[0].mxu0 %v1076
      %v1212 = vpop.f32.mrb[0].mxu0
      %v1213 = vadd.f32 0.0, %v1212
      %v1214 = vpop.f32.mrb[0].mxu0
      %v1215 = vpop.f32.mrb[0].mxu0
      %v1216 = vadd.f32 0.0, %v1215
      %v1217 = vpop.f32.mrb[0].mxu0
      %1218 = vmatprep.mubr.bf16.mxu0 0
      %1219 = vmatmul.mubr.bf16.gmra.mrb[0].mxu0 %v1079
      %v1220 = vpop.f32.mrb[0].mxu0
      %v1221 = vadd.f32 0.0, %v1220
      %v1222 = vpop.f32.mrb[0].mxu0
      %v1223 = vpop.f32.mrb[0].mxu0
      %v1224 = vadd.f32 0.0, %v1223
      %v1225 = vpop.f32.mrb[0].mxu0
      %1226 = vdwg.mxu0
      %v1227 = vadd.f32 %v1030, %v1197
      %v1228 = vadd.f32 %v1031, %v1200
      %v1229 = vadd.f32 %v1032, %v1205
      %v1230 = vadd.f32 %v1033, %v1208
      %v1231 = vadd.f32 %v1034, %v1213
      %v1232 = vadd.f32 %v1035, %v1216
      %v1233 = vadd.f32 %v1036, %v1221
      %v1234 = vadd.f32 %v1037, %v1224
      %s1235 = scalar_lea.vmem %s358, 216
      %v1236 = vld [vmem:[%s1235] sm:$0xf]
      %v1237 = vld [vmem:[%s1235 + $0x8] sm:$0xf]
      %v1238 = vld [vmem:[%s1235 + $0x10] sm:$0xf]
      %v1239 = vld [vmem:[%s1235 + $0x18] sm:$0xf]
      %v1240 = vld [vmem:[%s1235 + $0x20] sm:$0xf]
      %v1241 = vld [vmem:[%s1235 + $0x28] sm:$0xf]
      %v1242 = vld [vmem:[%s1235 + $0x30] sm:$0xf]
      %v1243 = vld [vmem:[%s1235 + $0x38] sm:$0xf]
      %s1244 = scalar_lea.vmem %s1, 8
      %v1245 = vld [vmem:[%s1244] sm:$0x3]
      %v1254 = vunpack.c.l.b16 %v1236
      %v1255 = vunpack.c.l.b16 %v1237
      %v1256 = vunpack.c.l.b16 %v1238
      %v1257 = vunpack.c.l.b16 %v1239
      %v1258 = vunpack.c.l.b16 %v1240
      %v1259 = vunpack.c.l.b16 %v1241
      %v1260 = vunpack.c.l.b16 %v1242
      %v1261 = vunpack.c.l.b16 %v1243
      %v1262 = vpack.c.b16 %v1255, %v1254
      %v1263 = vpack.c.b16 %v1257, %v1256
      %v1264 = vpack.c.b16 %v1259, %v1258
      %v1265 = vpack.c.b16 %v1261, %v1260
      %v1267 = vsel %vm407, %v1262, 0
      %v1270 = vsel %vm407, %v1263, 0
      %v1273 = vsel %vm407, %v1264, 0
      %v1276 = vsel %vm407, %v1265, 0
      %v1279 = vsel %vm420, %v1245, 0
      %1281 = vmatprep.subr.bf16.mxu0 0
      %1282 = vmatpush1.bf16.msra.mxu0 %v1279
      %1283 = vmatprep.subr.bf16.mxu0 0
      %1284 = vmatpush1.bf16.msra.mxu0 0
      %1285 = vmatprep.subr.bf16.mxu0 0
      %1286 = vmatpush1.bf16.msra.mxu0 0
      %1287 = vmatprep.subr.bf16.mxu0 0
      %1288 = vmatpush1.bf16.msra.mxu0 0
      %1289 = vmatprep.subr.bf16.mxu0 0
      %1290 = vmatpush1.bf16.msra.mxu0 0
      %1291 = vmatprep.subr.bf16.mxu0 0
      %1292 = vmatpush1.bf16.msra.mxu0 0
      %1293 = vmatprep.subr.bf16.mxu0 0
      %1294 = vmatpush1.bf16.msra.mxu0 0
      %1295 = vmatprep.subr.bf16.mxu0 0
      %1296 = vmatpush1.bf16.msra.mxu0 0
      %1297 = vmatprep.subr.bf16.mxu0 0
      %1298 = vmatpush1.bf16.msra.mxu0 0
      %1299 = vmatprep.subr.bf16.mxu0 0
      %1300 = vmatpush1.bf16.msra.mxu0 0
      %1301 = vmatprep.subr.bf16.mxu0 0
      %1302 = vmatpush1.bf16.msra.mxu0 0
      %1303 = vmatprep.subr.bf16.mxu0 0
      %1304 = vmatpush1.bf16.msra.mxu0 0
      %1305 = vmatprep.subr.bf16.mxu0 0
      %1306 = vmatpush1.bf16.msra.mxu0 0
      %1307 = vmatprep.subr.bf16.mxu0 0
      %1308 = vmatpush1.bf16.msra.mxu0 0
      %1309 = vmatprep.subr.bf16.mxu0 0
      %1310 = vmatpush1.bf16.msra.mxu0 0
      %1311 = vmatprep.subr.bf16.mxu0 0
      %1312 = vmatpush1.bf16.msra.mxu0 0
      %1313 = vmatprep.mubr.bf16.mxu0 0
      %1314 = vmatmul.mubr.bf16.gmra.mrb[0].mxu0 %v1267
      %v1315 = vpop.f32.mrb[0].mxu0
      %v1316 = vadd.f32 0.0, %v1315
      %v1317 = vpop.f32.mrb[0].mxu0
      %v1318 = vpop.f32.mrb[0].mxu0
      %v1319 = vadd.f32 0.0, %v1318
      %v1320 = vpop.f32.mrb[0].mxu0
      %1321 = vmatprep.mubr.bf16.mxu0 0
      %1322 = vmatmul.mubr.bf16.gmra.mrb[0].mxu0 %v1270
      %v1323 = vpop.f32.mrb[0].mxu0
      %v1324 = vadd.f32 0.0, %v1323
      %v1325 = vpop.f32.mrb[0].mxu0
      %v1326 = vpop.f32.mrb[0].mxu0
      %v1327 = vadd.f32 0.0, %v1326
      %v1328 = vpop.f32.mrb[0].mxu0
      %1329 = vmatprep.mubr.bf16.mxu0 0
      %1330 = vmatmul.mubr.bf16.gmra.mrb[0].mxu0 %v1273
      %v1331 = vpop.f32.mrb[0].mxu0
      %v1332 = vadd.f32 0.0, %v1331
      %v1333 = vpop.f32.mrb[0].mxu0
      %v1334 = vpop.f32.mrb[0].mxu0
      %v1335 = vadd.f32 0.0, %v1334
      %v1336 = vpop.f32.mrb[0].mxu0
      %1337 = vmatprep.mubr.bf16.mxu0 0
      %1338 = vmatmul.mubr.bf16.gmra.mrb[0].mxu0 %v1276
      %v1339 = vpop.f32.mrb[0].mxu0
      %v1340 = vadd.f32 0.0, %v1339
      %v1341 = vpop.f32.mrb[0].mxu0
      %v1342 = vpop.f32.mrb[0].mxu0
      %v1343 = vadd.f32 0.0, %v1342
      %v1344 = vpop.f32.mrb[0].mxu0
      %1345 = vdwg.mxu0
      %v1346 = vadd.f32 %v1149, %v1316
      %v1347 = vadd.f32 %v1150, %v1319
      %v1348 = vadd.f32 %v1151, %v1324
      %v1349 = vadd.f32 %v1152, %v1327
      %v1350 = vadd.f32 %v1153, %v1332
      %v1351 = vadd.f32 %v1154, %v1335
      %v1352 = vadd.f32 %v1155, %v1340
      %v1353 = vadd.f32 %v1156, %v1343
      %s1354 = scalar_lea.vmem %s7, 8
      %v1355 = vld [vmem:[%s1354] sm:$0x3]
      %v1357 = vsel %vm420, %v1355, 0
      %1359 = vmatprep.subr.bf16.mxu0 0
      %1360 = vmatpush1.bf16.msra.mxu0 %v1357
      %1361 = vmatprep.subr.bf16.mxu0 0
      %1362 = vmatpush1.bf16.msra.mxu0 0
      %1363 = vmatprep.subr.bf16.mxu0 0
      %1364 = vmatpush1.bf16.msra.mxu0 0
      %1365 = vmatprep.subr.bf16.mxu0 0
      %1366 = vmatpush1.bf16.msra.mxu0 0
      %1367 = vmatprep.subr.bf16.mxu0 0
      %1368 = vmatpush1.bf16.msra.mxu0 0
      %1369 = vmatprep.subr.bf16.mxu0 0
      %1370 = vmatpush1.bf16.msra.mxu0 0
      %1371 = vmatprep.subr.bf16.mxu0 0
      %1372 = vmatpush1.bf16.msra.mxu0 0
      %1373 = vmatprep.subr.bf16.mxu0 0
      %1374 = vmatpush1.bf16.msra.mxu0 0
      %1375 = vmatprep.subr.bf16.mxu0 0
      %1376 = vmatpush1.bf16.msra.mxu0 0
      %1377 = vmatprep.subr.bf16.mxu0 0
      %1378 = vmatpush1.bf16.msra.mxu0 0
      %1379 = vmatprep.subr.bf16.mxu0 0
      %1380 = vmatpush1.bf16.msra.mxu0 0
      %1381 = vmatprep.subr.bf16.mxu0 0
      %1382 = vmatpush1.bf16.msra.mxu0 0
      %1383 = vmatprep.subr.bf16.mxu0 0
      %1384 = vmatpush1.bf16.msra.mxu0 0
      %1385 = vmatprep.subr.bf16.mxu0 0
      %1386 = vmatpush1.bf16.msra.mxu0 0
      %1387 = vmatprep.subr.bf16.mxu0 0
      %1388 = vmatpush1.bf16.msra.mxu0 0
      %1389 = vmatprep.subr.bf16.mxu0 0
      %1390 = vmatpush1.bf16.msra.mxu0 0
      %1391 = vmatprep.mubr.bf16.mxu0 0
      %1392 = vmatmul.mubr.bf16.gmra.mrb[0].mxu0 %v1267
      %v1393 = vpop.f32.mrb[0].mxu0
      %v1394 = vadd.f32 0.0, %v1393
      %v1395 = vpop.f32.mrb[0].mxu0
      %v1396 = vpop.f32.mrb[0].mxu0
      %v1397 = vadd.f32 0.0, %v1396
      %v1398 = vpop.f32.mrb[0].mxu0
      %1399 = vmatprep.mubr.bf16.mxu0 0
      %1400 = vmatmul.mubr.bf16.gmra.mrb[0].mxu0 %v1270
      %v1401 = vpop.f32.mrb[0].mxu0
      %v1402 = vadd.f32 0.0, %v1401
      %v1403 = vpop.f32.mrb[0].mxu0
      %v1404 = vpop.f32.mrb[0].mxu0
      %v1405 = vadd.f32 0.0, %v1404
      %v1406 = vpop.f32.mrb[0].mxu0
      %1407 = vmatprep.mubr.bf16.mxu0 0
      %1408 = vmatmul.mubr.bf16.gmra.mrb[0].mxu0 %v1273
      %v1409 = vpop.f32.mrb[0].mxu0
      %v1410 = vadd.f32 0.0, %v1409
      %v1411 = vpop.f32.mrb[0].mxu0
      %v1412 = vpop.f32.mrb[0].mxu0
      %v1413 = vadd.f32 0.0, %v1412
      %v1414 = vpop.f32.mrb[0].mxu0
      %1415 = vmatprep.mubr.bf16.mxu0 0
      %1416 = vmatmul.mubr.bf16.gmra.mrb[0].mxu0 %v1276
      %v1417 = vpop.f32.mrb[0].mxu0
      %v1418 = vadd.f32 0.0, %v1417
      %v1419 = vpop.f32.mrb[0].mxu0
      %v1420 = vpop.f32.mrb[0].mxu0
      %v1421 = vadd.f32 0.0, %v1420
      %v1422 = vpop.f32.mrb[0].mxu0
      %1423 = vdwg.mxu0
      %v1424 = vadd.f32 %v1227, %v1394
      %v1425 = vadd.f32 %v1228, %v1397
      %v1426 = vadd.f32 %v1229, %v1402
      %v1427 = vadd.f32 %v1230, %v1405
      %v1428 = vadd.f32 %v1231, %v1410
      %v1429 = vadd.f32 %v1232, %v1413
      %v1430 = vadd.f32 %v1233, %v1418
      %v1431 = vadd.f32 %v1234, %v1421
      %v1432 = vld [vmem:[%s1038] sm:$0xf]
      %v1433 = vld [vmem:[%s1038 + $0x4] sm:$0x1]
      %v1434 = vld [vmem:[%s1038 + $0x8] sm:$0xf]
      %v1435 = vld [vmem:[%s1038 + $0xc] sm:$0x1]
      %v1436 = vld [vmem:[%s1038 + $0x10] sm:$0xf]
      %v1437 = vld [vmem:[%s1038 + $0x14] sm:$0x1]
      %v1438 = vld [vmem:[%s1038 + $0x18] sm:$0xf]
      %v1439 = vld [vmem:[%s1038 + $0x1c] sm:$0x1]
      %v1440 = vld [vmem:[%s1038 + $0x20] sm:$0xf]
      %v1441 = vld [vmem:[%s1038 + $0x24] sm:$0x1]
      %v1442 = vld [vmem:[%s1038 + $0x28] sm:$0xf]
      %v1443 = vld [vmem:[%s1038 + $0x2c] sm:$0x1]
      %v1444 = vld [vmem:[%s1038 + $0x30] sm:$0xf]
      %v1445 = vld [vmem:[%s1038 + $0x34] sm:$0x1]
      %v1446 = vld [vmem:[%s1038 + $0x38] sm:$0xf]
      %v1447 = vld [vmem:[%s1038 + $0x3c] sm:$0x1]
      %v1449 = vshrl.u32 %v1432, 16
      %v1451 = vrot.slane %v1449, 4
      %v1452 = vshll.u32 %v1432, 16
      %v1454 = vrot.slane %v1452, 5
      %v1455 = vor.u32 %v1451, %v1454
      %v1456 = vrot.slane %v1455, 4
      %v1458 = vshll.u32 %v1433, 16
      %v1460 = vrot.slane %v1458, 5
      %v1461 = vsel %vm745, %v1456, %v1460
      %v1463 = vshrl.u32 %v1434, 16
      %v1465 = vrot.slane %v1463, 4
      %v1466 = vshll.u32 %v1434, 16
      %v1468 = vrot.slane %v1466, 5
      %v1469 = vor.u32 %v1465, %v1468
      %v1470 = vrot.slane %v1469, 4
      %v1472 = vshll.u32 %v1435, 16
      %v1474 = vrot.slane %v1472, 5
      %v1475 = vsel %vm745, %v1470, %v1474
      %v1477 = vshrl.u32 %v1436, 16
      %v1479 = vrot.slane %v1477, 4
      %v1480 = vshll.u32 %v1436, 16
      %v1482 = vrot.slane %v1480, 5
      %v1483 = vor.u32 %v1479, %v1482
      %v1484 = vrot.slane %v1483, 4
      %v1486 = vshll.u32 %v1437, 16
      %v1488 = vrot.slane %v1486, 5
      %v1489 = vsel %vm745, %v1484, %v1488
      %v1491 = vshrl.u32 %v1438, 16
      %v1493 = vrot.slane %v1491, 4
      %v1494 = vshll.u32 %v1438, 16
      %v1496 = vrot.slane %v1494, 5
      %v1497 = vor.u32 %v1493, %v1496
      %v1498 = vrot.slane %v1497, 4
      %v1500 = vshll.u32 %v1439, 16
      %v1502 = vrot.slane %v1500, 5
      %v1503 = vsel %vm745, %v1498, %v1502
      %v1505 = vshrl.u32 %v1440, 16
      %v1507 = vrot.slane %v1505, 4
      %v1508 = vshll.u32 %v1440, 16
      %v1510 = vrot.slane %v1508, 5
      %v1511 = vor.u32 %v1507, %v1510
      %v1512 = vrot.slane %v1511, 4
      %v1514 = vshll.u32 %v1441, 16
      %v1516 = vrot.slane %v1514, 5
      %v1517 = vsel %vm745, %v1512, %v1516
      %v1519 = vshrl.u32 %v1442, 16
      %v1521 = vrot.slane %v1519, 4
      %v1522 = vshll.u32 %v1442, 16
      %v1524 = vrot.slane %v1522, 5
      %v1525 = vor.u32 %v1521, %v1524
      %v1526 = vrot.slane %v1525, 4
      %v1528 = vshll.u32 %v1443, 16
      %v1530 = vrot.slane %v1528, 5
      %v1531 = vsel %vm745, %v1526, %v1530
      %v1533 = vshrl.u32 %v1444, 16
      %v1535 = vrot.slane %v1533, 4
      %v1536 = vshll.u32 %v1444, 16
      %v1538 = vrot.slane %v1536, 5
      %v1539 = vor.u32 %v1535, %v1538
      %v1540 = vrot.slane %v1539, 4
      %v1542 = vshll.u32 %v1445, 16
      %v1544 = vrot.slane %v1542, 5
      %v1545 = vsel %vm745, %v1540, %v1544
      %v1547 = vshrl.u32 %v1446, 16
      %v1549 = vrot.slane %v1547, 4
      %v1550 = vshll.u32 %v1446, 16
      %v1552 = vrot.slane %v1550, 5
      %v1553 = vor.u32 %v1549, %v1552
      %v1554 = vrot.slane %v1553, 4
      %v1556 = vshll.u32 %v1447, 16
      %v1558 = vrot.slane %v1556, 5
      %v1559 = vsel %vm745, %v1554, %v1558
      %s1560 = scalar_lea.vmem %s1, 10
      %v1561 = vld [vmem:[%s1560] sm:$0x3]
      %v1562 = vunpack.c.l.b16 %v1461
      %v1563 = vunpack.c.l.b16 %v1475
      %v1564 = vunpack.c.l.b16 %v1489
      %v1565 = vunpack.c.l.b16 %v1503
      %v1566 = vunpack.c.l.b16 %v1517
      %v1567 = vunpack.c.l.b16 %v1531
      %v1568 = vunpack.c.l.b16 %v1545
      %v1569 = vunpack.c.l.b16 %v1559
      %v1570 = vpack.c.b16 %v1563, %v1562
      %v1571 = vpack.c.b16 %v1565, %v1564
      %v1572 = vpack.c.b16 %v1567, %v1566
      %v1573 = vpack.c.b16 %v1569, %v1568
      %v1575 = vsel %vm407, %v1570, 0
      %v1578 = vsel %vm407, %v1571, 0
      %v1581 = vsel %vm407, %v1572, 0
      %v1584 = vsel %vm407, %v1573, 0
      %v1587 = vsel %vm420, %v1561, 0
      %1589 = vmatprep.subr.bf16.mxu0 0
      %1590 = vmatpush1.bf16.msra.mxu0 %v1587
      %1591 = vmatprep.subr.bf16.mxu0 0
      %1592 = vmatpush1.bf16.msra.mxu0 0
      %1593 = vmatprep.subr.bf16.mxu0 0
      %1594 = vmatpush1.bf16.msra.mxu0 0
      %1595 = vmatprep.subr.bf16.mxu0 0
      %1596 = vmatpush1.bf16.msra.mxu0 0
      %1597 = vmatprep.subr.bf16.mxu0 0
      %1598 = vmatpush1.bf16.msra.mxu0 0
      %1599 = vmatprep.subr.bf16.mxu0 0
      %1600 = vmatpush1.bf16.msra.mxu0 0
      %1601 = vmatprep.subr.bf16.mxu0 0
      %1602 = vmatpush1.bf16.msra.mxu0 0
      %1603 = vmatprep.subr.bf16.mxu0 0
      %1604 = vmatpush1.bf16.msra.mxu0 0
      %1605 = vmatprep.subr.bf16.mxu0 0
      %1606 = vmatpush1.bf16.msra.mxu0 0
      %1607 = vmatprep.subr.bf16.mxu0 0
      %1608 = vmatpush1.bf16.msra.mxu0 0
      %1609 = vmatprep.subr.bf16.mxu0 0
      %1610 = vmatpush1.bf16.msra.mxu0 0
      %1611 = vmatprep.subr.bf16.mxu0 0
      %1612 = vmatpush1.bf16.msra.mxu0 0
      %1613 = vmatprep.subr.bf16.mxu0 0
      %1614 = vmatpush1.bf16.msra.mxu0 0
      %1615 = vmatprep.subr.bf16.mxu0 0
      %1616 = vmatpush1.bf16.msra.mxu0 0
      %1617 = vmatprep.subr.bf16.mxu0 0
      %1618 = vmatpush1.bf16.msra.mxu0 0
      %1619 = vmatprep.subr.bf16.mxu0 0
      %1620 = vmatpush1.bf16.msra.mxu0 0
      %1621 = vmatprep.mubr.bf16.mxu0 0
      %1622 = vmatmul.mubr.bf16.gmra.mrb[0].mxu0 %v1575
      %v1623 = vpop.f32.mrb[0].mxu0
      %v1624 = vadd.f32 0.0, %v1623
      %v1625 = vpop.f32.mrb[0].mxu0
      %v1626 = vpop.f32.mrb[0].mxu0
      %v1627 = vadd.f32 0.0, %v1626
      %v1628 = vpop.f32.mrb[0].mxu0
      %1629 = vmatprep.mubr.bf16.mxu0 0
      %1630 = vmatmul.mubr.bf16.gmra.mrb[0].mxu0 %v1578
      %v1631 = vpop.f32.mrb[0].mxu0
      %v1632 = vadd.f32 0.0, %v1631
      %v1633 = vpop.f32.mrb[0].mxu0
      %v1634 = vpop.f32.mrb[0].mxu0
      %v1635 = vadd.f32 0.0, %v1634
      %v1636 = vpop.f32.mrb[0].mxu0
      %1637 = vmatprep.mubr.bf16.mxu0 0
      %1638 = vmatmul.mubr.bf16.gmra.mrb[0].mxu0 %v1581
      %v1639 = vpop.f32.mrb[0].mxu0
      %v1640 = vadd.f32 0.0, %v1639
      %v1641 = vpop.f32.mrb[0].mxu0
      %v1642 = vpop.f32.mrb[0].mxu0
      %v1643 = vadd.f32 0.0, %v1642
      %v1644 = vpop.f32.mrb[0].mxu0
      %1645 = vmatprep.mubr.bf16.mxu0 0
      %1646 = vmatmul.mubr.bf16.gmra.mrb[0].mxu0 %v1584
      %v1647 = vpop.f32.mrb[0].mxu0
      %v1648 = vadd.f32 0.0, %v1647
      %v1649 = vpop.f32.mrb[0].mxu0
      %v1650 = vpop.f32.mrb[0].mxu0
      %v1651 = vadd.f32 0.0, %v1650
      %v1652 = vpop.f32.mrb[0].mxu0
      %1653 = vdwg.mxu0
      %v1654 = vadd.f32 %v1346, %v1624
      %v1655 = vadd.f32 %v1347, %v1627
      %v1656 = vadd.f32 %v1348, %v1632
      %v1657 = vadd.f32 %v1349, %v1635
      %v1658 = vadd.f32 %v1350, %v1640
      %v1659 = vadd.f32 %v1351, %v1643
      %v1660 = vadd.f32 %v1352, %v1648
      %v1661 = vadd.f32 %v1353, %v1651
      %s1662 = scalar_lea.vmem %s7, 10
      %v1663 = vld [vmem:[%s1662] sm:$0x3]
      %v1665 = vsel %vm420, %v1663, 0
      %1667 = vmatprep.subr.bf16.mxu0 0
      %1668 = vmatpush1.bf16.msra.mxu0 %v1665
      %1669 = vmatprep.subr.bf16.mxu0 0
      %1670 = vmatpush1.bf16.msra.mxu0 0
      %1671 = vmatprep.subr.bf16.mxu0 0
      %1672 = vmatpush1.bf16.msra.mxu0 0
      %1673 = vmatprep.subr.bf16.mxu0 0
      %1674 = vmatpush1.bf16.msra.mxu0 0
      %1675 = vmatprep.subr.bf16.mxu0 0
      %1676 = vmatpush1.bf16.msra.mxu0 0
      %1677 = vmatprep.subr.bf16.mxu0 0
      %1678 = vmatpush1.bf16.msra.mxu0 0
      %1679 = vmatprep.subr.bf16.mxu0 0
      %1680 = vmatpush1.bf16.msra.mxu0 0
      %1681 = vmatprep.subr.bf16.mxu0 0
      %1682 = vmatpush1.bf16.msra.mxu0 0
      %1683 = vmatprep.subr.bf16.mxu0 0
      %1684 = vmatpush1.bf16.msra.mxu0 0
      %1685 = vmatprep.subr.bf16.mxu0 0
      %1686 = vmatpush1.bf16.msra.mxu0 0
      %1687 = vmatprep.subr.bf16.mxu0 0
      %1688 = vmatpush1.bf16.msra.mxu0 0
      %1689 = vmatprep.subr.bf16.mxu0 0
      %1690 = vmatpush1.bf16.msra.mxu0 0
      %1691 = vmatprep.subr.bf16.mxu0 0
      %1692 = vmatpush1.bf16.msra.mxu0 0
      %1693 = vmatprep.subr.bf16.mxu0 0
      %1694 = vmatpush1.bf16.msra.mxu0 0
      %1695 = vmatprep.subr.bf16.mxu0 0
      %1696 = vmatpush1.bf16.msra.mxu0 0
      %1697 = vmatprep.subr.bf16.mxu0 0
      %1698 = vmatpush1.bf16.msra.mxu0 0
      %1699 = vmatprep.mubr.bf16.mxu0 0
      %1700 = vmatmul.mubr.bf16.gmra.mrb[0].mxu0 %v1575
      %v1701 = vpop.f32.mrb[0].mxu0
      %v1702 = vadd.f32 0.0, %v1701
      %v1703 = vpop.f32.mrb[0].mxu0
      %v1704 = vpop.f32.mrb[0].mxu0
      %v1705 = vadd.f32 0.0, %v1704
      %v1706 = vpop.f32.mrb[0].mxu0
      %1707 = vmatprep.mubr.bf16.mxu0 0
      %1708 = vmatmul.mubr.bf16.gmra.mrb[0].mxu0 %v1578
      %v1709 = vpop.f32.mrb[0].mxu0
      %v1710 = vadd.f32 0.0, %v1709
      %v1711 = vpop.f32.mrb[0].mxu0
      %v1712 = vpop.f32.mrb[0].mxu0
      %v1713 = vadd.f32 0.0, %v1712
      %v1714 = vpop.f32.mrb[0].mxu0
      %1715 = vmatprep.mubr.bf16.mxu0 0
      %1716 = vmatmul.mubr.bf16.gmra.mrb[0].mxu0 %v1581
      %v1717 = vpop.f32.mrb[0].mxu0
      %v1718 = vadd.f32 0.0, %v1717
      %v1719 = vpop.f32.mrb[0].mxu0
      %v1720 = vpop.f32.mrb[0].mxu0
      %v1721 = vadd.f32 0.0, %v1720
      %v1722 = vpop.f32.mrb[0].mxu0
      %1723 = vmatprep.mubr.bf16.mxu0 0
      %1724 = vmatmul.mubr.bf16.gmra.mrb[0].mxu0 %v1584
      %v1725 = vpop.f32.mrb[0].mxu0
      %v1726 = vadd.f32 0.0, %v1725
      %v1727 = vpop.f32.mrb[0].mxu0
      %v1728 = vpop.f32.mrb[0].mxu0
      %v1729 = vadd.f32 0.0, %v1728
      %v1730 = vpop.f32.mrb[0].mxu0
      %1731 = vdwg.mxu0
      %v1732 = vadd.f32 %v1424, %v1702
      %v1733 = vadd.f32 %v1425, %v1705
      %v1734 = vadd.f32 %v1426, %v1710
      %v1735 = vadd.f32 %v1427, %v1713
      %v1736 = vadd.f32 %v1428, %v1718
      %v1737 = vadd.f32 %v1429, %v1721
      %v1738 = vadd.f32 %v1430, %v1726
      %v1739 = vadd.f32 %v1431, %v1729
      %s1740 = scalar_lea.vmem %s358, 8
      %v1741 = vld [vmem:[%s1740] sm:$0xf]
      %v1742 = vld [vmem:[%s1740 + $0x8] sm:$0xf]
      %v1743 = vld [vmem:[%s1740 + $0x10] sm:$0xf]
      %v1744 = vld [vmem:[%s1740 + $0x18] sm:$0xf]
      %v1745 = vld [vmem:[%s1740 + $0x20] sm:$0xf]
      %v1746 = vld [vmem:[%s1740 + $0x28] sm:$0xf]
      %v1747 = vld [vmem:[%s1740 + $0x30] sm:$0xf]
      %v1748 = vld [vmem:[%s1740 + $0x38] sm:$0xf]
      %s1749 = scalar_lea.vmem %s1, 12
      %v1750 = vld [vmem:[%s1749] sm:$0x3]
      %v1759 = vunpack.c.l.b16 %v1741
      %v1760 = vunpack.c.l.b16 %v1742
      %v1761 = vunpack.c.l.b16 %v1743
      %v1762 = vunpack.c.l.b16 %v1744
      %v1763 = vunpack.c.l.b16 %v1745
      %v1764 = vunpack.c.l.b16 %v1746
      %v1765 = vunpack.c.l.b16 %v1747
      %v1766 = vunpack.c.l.b16 %v1748
      %v1767 = vpack.c.b16 %v1760, %v1759
      %v1768 = vpack.c.b16 %v1762, %v1761
      %v1769 = vpack.c.b16 %v1764, %v1763
      %v1770 = vpack.c.b16 %v1766, %v1765
      %v1772 = vsel %vm407, %v1767, 0
      %v1775 = vsel %vm407, %v1768, 0
      %v1778 = vsel %vm407, %v1769, 0
      %v1781 = vsel %vm407, %v1770, 0
      %v1784 = vsel %vm420, %v1750, 0
      %1786 = vmatprep.subr.bf16.mxu0 0
      %1787 = vmatpush1.bf16.msra.mxu0 %v1784
      %1788 = vmatprep.subr.bf16.mxu0 0
      %1789 = vmatpush1.bf16.msra.mxu0 0
      %1790 = vmatprep.subr.bf16.mxu0 0
      %1791 = vmatpush1.bf16.msra.mxu0 0
      %1792 = vmatprep.subr.bf16.mxu0 0
      %1793 = vmatpush1.bf16.msra.mxu0 0
      %1794 = vmatprep.subr.bf16.mxu0 0
      %1795 = vmatpush1.bf16.msra.mxu0 0
      %1796 = vmatprep.subr.bf16.mxu0 0
      %1797 = vmatpush1.bf16.msra.mxu0 0
      %1798 = vmatprep.subr.bf16.mxu0 0
      %1799 = vmatpush1.bf16.msra.mxu0 0
      %1800 = vmatprep.subr.bf16.mxu0 0
      %1801 = vmatpush1.bf16.msra.mxu0 0
      %1802 = vmatprep.subr.bf16.mxu0 0
      %1803 = vmatpush1.bf16.msra.mxu0 0
      %1804 = vmatprep.subr.bf16.mxu0 0
      %1805 = vmatpush1.bf16.msra.mxu0 0
      %1806 = vmatprep.subr.bf16.mxu0 0
      %1807 = vmatpush1.bf16.msra.mxu0 0
      %1808 = vmatprep.subr.bf16.mxu0 0
      %1809 = vmatpush1.bf16.msra.mxu0 0
      %1810 = vmatprep.subr.bf16.mxu0 0
      %1811 = vmatpush1.bf16.msra.mxu0 0
      %1812 = vmatprep.subr.bf16.mxu0 0
      %1813 = vmatpush1.bf16.msra.mxu0 0
      %1814 = vmatprep.subr.bf16.mxu0 0
      %1815 = vmatpush1.bf16.msra.mxu0 0
      %1816 = vmatprep.subr.bf16.mxu0 0
      %1817 = vmatpush1.bf16.msra.mxu0 0
      %1818 = vmatprep.mubr.bf16.mxu0 0
      %1819 = vmatmul.mubr.bf16.gmra.mrb[0].mxu0 %v1772
      %v1820 = vpop.f32.mrb[0].mxu0
      %v1821 = vadd.f32 0.0, %v1820
      %v1822 = vpop.f32.mrb[0].mxu0
      %v1823 = vpop.f32.mrb[0].mxu0
      %v1824 = vadd.f32 0.0, %v1823
      %v1825 = vpop.f32.mrb[0].mxu0
      %1826 = vmatprep.mubr.bf16.mxu0 0
      %1827 = vmatmul.mubr.bf16.gmra.mrb[0].mxu0 %v1775
      %v1828 = vpop.f32.mrb[0].mxu0
      %v1829 = vadd.f32 0.0, %v1828
      %v1830 = vpop.f32.mrb[0].mxu0
      %v1831 = vpop.f32.mrb[0].mxu0
      %v1832 = vadd.f32 0.0, %v1831
      %v1833 = vpop.f32.mrb[0].mxu0
      %1834 = vmatprep.mubr.bf16.mxu0 0
      %1835 = vmatmul.mubr.bf16.gmra.mrb[0].mxu0 %v1778
      %v1836 = vpop.f32.mrb[0].mxu0
      %v1837 = vadd.f32 0.0, %v1836
      %v1838 = vpop.f32.mrb[0].mxu0
      %v1839 = vpop.f32.mrb[0].mxu0
      %v1840 = vadd.f32 0.0, %v1839
      %v1841 = vpop.f32.mrb[0].mxu0
      %1842 = vmatprep.mubr.bf16.mxu0 0
      %1843 = vmatmul.mubr.bf16.gmra.mrb[0].mxu0 %v1781
      %v1844 = vpop.f32.mrb[0].mxu0
      %v1845 = vadd.f32 0.0, %v1844
      %v1846 = vpop.f32.mrb[0].mxu0
      %v1847 = vpop.f32.mrb[0].mxu0
      %v1848 = vadd.f32 0.0, %v1847
      %v1849 = vpop.f32.mrb[0].mxu0
      %1850 = vdwg.mxu0
      %v1851 = vadd.f32 %v1654, %v1821
      %v1852 = vadd.f32 %v1655, %v1824
      %v1853 = vadd.f32 %v1656, %v1829
      %v1854 = vadd.f32 %v1657, %v1832
      %v1855 = vadd.f32 %v1658, %v1837
      %v1856 = vadd.f32 %v1659, %v1840
      %v1857 = vadd.f32 %v1660, %v1845
      %v1858 = vadd.f32 %v1661, %v1848
      %s1859 = scalar_lea.vmem %s7, 12
      %v1860 = vld [vmem:[%s1859] sm:$0x3]
      %v1862 = vsel %vm420, %v1860, 0
      %1864 = vmatprep.subr.bf16.mxu0 0
      %1865 = vmatpush1.bf16.msra.mxu0 %v1862
      %1866 = vmatprep.subr.bf16.mxu0 0
      %1867 = vmatpush1.bf16.msra.mxu0 0
      %1868 = vmatprep.subr.bf16.mxu0 0
      %1869 = vmatpush1.bf16.msra.mxu0 0
      %1870 = vmatprep.subr.bf16.mxu0 0
      %1871 = vmatpush1.bf16.msra.mxu0 0
      %1872 = vmatprep.subr.bf16.mxu0 0
      %1873 = vmatpush1.bf16.msra.mxu0 0
      %1874 = vmatprep.subr.bf16.mxu0 0
      %1875 = vmatpush1.bf16.msra.mxu0 0
      %1876 = vmatprep.subr.bf16.mxu0 0
      %1877 = vmatpush1.bf16.msra.mxu0 0
      %1878 = vmatprep.subr.bf16.mxu0 0
      %1879 = vmatpush1.bf16.msra.mxu0 0
      %1880 = vmatprep.subr.bf16.mxu0 0
      %1881 = vmatpush1.bf16.msra.mxu0 0
      %1882 = vmatprep.subr.bf16.mxu0 0
      %1883 = vmatpush1.bf16.msra.mxu0 0
      %1884 = vmatprep.subr.bf16.mxu0 0
      %1885 = vmatpush1.bf16.msra.mxu0 0
      %1886 = vmatprep.subr.bf16.mxu0 0
      %1887 = vmatpush1.bf16.msra.mxu0 0
      %1888 = vmatprep.subr.bf16.mxu0 0
      %1889 = vmatpush1.bf16.msra.mxu0 0
      %1890 = vmatprep.subr.bf16.mxu0 0
      %1891 = vmatpush1.bf16.msra.mxu0 0
      %1892 = vmatprep.subr.bf16.mxu0 0
      %1893 = vmatpush1.bf16.msra.mxu0 0
      %1894 = vmatprep.subr.bf16.mxu0 0
      %1895 = vmatpush1.bf16.msra.mxu0 0
      %1896 = vmatprep.mubr.bf16.mxu0 0
      %1897 = vmatmul.mubr.bf16.gmra.mrb[0].mxu0 %v1772
      %v1898 = vpop.f32.mrb[0].mxu0
      %v1899 = vadd.f32 0.0, %v1898
      %v1900 = vpop.f32.mrb[0].mxu0
      %v1901 = vpop.f32.mrb[0].mxu0
      %v1902 = vadd.f32 0.0, %v1901
      %v1903 = vpop.f32.mrb[0].mxu0
      %1904 = vmatprep.mubr.bf16.mxu0 0
      %1905 = vmatmul.mubr.bf16.gmra.mrb[0].mxu0 %v1775
      %v1906 = vpop.f32.mrb[0].mxu0
      %v1907 = vadd.f32 0.0, %v1906
      %v1908 = vpop.f32.mrb[0].mxu0
      %v1909 = vpop.f32.mrb[0].mxu0
      %v1910 = vadd.f32 0.0, %v1909
      %v1911 = vpop.f32.mrb[0].mxu0
      %1912 = vmatprep.mubr.bf16.mxu0 0
      %1913 = vmatmul.mubr.bf16.gmra.mrb[0].mxu0 %v1778
      %v1914 = vpop.f32.mrb[0].mxu0
      %v1915 = vadd.f32 0.0, %v1914
      %v1916 = vpop.f32.mrb[0].mxu0
      %v1917 = vpop.f32.mrb[0].mxu0
      %v1918 = vadd.f32 0.0, %v1917
      %v1919 = vpop.f32.mrb[0].mxu0
      %1920 = vmatprep.mubr.bf16.mxu0 0
      %1921 = vmatmul.mubr.bf16.gmra.mrb[0].mxu0 %v1781
      %v1922 = vpop.f32.mrb[0].mxu0
      %v1923 = vadd.f32 0.0, %v1922
      %v1924 = vpop.f32.mrb[0].mxu0
      %v1925 = vpop.f32.mrb[0].mxu0
      %v1926 = vadd.f32 0.0, %v1925
      %v1927 = vpop.f32.mrb[0].mxu0
      %1928 = vdwg.mxu0
      %v1929 = vadd.f32 %v1732, %v1899
      %v1930 = vadd.f32 %v1733, %v1902
      %v1931 = vadd.f32 %v1734, %v1907
      %v1932 = vadd.f32 %v1735, %v1910
      %v1933 = vadd.f32 %v1736, %v1915
      %v1934 = vadd.f32 %v1737, %v1918
      %v1935 = vadd.f32 %v1738, %v1923
      %v1936 = vadd.f32 %v1739, %v1926
      %s1937 = scalar_lea.vmem %s358, 80
      %v1938 = vld [vmem:[%s1937] sm:$0xf]
      %v1939 = vld [vmem:[%s1937 + $0x8] sm:$0xf]
      %v1940 = vld [vmem:[%s1937 + $0x10] sm:$0xf]
      %v1941 = vld [vmem:[%s1937 + $0x18] sm:$0xf]
      %v1942 = vld [vmem:[%s1937 + $0x20] sm:$0xf]
      %v1943 = vld [vmem:[%s1937 + $0x28] sm:$0xf]
      %v1944 = vld [vmem:[%s1937 + $0x30] sm:$0xf]
      %v1945 = vld [vmem:[%s1937 + $0x38] sm:$0xf]
      %s1946 = scalar_lea.vmem %s1, 14
      %v1947 = vld [vmem:[%s1946] sm:$0x3]
      %v1956 = vunpack.c.l.b16 %v1938
      %v1957 = vunpack.c.l.b16 %v1939
      %v1958 = vunpack.c.l.b16 %v1940
      %v1959 = vunpack.c.l.b16 %v1941
      %v1960 = vunpack.c.l.b16 %v1942
      %v1961 = vunpack.c.l.b16 %v1943
      %v1962 = vunpack.c.l.b16 %v1944
      %v1963 = vunpack.c.l.b16 %v1945
      %v1964 = vpack.c.b16 %v1957, %v1956
      %v1965 = vpack.c.b16 %v1959, %v1958
      %v1966 = vpack.c.b16 %v1961, %v1960
      %v1967 = vpack.c.b16 %v1963, %v1962
      %v1969 = vsel %vm407, %v1964, 0
      %v1972 = vsel %vm407, %v1965, 0
      %v1975 = vsel %vm407, %v1966, 0
      %v1978 = vsel %vm407, %v1967, 0
      %v1981 = vsel %vm420, %v1947, 0
      %1983 = vmatprep.subr.bf16.mxu0 0
      %1984 = vmatpush1.bf16.msra.mxu0 %v1981
      %1985 = vmatprep.subr.bf16.mxu0 0
      %1986 = vmatpush1.bf16.msra.mxu0 0
      %1987 = vmatprep.subr.bf16.mxu0 0
      %1988 = vmatpush1.bf16.msra.mxu0 0
      %1989 = vmatprep.subr.bf16.mxu0 0
      %1990 = vmatpush1.bf16.msra.mxu0 0
      %1991 = vmatprep.subr.bf16.mxu0 0
      %1992 = vmatpush1.bf16.msra.mxu0 0
      %1993 = vmatprep.subr.bf16.mxu0 0
      %1994 = vmatpush1.bf16.msra.mxu0 0
      %1995 = vmatprep.subr.bf16.mxu0 0
      %1996 = vmatpush1.bf16.msra.mxu0 0
      %1997 = vmatprep.subr.bf16.mxu0 0
      %1998 = vmatpush1.bf16.msra.mxu0 0
      %1999 = vmatprep.subr.bf16.mxu0 0
      %2000 = vmatpush1.bf16.msra.mxu0 0
      %2001 = vmatprep.subr.bf16.mxu0 0
      %2002 = vmatpush1.bf16.msra.mxu0 0
      %2003 = vmatprep.subr.bf16.mxu0 0
      %2004 = vmatpush1.bf16.msra.mxu0 0
      %2005 = vmatprep.subr.bf16.mxu0 0
      %2006 = vmatpush1.bf16.msra.mxu0 0
      %2007 = vmatprep.subr.bf16.mxu0 0
      %2008 = vmatpush1.bf16.msra.mxu0 0
      %2009 = vmatprep.subr.bf16.mxu0 0
      %2010 = vmatpush1.bf16.msra.mxu0 0
      %2011 = vmatprep.subr.bf16.mxu0 0
      %2012 = vmatpush1.bf16.msra.mxu0 0
      %2013 = vmatprep.subr.bf16.mxu0 0
      %2014 = vmatpush1.bf16.msra.mxu0 0
      %2015 = vmatprep.mubr.bf16.mxu0 0
      %2016 = vmatmul.mubr.bf16.gmra.mrb[0].mxu0 %v1969
      %v2017 = vpop.f32.mrb[0].mxu0
      %v2018 = vadd.f32 0.0, %v2017
      %v2019 = vpop.f32.mrb[0].mxu0
      %v2020 = vpop.f32.mrb[0].mxu0
      %v2021 = vadd.f32 0.0, %v2020
      %v2022 = vpop.f32.mrb[0].mxu0
      %2023 = vmatprep.mubr.bf16.mxu0 0
      %2024 = vmatmul.mubr.bf16.gmra.mrb[0].mxu0 %v1972
      %v2025 = vpop.f32.mrb[0].mxu0
      %v2026 = vadd.f32 0.0, %v2025
      %v2027 = vpop.f32.mrb[0].mxu0
      %v2028 = vpop.f32.mrb[0].mxu0
      %v2029 = vadd.f32 0.0, %v2028
      %v2030 = vpop.f32.mrb[0].mxu0
      %2031 = vmatprep.mubr.bf16.mxu0 0
      %2032 = vmatmul.mubr.bf16.gmra.mrb[0].mxu0 %v1975
      %v2033 = vpop.f32.mrb[0].mxu0
      %v2034 = vadd.f32 0.0, %v2033
      %v2035 = vpop.f32.mrb[0].mxu0
      %v2036 = vpop.f32.mrb[0].mxu0
      %v2037 = vadd.f32 0.0, %v2036
      %v2038 = vpop.f32.mrb[0].mxu0
      %2039 = vmatprep.mubr.bf16.mxu0 0
      %2040 = vmatmul.mubr.bf16.gmra.mrb[0].mxu0 %v1978
      %v2041 = vpop.f32.mrb[0].mxu0
      %v2042 = vadd.f32 0.0, %v2041
      %v2043 = vpop.f32.mrb[0].mxu0
      %v2044 = vpop.f32.mrb[0].mxu0
      %v2045 = vadd.f32 0.0, %v2044
      %v2046 = vpop.f32.mrb[0].mxu0
      %2047 = vdwg.mxu0
      %v2048 = vadd.f32 %v1851, %v2018
      %v2049 = vadd.f32 %v1852, %v2021
      %v2050 = vadd.f32 %v1853, %v2026
      %v2051 = vadd.f32 %v1854, %v2029
      %v2052 = vadd.f32 %v1855, %v2034
      %v2053 = vadd.f32 %v1856, %v2037
      %v2054 = vadd.f32 %v1857, %v2042
      %v2055 = vadd.f32 %v1858, %v2045
      %s2056 = scalar_lea.vmem %s7, 14
      %v2057 = vld [vmem:[%s2056] sm:$0x3]
      %v2059 = vsel %vm420, %v2057, 0
      %2061 = vmatprep.subr.bf16.mxu0 0
      %2062 = vmatpush1.bf16.msra.mxu0 %v2059
      %2063 = vmatprep.subr.bf16.mxu0 0
      %2064 = vmatpush1.bf16.msra.mxu0 0
      %2065 = vmatprep.subr.bf16.mxu0 0
      %2066 = vmatpush1.bf16.msra.mxu0 0
      %2067 = vmatprep.subr.bf16.mxu0 0
      %2068 = vmatpush1.bf16.msra.mxu0 0
      %2069 = vmatprep.subr.bf16.mxu0 0
      %2070 = vmatpush1.bf16.msra.mxu0 0
      %2071 = vmatprep.subr.bf16.mxu0 0
      %2072 = vmatpush1.bf16.msra.mxu0 0
      %2073 = vmatprep.subr.bf16.mxu0 0
      %2074 = vmatpush1.bf16.msra.mxu0 0
      %2075 = vmatprep.subr.bf16.mxu0 0
      %2076 = vmatpush1.bf16.msra.mxu0 0
      %2077 = vmatprep.subr.bf16.mxu0 0
      %2078 = vmatpush1.bf16.msra.mxu0 0
      %2079 = vmatprep.subr.bf16.mxu0 0
      %2080 = vmatpush1.bf16.msra.mxu0 0
      %2081 = vmatprep.subr.bf16.mxu0 0
      %2082 = vmatpush1.bf16.msra.mxu0 0
      %2083 = vmatprep.subr.bf16.mxu0 0
      %2084 = vmatpush1.bf16.msra.mxu0 0
      %2085 = vmatprep.subr.bf16.mxu0 0
      %2086 = vmatpush1.bf16.msra.mxu0 0
      %2087 = vmatprep.subr.bf16.mxu0 0
      %2088 = vmatpush1.bf16.msra.mxu0 0
      %2089 = vmatprep.subr.bf16.mxu0 0
      %2090 = vmatpush1.bf16.msra.mxu0 0
      %2091 = vmatprep.subr.bf16.mxu0 0
      %2092 = vmatpush1.bf16.msra.mxu0 0
      %2093 = vmatprep.mubr.bf16.mxu0 0
      %2094 = vmatmul.mubr.bf16.gmra.mrb[0].mxu0 %v1969
      %v2095 = vpop.f32.mrb[0].mxu0
      %v2096 = vadd.f32 0.0, %v2095
      %v2097 = vpop.f32.mrb[0].mxu0
      %v2098 = vpop.f32.mrb[0].mxu0
      %v2099 = vadd.f32 0.0, %v2098
      %v2100 = vpop.f32.mrb[0].mxu0
      %2101 = vmatprep.mubr.bf16.mxu0 0
      %2102 = vmatmul.mubr.bf16.gmra.mrb[0].mxu0 %v1972
      %v2103 = vpop.f32.mrb[0].mxu0
      %v2104 = vadd.f32 0.0, %v2103
      %v2105 = vpop.f32.mrb[0].mxu0
      %v2106 = vpop.f32.mrb[0].mxu0
      %v2107 = vadd.f32 0.0, %v2106
      %v2108 = vpop.f32.mrb[0].mxu0
      %2109 = vmatprep.mubr.bf16.mxu0 0
      %2110 = vmatmul.mubr.bf16.gmra.mrb[0].mxu0 %v1975
      %v2111 = vpop.f32.mrb[0].mxu0
      %v2112 = vadd.f32 0.0, %v2111
      %v2113 = vpop.f32.mrb[0].mxu0
      %v2114 = vpop.f32.mrb[0].mxu0
      %v2115 = vadd.f32 0.0, %v2114
      %v2116 = vpop.f32.mrb[0].mxu0
      %2117 = vmatprep.mubr.bf16.mxu0 0
      %2118 = vmatmul.mubr.bf16.gmra.mrb[0].mxu0 %v1978
      %v2119 = vpop.f32.mrb[0].mxu0
      %v2120 = vadd.f32 0.0, %v2119
      %v2121 = vpop.f32.mrb[0].mxu0
      %v2122 = vpop.f32.mrb[0].mxu0
      %v2123 = vadd.f32 0.0, %v2122
      %v2124 = vpop.f32.mrb[0].mxu0
      %2125 = vdwg.mxu0
      %v2126 = vadd.f32 %v1929, %v2096
      %v2127 = vadd.f32 %v1930, %v2099
      %v2128 = vadd.f32 %v1931, %v2104
      %v2129 = vadd.f32 %v1932, %v2107
      %v2130 = vadd.f32 %v1933, %v2112
      %v2131 = vadd.f32 %v1934, %v2115
      %v2132 = vadd.f32 %v1935, %v2120
      %v2133 = vadd.f32 %v1936, %v2123
      %v2134 = vld [vmem:[%s1740] sm:$0xf]
      %v2135 = vld [vmem:[%s1740 + $0x4] sm:$0x1]
      %v2136 = vld [vmem:[%s1740 + $0x8] sm:$0xf]
      %v2137 = vld [vmem:[%s1740 + $0xc] sm:$0x1]
      %v2138 = vld [vmem:[%s1740 + $0x10] sm:$0xf]
      %v2139 = vld [vmem:[%s1740 + $0x14] sm:$0x1]
      %v2140 = vld [vmem:[%s1740 + $0x18] sm:$0xf]
      %v2141 = vld [vmem:[%s1740 + $0x1c] sm:$0x1]
      %v2142 = vld [vmem:[%s1740 + $0x20] sm:$0xf]
      %v2143 = vld [vmem:[%s1740 + $0x24] sm:$0x1]
      %v2144 = vld [vmem:[%s1740 + $0x28] sm:$0xf]
      %v2145 = vld [vmem:[%s1740 + $0x2c] sm:$0x1]
      %v2146 = vld [vmem:[%s1740 + $0x30] sm:$0xf]
      %v2147 = vld [vmem:[%s1740 + $0x34] sm:$0x1]
      %v2148 = vld [vmem:[%s1740 + $0x38] sm:$0xf]
      %v2149 = vld [vmem:[%s1740 + $0x3c] sm:$0x1]
      %v2151 = vshrl.u32 %v2134, 16
      %v2153 = vrot.slane %v2151, 4
      %v2154 = vshll.u32 %v2134, 16
      %v2156 = vrot.slane %v2154, 5
      %v2157 = vor.u32 %v2153, %v2156
      %v2158 = vrot.slane %v2157, 4
      %v2160 = vshll.u32 %v2135, 16
      %v2162 = vrot.slane %v2160, 5
      %v2163 = vsel %vm745, %v2158, %v2162
      %v2165 = vshrl.u32 %v2136, 16
      %v2167 = vrot.slane %v2165, 4
      %v2168 = vshll.u32 %v2136, 16
      %v2170 = vrot.slane %v2168, 5
      %v2171 = vor.u32 %v2167, %v2170
      %v2172 = vrot.slane %v2171, 4
      %v2174 = vshll.u32 %v2137, 16
      %v2176 = vrot.slane %v2174, 5
      %v2177 = vsel %vm745, %v2172, %v2176
      %v2179 = vshrl.u32 %v2138, 16
      %v2181 = vrot.slane %v2179, 4
      %v2182 = vshll.u32 %v2138, 16
      %v2184 = vrot.slane %v2182, 5
      %v2185 = vor.u32 %v2181, %v2184
      %v2186 = vrot.slane %v2185, 4
      %v2188 = vshll.u32 %v2139, 16
      %v2190 = vrot.slane %v2188, 5
      %v2191 = vsel %vm745, %v2186, %v2190
      %v2193 = vshrl.u32 %v2140, 16
      %v2195 = vrot.slane %v2193, 4
      %v2196 = vshll.u32 %v2140, 16
      %v2198 = vrot.slane %v2196, 5
      %v2199 = vor.u32 %v2195, %v2198
      %v2200 = vrot.slane %v2199, 4
      %v2202 = vshll.u32 %v2141, 16
      %v2204 = vrot.slane %v2202, 5
      %v2205 = vsel %vm745, %v2200, %v2204
      %v2207 = vshrl.u32 %v2142, 16
      %v2209 = vrot.slane %v2207, 4
      %v2210 = vshll.u32 %v2142, 16
      %v2212 = vrot.slane %v2210, 5
      %v2213 = vor.u32 %v2209, %v2212
      %v2214 = vrot.slane %v2213, 4
      %v2216 = vshll.u32 %v2143, 16
      %v2218 = vrot.slane %v2216, 5
      %v2219 = vsel %vm745, %v2214, %v2218
      %v2221 = vshrl.u32 %v2144, 16
      %v2223 = vrot.slane %v2221, 4
      %v2224 = vshll.u32 %v2144, 16
      %v2226 = vrot.slane %v2224, 5
      %v2227 = vor.u32 %v2223, %v2226
      %v2228 = vrot.slane %v2227, 4
      %v2230 = vshll.u32 %v2145, 16
      %v2232 = vrot.slane %v2230, 5
      %v2233 = vsel %vm745, %v2228, %v2232
      %v2235 = vshrl.u32 %v2146, 16
      %v2237 = vrot.slane %v2235, 4
      %v2238 = vshll.u32 %v2146, 16
      %v2240 = vrot.slane %v2238, 5
      %v2241 = vor.u32 %v2237, %v2240
      %v2242 = vrot.slane %v2241, 4
      %v2244 = vshll.u32 %v2147, 16
      %v2246 = vrot.slane %v2244, 5
      %v2247 = vsel %vm745, %v2242, %v2246
      %v2249 = vshrl.u32 %v2148, 16
      %v2251 = vrot.slane %v2249, 4
      %v2252 = vshll.u32 %v2148, 16
      %v2254 = vrot.slane %v2252, 5
      %v2255 = vor.u32 %v2251, %v2254
      %v2256 = vrot.slane %v2255, 4
      %v2258 = vshll.u32 %v2149, 16
      %v2260 = vrot.slane %v2258, 5
      %v2261 = vsel %vm745, %v2256, %v2260
      %s2262 = scalar_lea.vmem %s1, 16
      %v2263 = vld [vmem:[%s2262] sm:$0x3]
      %v2264 = vunpack.c.l.b16 %v2163
      %v2265 = vunpack.c.l.b16 %v2177
      %v2266 = vunpack.c.l.b16 %v2191
      %v2267 = vunpack.c.l.b16 %v2205
      %v2268 = vunpack.c.l.b16 %v2219
      %v2269 = vunpack.c.l.b16 %v2233
      %v2270 = vunpack.c.l.b16 %v2247
      %v2271 = vunpack.c.l.b16 %v2261
      %v2272 = vpack.c.b16 %v2265, %v2264
      %v2273 = vpack.c.b16 %v2267, %v2266
      %v2274 = vpack.c.b16 %v2269, %v2268
      %v2275 = vpack.c.b16 %v2271, %v2270
      %v2277 = vsel %vm407, %v2272, 0
      %v2280 = vsel %vm407, %v2273, 0
      %v2283 = vsel %vm407, %v2274, 0
      %v2286 = vsel %vm407, %v2275, 0
      %v2289 = vsel %vm420, %v2263, 0
      %2291 = vmatprep.subr.bf16.mxu0 0
      %2292 = vmatpush1.bf16.msra.mxu0 %v2289
      %2293 = vmatprep.subr.bf16.mxu0 0
      %2294 = vmatpush1.bf16.msra.mxu0 0
      %2295 = vmatprep.subr.bf16.mxu0 0
      %2296 = vmatpush1.bf16.msra.mxu0 0
      %2297 = vmatprep.subr.bf16.mxu0 0
      %2298 = vmatpush1.bf16.msra.mxu0 0
      %2299 = vmatprep.subr.bf16.mxu0 0
      %2300 = vmatpush1.bf16.msra.mxu0 0
      %2301 = vmatprep.subr.bf16.mxu0 0
      %2302 = vmatpush1.bf16.msra.mxu0 0
      %2303 = vmatprep.subr.bf16.mxu0 0
      %2304 = vmatpush1.bf16.msra.mxu0 0
      %2305 = vmatprep.subr.bf16.mxu0 0
      %2306 = vmatpush1.bf16.msra.mxu0 0
      %2307 = vmatprep.subr.bf16.mxu0 0
      %2308 = vmatpush1.bf16.msra.mxu0 0
      %2309 = vmatprep.subr.bf16.mxu0 0
      %2310 = vmatpush1.bf16.msra.mxu0 0
      %2311 = vmatprep.subr.bf16.mxu0 0
      %2312 = vmatpush1.bf16.msra.mxu0 0
      %2313 = vmatprep.subr.bf16.mxu0 0
      %2314 = vmatpush1.bf16.msra.mxu0 0
      %2315 = vmatprep.subr.bf16.mxu0 0
      %2316 = vmatpush1.bf16.msra.mxu0 0
      %2317 = vmatprep.subr.bf16.mxu0 0
      %2318 = vmatpush1.bf16.msra.mxu0 0
      %2319 = vmatprep.subr.bf16.mxu0 0
      %2320 = vmatpush1.bf16.msra.mxu0 0
      %2321 = vmatprep.subr.bf16.mxu0 0
      %2322 = vmatpush1.bf16.msra.mxu0 0
      %2323 = vmatprep.mubr.bf16.mxu0 0
      %2324 = vmatmul.mubr.bf16.gmra.mrb[0].mxu0 %v2277
      %v2325 = vpop.f32.mrb[0].mxu0
      %v2326 = vadd.f32 0.0, %v2325
      %v2327 = vpop.f32.mrb[0].mxu0
      %v2328 = vpop.f32.mrb[0].mxu0
      %v2329 = vadd.f32 0.0, %v2328
      %v2330 = vpop.f32.mrb[0].mxu0
      %2331 = vmatprep.mubr.bf16.mxu0 0
      %2332 = vmatmul.mubr.bf16.gmra.mrb[0].mxu0 %v2280
      %v2333 = vpop.f32.mrb[0].mxu0
      %v2334 = vadd.f32 0.0, %v2333
      %v2335 = vpop.f32.mrb[0].mxu0
      %v2336 = vpop.f32.mrb[0].mxu0
      %v2337 = vadd.f32 0.0, %v2336
      %v2338 = vpop.f32.mrb[0].mxu0
      %2339 = vmatprep.mubr.bf16.mxu0 0
      %2340 = vmatmul.mubr.bf16.gmra.mrb[0].mxu0 %v2283
      %v2341 = vpop.f32.mrb[0].mxu0
      %v2342 = vadd.f32 0.0, %v2341
      %v2343 = vpop.f32.mrb[0].mxu0
      %v2344 = vpop.f32.mrb[0].mxu0
      %v2345 = vadd.f32 0.0, %v2344
      %v2346 = vpop.f32.mrb[0].mxu0
      %2347 = vmatprep.mubr.bf16.mxu0 0
      %2348 = vmatmul.mubr.bf16.gmra.mrb[0].mxu0 %v2286
      %v2349 = vpop.f32.mrb[0].mxu0
      %v2350 = vadd.f32 0.0, %v2349
      %v2351 = vpop.f32.mrb[0].mxu0
      %v2352 = vpop.f32.mrb[0].mxu0
      %v2353 = vadd.f32 0.0, %v2352
      %v2354 = vpop.f32.mrb[0].mxu0
      %2355 = vdwg.mxu0
      %v2356 = vadd.f32 %v2048, %v2326
      %v2357 = vadd.f32 %v2049, %v2329
      %v2358 = vadd.f32 %v2050, %v2334
      %v2359 = vadd.f32 %v2051, %v2337
      %v2360 = vadd.f32 %v2052, %v2342
      %v2361 = vadd.f32 %v2053, %v2345
      %v2362 = vadd.f32 %v2054, %v2350
      %v2363 = vadd.f32 %v2055, %v2353
      %s2364 = scalar_lea.vmem %s7, 16
      %v2365 = vld [vmem:[%s2364] sm:$0x3]
      %v2367 = vsel %vm420, %v2365, 0
      %2369 = vmatprep.subr.bf16.mxu0 0
      %2370 = vmatpush1.bf16.msra.mxu0 %v2367
      %2371 = vmatprep.subr.bf16.mxu0 0
      %2372 = vmatpush1.bf16.msra.mxu0 0
      %2373 = vmatprep.subr.bf16.mxu0 0
      %2374 = vmatpush1.bf16.msra.mxu0 0
      %2375 = vmatprep.subr.bf16.mxu0 0
      %2376 = vmatpush1.bf16.msra.mxu0 0
      %2377 = vmatprep.subr.bf16.mxu0 0
      %2378 = vmatpush1.bf16.msra.mxu0 0
      %2379 = vmatprep.subr.bf16.mxu0 0
      %2380 = vmatpush1.bf16.msra.mxu0 0
      %2381 = vmatprep.subr.bf16.mxu0 0
      %2382 = vmatpush1.bf16.msra.mxu0 0
      %2383 = vmatprep.subr.bf16.mxu0 0
      %2384 = vmatpush1.bf16.msra.mxu0 0
      %2385 = vmatprep.subr.bf16.mxu0 0
      %2386 = vmatpush1.bf16.msra.mxu0 0
      %2387 = vmatprep.subr.bf16.mxu0 0
      %2388 = vmatpush1.bf16.msra.mxu0 0
      %2389 = vmatprep.subr.bf16.mxu0 0
      %2390 = vmatpush1.bf16.msra.mxu0 0
      %2391 = vmatprep.subr.bf16.mxu0 0
      %2392 = vmatpush1.bf16.msra.mxu0 0
      %2393 = vmatprep.subr.bf16.mxu0 0
      %2394 = vmatpush1.bf16.msra.mxu0 0
      %2395 = vmatprep.subr.bf16.mxu0 0
      %2396 = vmatpush1.bf16.msra.mxu0 0
      %2397 = vmatprep.subr.bf16.mxu0 0
      %2398 = vmatpush1.bf16.msra.mxu0 0
      %2399 = vmatprep.subr.bf16.mxu0 0
      %2400 = vmatpush1.bf16.msra.mxu0 0
      %2401 = vmatprep.mubr.bf16.mxu0 0
      %2402 = vmatmul.mubr.bf16.gmra.mrb[0].mxu0 %v2277
      %v2403 = vpop.f32.mrb[0].mxu0
      %v2404 = vadd.f32 0.0, %v2403
      %v2405 = vpop.f32.mrb[0].mxu0
      %v2406 = vpop.f32.mrb[0].mxu0
      %v2407 = vadd.f32 0.0, %v2406
      %v2408 = vpop.f32.mrb[0].mxu0
      %2409 = vmatprep.mubr.bf16.mxu0 0
      %2410 = vmatmul.mubr.bf16.gmra.mrb[0].mxu0 %v2280
      %v2411 = vpop.f32.mrb[0].mxu0
      %v2412 = vadd.f32 0.0, %v2411
      %v2413 = vpop.f32.mrb[0].mxu0
      %v2414 = vpop.f32.mrb[0].mxu0
      %v2415 = vadd.f32 0.0, %v2414
      %v2416 = vpop.f32.mrb[0].mxu0
      %2417 = vmatprep.mubr.bf16.mxu0 0
      %2418 = vmatmul.mubr.bf16.gmra.mrb[0].mxu0 %v2283
      %v2419 = vpop.f32.mrb[0].mxu0
      %v2420 = vadd.f32 0.0, %v2419
      %v2421 = vpop.f32.mrb[0].mxu0
      %v2422 = vpop.f32.mrb[0].mxu0
      %v2423 = vadd.f32 0.0, %v2422
      %v2424 = vpop.f32.mrb[0].mxu0
      %2425 = vmatprep.mubr.bf16.mxu0 0
      %2426 = vmatmul.mubr.bf16.gmra.mrb[0].mxu0 %v2286
      %v2427 = vpop.f32.mrb[0].mxu0
      %v2428 = vadd.f32 0.0, %v2427
      %v2429 = vpop.f32.mrb[0].mxu0
      %v2430 = vpop.f32.mrb[0].mxu0
      %v2431 = vadd.f32 0.0, %v2430
      %v2432 = vpop.f32.mrb[0].mxu0
      %2433 = vdwg.mxu0
      %v2434 = vadd.f32 %v2126, %v2404
      %v2435 = vadd.f32 %v2127, %v2407
      %v2436 = vadd.f32 %v2128, %v2412
      %v2437 = vadd.f32 %v2129, %v2415
      %v2438 = vadd.f32 %v2130, %v2420
      %v2439 = vadd.f32 %v2131, %v2423
      %v2440 = vadd.f32 %v2132, %v2428
      %v2441 = vadd.f32 %v2133, %v2431
      %v2442 = vld [vmem:[%s2] sm:$0x1]
      %v2444 = vlaneseq
      %v2445 = vshrl.u32 %v2444, 7
      %v2446 = vsub.s32 0, %v2445
      %v2447 = vrot.slane %v2442, %v2446
      %v2449 = vmul.f32 %v2356, %v2447
      %v2450 = vmul.f32 %v2357, %v2447
      %v2451 = vmul.f32 %v2358, %v2447
      %v2452 = vmul.f32 %v2359, %v2447
      %v2453 = vmul.f32 %v2360, %v2447
      %v2454 = vmul.f32 %v2361, %v2447
      %v2455 = vmul.f32 %v2362, %v2447
      %v2456 = vmul.f32 %v2363, %v2447
      %v2457 = vld [vmem:[%s3] sm:$0x1]
      %v2459 = vlaneseq
      %v2460 = vshrl.u32 %v2459, 7
      %v2461 = vsub.s32 0, %v2460
      %v2462 = vrot.slane %v2457, %v2461
      %v2464 = vadd.f32 %v2449, %v2462
      %v2465 = vadd.f32 %v2450, %v2462
      %v2466 = vadd.f32 %v2451, %v2462
      %v2467 = vadd.f32 %v2452, %v2462
      %v2468 = vadd.f32 %v2453, %v2462
      %v2469 = vadd.f32 %v2454, %v2462
      %v2470 = vadd.f32 %v2455, %v2462
      %v2471 = vadd.f32 %v2456, %v2462
      %v2472 = vmax.f32 %v2464, 0.0
      %v2473 = vmax.f32 %v2465, 0.0
      %v2474 = vmax.f32 %v2466, 0.0
      %v2475 = vmax.f32 %v2467, 0.0
      %v2476 = vmax.f32 %v2468, 0.0
      %v2477 = vmax.f32 %v2469, 0.0
      %v2478 = vmax.f32 %v2470, 0.0
      %v2479 = vmax.f32 %v2471, 0.0
      %vm2480 = vcmask 60416
      %2481 = vst.msk [vmem:[#allocation2] sm:$0xf] %vm2480, 0
      %vm2482 = vcmask 57344
      %2483 = vst.msk [vmem:[#allocation2 + $0x4] sm:$0x1] %vm2482, 0
      %2484 = vst.msk [vmem:[#allocation2 + $0x8] sm:$0xf] %vm2480, 0
      %2485 = vst.msk [vmem:[#allocation2 + $0xc] sm:$0x1] %vm2482, 0
      %2486 = vst.msk [vmem:[#allocation2 + $0x10] sm:$0xf] %vm2480, 0
      %2487 = vst.msk [vmem:[#allocation2 + $0x14] sm:$0x1] %vm2482, 0
      %2488 = vst.msk [vmem:[#allocation2 + $0x18] sm:$0xf] %vm2480, 0
      %2489 = vst.msk [vmem:[#allocation2 + $0x1c] sm:$0x1] %vm2482, 0
      %2490 = vst.msk [vmem:[#allocation2 + $0x20] sm:$0xf] %vm2480, 0
      %2491 = vst.msk [vmem:[#allocation2 + $0x24] sm:$0x1] %vm2482, 0
      %2492 = vst.msk [vmem:[#allocation2 + $0x28] sm:$0xf] %vm2480, 0
      %2493 = vst.msk [vmem:[#allocation2 + $0x2c] sm:$0x1] %vm2482, 0
      %2494 = vst.msk [vmem:[#allocation2 + $0x30] sm:$0xf] %vm2480, 0
      %2495 = vst.msk [vmem:[#allocation2 + $0x34] sm:$0x1] %vm2482, 0
      %2496 = vst.msk [vmem:[#allocation2 + $0x38] sm:$0xf] %vm2480, 0
      %2497 = vst.msk [vmem:[#allocation2 + $0x3c] sm:$0x1] %vm2482, 0
      %2498 = vst.msk [vmem:[#allocation2 + $0x40] sm:$0xf] %vm2480, 0
      %2499 = vst.msk [vmem:[#allocation2 + $0x44] sm:$0x1] %vm2482, 0
      %2500 = vst.msk [vmem:[#allocation2 + $0x48] sm:$0xf] %vm2480, 0
      %2501 = vst.msk [vmem:[#allocation2 + $0x4c] sm:$0x1] %vm2482, 0
      %v2502 = vpack.c.bf16 %v2472, %v2472
      %v2503 = vpack.c.bf16 %v2473, %v2473
      %v2504 = vpack.c.bf16 %v2474, %v2474
      %v2505 = vpack.c.bf16 %v2475, %v2475
      %v2506 = vpack.c.bf16 %v2476, %v2476
      %v2507 = vpack.c.bf16 %v2477, %v2477
      %v2508 = vpack.c.bf16 %v2478, %v2478
      %v2509 = vpack.c.bf16 %v2479, %v2479
      %v2518 = vunpack.c.l.b16 %v2502
      %v2519 = vunpack.c.l.b16 %v2503
      %v2520 = vunpack.c.l.b16 %v2504
      %v2521 = vunpack.c.l.b16 %v2505
      %v2522 = vunpack.c.l.b16 %v2506
      %v2523 = vunpack.c.l.b16 %v2507
      %v2524 = vunpack.c.l.b16 %v2508
      %v2525 = vunpack.c.l.b16 %v2509
      %v2526 = vpack.c.b16 %v2518, %v2518
      %v2527 = vpack.c.b16 %v2519, %v2519
      %v2528 = vpack.c.b16 %v2520, %v2520
      %v2529 = vpack.c.b16 %v2521, %v2521
      %v2530 = vpack.c.b16 %v2522, %v2522
      %v2531 = vpack.c.b16 %v2523, %v2523
      %v2532 = vpack.c.b16 %v2524, %v2524
      %v2533 = vpack.c.b16 %v2525, %v2525
      %v2535 = vshrl.u32 %v2526, 16
      %v2537 = vrot.slane %v2535, 7
      %v2538 = vshll.u32 %v2526, 16
      %v2540 = vor.u32 %v2537, %v2538
      %v2541 = vrot.slane %v2537, 4
      %v2543 = vshrl.u32 %v2527, 16
      %v2545 = vrot.slane %v2543, 7
      %v2546 = vshll.u32 %v2527, 16
      %v2548 = vor.u32 %v2545, %v2546
      %v2549 = vrot.slane %v2545, 4
      %v2551 = vshrl.u32 %v2528, 16
      %v2553 = vrot.slane %v2551, 7
      %v2554 = vshll.u32 %v2528, 16
      %v2556 = vor.u32 %v2553, %v2554
      %v2557 = vrot.slane %v2553, 4
      %v2559 = vshrl.u32 %v2529, 16
      %v2561 = vrot.slane %v2559, 7
      %v2562 = vshll.u32 %v2529, 16
      %v2564 = vor.u32 %v2561, %v2562
      %v2565 = vrot.slane %v2561, 4
      %v2567 = vshrl.u32 %v2530, 16
      %v2569 = vrot.slane %v2567, 7
      %v2570 = vshll.u32 %v2530, 16
      %v2572 = vor.u32 %v2569, %v2570
      %v2573 = vrot.slane %v2569, 4
      %v2575 = vshrl.u32 %v2531, 16
      %v2577 = vrot.slane %v2575, 7
      %v2578 = vshll.u32 %v2531, 16
      %v2580 = vor.u32 %v2577, %v2578
      %v2581 = vrot.slane %v2577, 4
      %v2583 = vshrl.u32 %v2532, 16
      %v2585 = vrot.slane %v2583, 7
      %v2586 = vshll.u32 %v2532, 16
      %v2588 = vor.u32 %v2585, %v2586
      %v2589 = vrot.slane %v2585, 4
      %v2591 = vshrl.u32 %v2533, 16
      %v2593 = vrot.slane %v2591, 7
      %v2594 = vshll.u32 %v2533, 16
      %v2596 = vor.u32 %v2593, %v2594
      %v2597 = vrot.slane %v2593, 4
      %s2614 = scalar_lea.vmem [#allocation2], 8
      %vm2615 = vcmask 60416
      %vm2616 = vsmask.f32 7938
      %vm2617 = vmand %vm2615, %vm2616
      %v2618 = vld [vmem:[%s2614] sm:$0xf]
      %v2619 = vsel %vm2617, %v2540, %v2618
      %2620 = vst [vmem:[%s2614] sm:$0xf] %v2619
      %vm2621 = vcmask 57344
      %vm2622 = vsmask.f32 256
      %vm2623 = vmand %vm2621, %vm2622
      %v2624 = vld [vmem:[%s2614 + $0x4] sm:$0x1]
      %v2625 = vsel %vm2623, %v2541, %v2624
      %2626 = vst [vmem:[%s2614 + $0x4] sm:$0x1] %v2625
      %v2627 = vld [vmem:[%s2614 + $0x8] sm:$0xf]
      %v2628 = vsel %vm2617, %v2548, %v2627
      %2629 = vst [vmem:[%s2614 + $0x8] sm:$0xf] %v2628
      %v2630 = vld [vmem:[%s2614 + $0xc] sm:$0x1]
      %v2631 = vsel %vm2623, %v2549, %v2630
      %2632 = vst [vmem:[%s2614 + $0xc] sm:$0x1] %v2631
      %v2633 = vld [vmem:[%s2614 + $0x10] sm:$0xf]
      %v2634 = vsel %vm2617, %v2556, %v2633
      %2635 = vst [vmem:[%s2614 + $0x10] sm:$0xf] %v2634
      %v2636 = vld [vmem:[%s2614 + $0x14] sm:$0x1]
      %v2637 = vsel %vm2623, %v2557, %v2636
      %2638 = vst [vmem:[%s2614 + $0x14] sm:$0x1] %v2637
      %v2639 = vld [vmem:[%s2614 + $0x18] sm:$0xf]
      %v2640 = vsel %vm2617, %v2564, %v2639
      %2641 = vst [vmem:[%s2614 + $0x18] sm:$0xf] %v2640
      %v2642 = vld [vmem:[%s2614 + $0x1c] sm:$0x1]
      %v2643 = vsel %vm2623, %v2565, %v2642
      %2644 = vst [vmem:[%s2614 + $0x1c] sm:$0x1] %v2643
      %v2645 = vld [vmem:[%s2614 + $0x20] sm:$0xf]
      %v2646 = vsel %vm2617, %v2572, %v2645
      %2647 = vst [vmem:[%s2614 + $0x20] sm:$0xf] %v2646
      %v2648 = vld [vmem:[%s2614 + $0x24] sm:$0x1]
      %v2649 = vsel %vm2623, %v2573, %v2648
      %2650 = vst [vmem:[%s2614 + $0x24] sm:$0x1] %v2649
      %v2651 = vld [vmem:[%s2614 + $0x28] sm:$0xf]
      %v2652 = vsel %vm2617, %v2580, %v2651
      %2653 = vst [vmem:[%s2614 + $0x28] sm:$0xf] %v2652
      %v2654 = vld [vmem:[%s2614 + $0x2c] sm:$0x1]
      %v2655 = vsel %vm2623, %v2581, %v2654
      %2656 = vst [vmem:[%s2614 + $0x2c] sm:$0x1] %v2655
      %v2657 = vld [vmem:[%s2614 + $0x30] sm:$0xf]
      %v2658 = vsel %vm2617, %v2588, %v2657
      %2659 = vst [vmem:[%s2614 + $0x30] sm:$0xf] %v2658
      %v2660 = vld [vmem:[%s2614 + $0x34] sm:$0x1]
      %v2661 = vsel %vm2623, %v2589, %v2660
      %2662 = vst [vmem:[%s2614 + $0x34] sm:$0x1] %v2661
      %v2663 = vld [vmem:[%s2614 + $0x38] sm:$0xf]
      %v2664 = vsel %vm2617, %v2596, %v2663
      %2665 = vst [vmem:[%s2614 + $0x38] sm:$0xf] %v2664
      %v2666 = vld [vmem:[%s2614 + $0x3c] sm:$0x1]
      %v2667 = vsel %vm2623, %v2597, %v2666
      %2668 = vst [vmem:[%s2614 + $0x3c] sm:$0x1] %v2667
      %v2669 = vld [vmem:[%s8] sm:$0x1]
      %v2671 = vlaneseq
      %v2672 = vshrl.u32 %v2671, 7
      %v2673 = vsub.s32 0, %v2672
      %v2674 = vrot.slane %v2669, %v2673
      %v2676 = vmul.f32 %v2434, %v2674
      %v2677 = vmul.f32 %v2435, %v2674
      %v2678 = vmul.f32 %v2436, %v2674
      %v2679 = vmul.f32 %v2437, %v2674
      %v2680 = vmul.f32 %v2438, %v2674
      %v2681 = vmul.f32 %v2439, %v2674
      %v2682 = vmul.f32 %v2440, %v2674
      %v2683 = vmul.f32 %v2441, %v2674
      %v2684 = vld [vmem:[%s9] sm:$0x1]
      %v2686 = vlaneseq
      %v2687 = vshrl.u32 %v2686, 7
      %v2688 = vsub.s32 0, %v2687
      %v2689 = vrot.slane %v2684, %v2688
      %v2691 = vadd.f32 %v2676, %v2689
      %v2692 = vadd.f32 %v2677, %v2689
      %v2693 = vadd.f32 %v2678, %v2689
      %v2694 = vadd.f32 %v2679, %v2689
      %v2695 = vadd.f32 %v2680, %v2689
      %v2696 = vadd.f32 %v2681, %v2689
      %v2697 = vadd.f32 %v2682, %v2689
      %v2698 = vadd.f32 %v2683, %v2689
      %v2699 = vld [vmem:[#allocation2] sm:$0xf]
      %v2700 = vld [vmem:[#allocation2 + $0x8] sm:$0xf]
      %v2701 = vld [vmem:[#allocation2 + $0x10] sm:$0xf]
      %v2702 = vld [vmem:[#allocation2 + $0x18] sm:$0xf]
      %v2703 = vld [vmem:[#allocation2 + $0x20] sm:$0xf]
      %v2704 = vld [vmem:[#allocation2 + $0x28] sm:$0xf]
      %v2705 = vld [vmem:[#allocation2 + $0x30] sm:$0xf]
      %v2706 = vld [vmem:[#allocation2 + $0x38] sm:$0xf]
      %v2707 = vld [vmem:[%s4] sm:$0xf]
      %v2708 = vld [vmem:[#allocation2 + $0x4] sm:$0x1]
      %v2709 = vld [vmem:[#allocation2 + $0xc] sm:$0x1]
      %v2710 = vld [vmem:[#allocation2 + $0x14] sm:$0x1]
      %v2711 = vld [vmem:[#allocation2 + $0x1c] sm:$0x1]
      %v2712 = vld [vmem:[#allocation2 + $0x24] sm:$0x1]
      %v2713 = vld [vmem:[#allocation2 + $0x2c] sm:$0x1]
      %v2714 = vld [vmem:[#allocation2 + $0x34] sm:$0x1]
      %v2715 = vld [vmem:[#allocation2 + $0x3c] sm:$0x1]
      %v2717 = vshrl.u32 %v2699, 16
      %v2719 = vrot.slane %v2717, 4
      %v2720 = vshll.u32 %v2699, 16
      %v2722 = vrot.slane %v2720, 5
      %v2723 = vor.u32 %v2719, %v2722
      %v2724 = vrot.slane %v2723, 4
      %v2726 = vshll.u32 %v2708, 16
      %v2728 = vrot.slane %v2726, 5
      %v2729 = vsel %vm745, %v2724, %v2728
      %v2731 = vshrl.u32 %v2700, 16
      %v2733 = vrot.slane %v2731, 4
      %v2734 = vshll.u32 %v2700, 16
      %v2736 = vrot.slane %v2734, 5
      %v2737 = vor.u32 %v2733, %v2736
      %v2738 = vrot.slane %v2737, 4
      %v2740 = vshll.u32 %v2709, 16
      %v2742 = vrot.slane %v2740, 5
      %v2743 = vsel %vm745, %v2738, %v2742
      %v2745 = vshrl.u32 %v2701, 16
      %v2747 = vrot.slane %v2745, 4
      %v2748 = vshll.u32 %v2701, 16
      %v2750 = vrot.slane %v2748, 5
      %v2751 = vor.u32 %v2747, %v2750
      %v2752 = vrot.slane %v2751, 4
      %v2754 = vshll.u32 %v2710, 16
      %v2756 = vrot.slane %v2754, 5
      %v2757 = vsel %vm745, %v2752, %v2756
      %v2759 = vshrl.u32 %v2702, 16
      %v2761 = vrot.slane %v2759, 4
      %v2762 = vshll.u32 %v2702, 16
      %v2764 = vrot.slane %v2762, 5
      %v2765 = vor.u32 %v2761, %v2764
      %v2766 = vrot.slane %v2765, 4
      %v2768 = vshll.u32 %v2711, 16
      %v2770 = vrot.slane %v2768, 5
      %v2771 = vsel %vm745, %v2766, %v2770
      %v2773 = vshrl.u32 %v2703, 16
      %v2775 = vrot.slane %v2773, 4
      %v2776 = vshll.u32 %v2703, 16
      %v2778 = vrot.slane %v2776, 5
      %v2779 = vor.u32 %v2775, %v2778
      %v2780 = vrot.slane %v2779, 4
      %v2782 = vshll.u32 %v2712, 16
      %v2784 = vrot.slane %v2782, 5
      %v2785 = vsel %vm745, %v2780, %v2784
      %v2787 = vshrl.u32 %v2704, 16
      %v2789 = vrot.slane %v2787, 4
      %v2790 = vshll.u32 %v2704, 16
      %v2792 = vrot.slane %v2790, 5
      %v2793 = vor.u32 %v2789, %v2792
      %v2794 = vrot.slane %v2793, 4
      %v2796 = vshll.u32 %v2713, 16
      %v2798 = vrot.slane %v2796, 5
      %v2799 = vsel %vm745, %v2794, %v2798
      %v2801 = vshrl.u32 %v2705, 16
      %v2803 = vrot.slane %v2801, 4
      %v2804 = vshll.u32 %v2705, 16
      %v2806 = vrot.slane %v2804, 5
      %v2807 = vor.u32 %v2803, %v2806
      %v2808 = vrot.slane %v2807, 4
      %v2810 = vshll.u32 %v2714, 16
      %v2812 = vrot.slane %v2810, 5
      %v2813 = vsel %vm745, %v2808, %v2812
      %v2815 = vshrl.u32 %v2706, 16
      %v2817 = vrot.slane %v2815, 4
      %v2818 = vshll.u32 %v2706, 16
      %v2820 = vrot.slane %v2818, 5
      %v2821 = vor.u32 %v2817, %v2820
      %v2822 = vrot.slane %v2821, 4
      %v2824 = vshll.u32 %v2715, 16
      %v2826 = vrot.slane %v2824, 5
      %v2827 = vsel %vm745, %v2822, %v2826
      %s2828 = scalar_lea.vmem %s4, 4
      %v2829 = vld [vmem:[%s2828] sm:$0xf]
      %v2830 = vunpack.c.l.b16 %v2729
      %v2831 = vunpack.c.l.b16 %v2743
      %v2832 = vunpack.c.l.b16 %v2757
      %v2833 = vunpack.c.l.b16 %v2771
      %v2834 = vunpack.c.l.b16 %v2785
      %v2835 = vunpack.c.l.b16 %v2799
      %v2836 = vunpack.c.l.b16 %v2813
      %v2837 = vunpack.c.l.b16 %v2827
      %v2838 = vpack.c.b16 %v2831, %v2830
      %v2839 = vpack.c.b16 %v2833, %v2832
      %v2840 = vpack.c.b16 %v2835, %v2834
      %v2841 = vpack.c.b16 %v2837, %v2836
      %vm2842 = vcmask 64512
      %v2844 = vsel %vm2842, %v2838, 0
      %v2847 = vsel %vm2842, %v2839, 0
      %v2850 = vsel %vm2842, %v2840, 0
      %v2853 = vsel %vm2842, %v2841, 0
      %vm2855 = vcmask 1043456
      %v2857 = vsel %vm2855, %v2829, 0
      %2859 = vmatprep.subr.bf16.mxu0 0
      %2860 = vmatpush1.bf16.msra.mxu0 %v2857
      %2861 = vmatprep.subr.bf16.mxu0 0
      %2862 = vmatpush1.bf16.msra.mxu0 0
      %2863 = vmatprep.subr.bf16.mxu0 0
      %2864 = vmatpush1.bf16.msra.mxu0 0
      %2865 = vmatprep.subr.bf16.mxu0 0
      %2866 = vmatpush1.bf16.msra.mxu0 0
      %2867 = vmatprep.subr.bf16.mxu0 0
      %2868 = vmatpush1.bf16.msra.mxu0 0
      %2869 = vmatprep.subr.bf16.mxu0 0
      %2870 = vmatpush1.bf16.msra.mxu0 0
      %2871 = vmatprep.subr.bf16.mxu0 0
      %2872 = vmatpush1.bf16.msra.mxu0 0
      %2873 = vmatprep.subr.bf16.mxu0 0
      %2874 = vmatpush1.bf16.msra.mxu0 0
      %2875 = vmatprep.subr.bf16.mxu0 0
      %2876 = vmatpush1.bf16.msra.mxu0 0
      %2877 = vmatprep.subr.bf16.mxu0 0
      %2878 = vmatpush1.bf16.msra.mxu0 0
      %2879 = vmatprep.subr.bf16.mxu0 0
      %2880 = vmatpush1.bf16.msra.mxu0 0
      %2881 = vmatprep.subr.bf16.mxu0 0
      %2882 = vmatpush1.bf16.msra.mxu0 0
      %2883 = vmatprep.subr.bf16.mxu0 0
      %2884 = vmatpush1.bf16.msra.mxu0 0
      %2885 = vmatprep.subr.bf16.mxu0 0
      %2886 = vmatpush1.bf16.msra.mxu0 0
      %2887 = vmatprep.subr.bf16.mxu0 0
      %2888 = vmatpush1.bf16.msra.mxu0 0
      %2889 = vmatprep.subr.bf16.mxu0 0
      %2890 = vmatpush1.bf16.msra.mxu0 0
      %2891 = vmatprep.mubr.bf16.mxu0 0
      %2892 = vmatmul.mubr.bf16.gmra.mrb[0].mxu0 %v2844
      %v2893 = vpop.f32.mrb[0].mxu0
      %v2894 = vadd.f32 0.0, %v2893
      %v2895 = vpop.f32.mrb[0].mxu0
      %v2896 = vpop.f32.mrb[0].mxu0
      %v2897 = vadd.f32 0.0, %v2896
      %v2898 = vpop.f32.mrb[0].mxu0
      %2899 = vmatprep.mubr.bf16.mxu0 0
      %2900 = vmatmul.mubr.bf16.gmra.mrb[0].mxu0 %v2847
      %v2901 = vpop.f32.mrb[0].mxu0
      %v2902 = vadd.f32 0.0, %v2901
      %v2903 = vpop.f32.mrb[0].mxu0
      %v2904 = vpop.f32.mrb[0].mxu0
      %v2905 = vadd.f32 0.0, %v2904
      %v2906 = vpop.f32.mrb[0].mxu0
      %2907 = vmatprep.mubr.bf16.mxu0 0
      %2908 = vmatmul.mubr.bf16.gmra.mrb[0].mxu0 %v2850
      %v2909 = vpop.f32.mrb[0].mxu0
      %v2910 = vadd.f32 0.0, %v2909
      %v2911 = vpop.f32.mrb[0].mxu0
      %v2912 = vpop.f32.mrb[0].mxu0
      %v2913 = vadd.f32 0.0, %v2912
      %v2914 = vpop.f32.mrb[0].mxu0
      %2915 = vmatprep.mubr.bf16.mxu0 0
      %2916 = vmatmul.mubr.bf16.gmra.mrb[0].mxu0 %v2853
      %v2917 = vpop.f32.mrb[0].mxu0
      %v2918 = vadd.f32 0.0, %v2917
      %v2919 = vpop.f32.mrb[0].mxu0
      %v2920 = vpop.f32.mrb[0].mxu0
      %v2921 = vadd.f32 0.0, %v2920
      %v2922 = vpop.f32.mrb[0].mxu0
      %2923 = vdwg.mxu0
      %v2932 = vunpack.c.l.b16 %v2699
      %v2933 = vunpack.c.l.b16 %v2700
      %v2934 = vunpack.c.l.b16 %v2701
      %v2935 = vunpack.c.l.b16 %v2702
      %v2936 = vunpack.c.l.b16 %v2703
      %v2937 = vunpack.c.l.b16 %v2704
      %v2938 = vunpack.c.l.b16 %v2705
      %v2939 = vunpack.c.l.b16 %v2706
      %v2940 = vpack.c.b16 %v2933, %v2932
      %v2941 = vpack.c.b16 %v2935, %v2934
      %v2942 = vpack.c.b16 %v2937, %v2936
      %v2943 = vpack.c.b16 %v2939, %v2938
      %v2945 = vsel %vm2842, %v2940, 0
      %v2948 = vsel %vm2842, %v2941, 0
      %v2951 = vsel %vm2842, %v2942, 0
      %v2954 = vsel %vm2842, %v2943, 0
      %v2957 = vsel %vm2855, %v2707, 0
      %2959 = vmatprep.subr.bf16.mxu0 0
      %2960 = vmatpush1.bf16.msra.mxu0 %v2957
      %2961 = vmatprep.subr.bf16.mxu0 0
      %2962 = vmatpush1.bf16.msra.mxu0 0
      %2963 = vmatprep.subr.bf16.mxu0 0
      %2964 = vmatpush1.bf16.msra.mxu0 0
      %2965 = vmatprep.subr.bf16.mxu0 0
      %2966 = vmatpush1.bf16.msra.mxu0 0
      %2967 = vmatprep.subr.bf16.mxu0 0
      %2968 = vmatpush1.bf16.msra.mxu0 0
      %2969 = vmatprep.subr.bf16.mxu0 0
      %2970 = vmatpush1.bf16.msra.mxu0 0
      %2971 = vmatprep.subr.bf16.mxu0 0
      %2972 = vmatpush1.bf16.msra.mxu0 0
      %2973 = vmatprep.subr.bf16.mxu0 0
      %2974 = vmatpush1.bf16.msra.mxu0 0
      %2975 = vmatprep.subr.bf16.mxu0 0
      %2976 = vmatpush1.bf16.msra.mxu0 0
      %2977 = vmatprep.subr.bf16.mxu0 0
      %2978 = vmatpush1.bf16.msra.mxu0 0
      %2979 = vmatprep.subr.bf16.mxu0 0
      %2980 = vmatpush1.bf16.msra.mxu0 0
      %2981 = vmatprep.subr.bf16.mxu0 0
      %2982 = vmatpush1.bf16.msra.mxu0 0
      %2983 = vmatprep.subr.bf16.mxu0 0
      %2984 = vmatpush1.bf16.msra.mxu0 0
      %2985 = vmatprep.subr.bf16.mxu0 0
      %2986 = vmatpush1.bf16.msra.mxu0 0
      %2987 = vmatprep.subr.bf16.mxu0 0
      %2988 = vmatpush1.bf16.msra.mxu0 0
      %2989 = vmatprep.subr.bf16.mxu0 0
      %2990 = vmatpush1.bf16.msra.mxu0 0
      %2991 = vmatprep.mubr.bf16.mxu0 0
      %2992 = vmatmul.mubr.bf16.gmra.mrb[0].mxu0 %v2945
      %v2993 = vpop.f32.mrb[0].mxu0
      %v2994 = vadd.f32 %v2894, %v2993
      %v2995 = vpop.f32.mrb[0].mxu0
      %v2996 = vpop.f32.mrb[0].mxu0
      %v2997 = vadd.f32 %v2897, %v2996
      %v2998 = vpop.f32.mrb[0].mxu0
      %2999 = vmatprep.mubr.bf16.mxu0 0
      %3000 = vmatmul.mubr.bf16.gmra.mrb[0].mxu0 %v2948
      %v3001 = vpop.f32.mrb[0].mxu0
      %v3002 = vadd.f32 %v2902, %v3001
      %v3003 = vpop.f32.mrb[0].mxu0
      %v3004 = vpop.f32.mrb[0].mxu0
      %v3005 = vadd.f32 %v2905, %v3004
      %v3006 = vpop.f32.mrb[0].mxu0
      %3007 = vmatprep.mubr.bf16.mxu0 0
      %3008 = vmatmul.mubr.bf16.gmra.mrb[0].mxu0 %v2951
      %v3009 = vpop.f32.mrb[0].mxu0
      %v3010 = vadd.f32 %v2910, %v3009
      %v3011 = vpop.f32.mrb[0].mxu0
      %v3012 = vpop.f32.mrb[0].mxu0
      %v3013 = vadd.f32 %v2913, %v3012
      %v3014 = vpop.f32.mrb[0].mxu0
      %3015 = vmatprep.mubr.bf16.mxu0 0
      %3016 = vmatmul.mubr.bf16.gmra.mrb[0].mxu0 %v2954
      %v3017 = vpop.f32.mrb[0].mxu0
      %v3018 = vadd.f32 %v2918, %v3017
      %v3019 = vpop.f32.mrb[0].mxu0
      %v3020 = vpop.f32.mrb[0].mxu0
      %v3021 = vadd.f32 %v2921, %v3020
      %v3022 = vpop.f32.mrb[0].mxu0
      %3023 = vdwg.mxu0
      %v3024 = vld [vmem:[#allocation2] sm:$0xe]
      %v3025 = vld [vmem:[#allocation2 + $0x8] sm:$0xe]
      %v3026 = vld [vmem:[#allocation2 + $0x10] sm:$0xe]
      %v3027 = vld [vmem:[#allocation2 + $0x18] sm:$0xe]
      %v3028 = vld [vmem:[#allocation2 + $0x20] sm:$0xe]
      %v3029 = vld [vmem:[#allocation2 + $0x28] sm:$0xe]
      %v3030 = vld [vmem:[#allocation2 + $0x30] sm:$0xe]
      %v3031 = vld [vmem:[#allocation2 + $0x38] sm:$0xe]
      %vm3048 = vcmask 1042432
      %vm3049 = vcmask 1046532
      %vm3050 = vmor %vm3048, %vm3049
      %v3051 = vrot.slane %v3024, 5
      %v3052 = vrot.slane %v3051, 4
      %v3053 = vrot.slane %v2708, 5
      %v3054 = vsel %vm3050, %v3052, %v3053
      %v3055 = vrot.slane %v3025, 5
      %v3056 = vrot.slane %v3055, 4
      %v3057 = vrot.slane %v2709, 5
      %v3058 = vsel %vm3050, %v3056, %v3057
      %v3059 = vrot.slane %v3026, 5
      %v3060 = vrot.slane %v3059, 4
      %v3061 = vrot.slane %v2710, 5
      %v3062 = vsel %vm3050, %v3060, %v3061
      %v3063 = vrot.slane %v3027, 5
      %v3064 = vrot.slane %v3063, 4
      %v3065 = vrot.slane %v2711, 5
      %v3066 = vsel %vm3050, %v3064, %v3065
      %v3067 = vrot.slane %v3028, 5
      %v3068 = vrot.slane %v3067, 4
      %v3069 = vrot.slane %v2712, 5
      %v3070 = vsel %vm3050, %v3068, %v3069
      %v3071 = vrot.slane %v3029, 5
      %v3072 = vrot.slane %v3071, 4
      %v3073 = vrot.slane %v2713, 5
      %v3074 = vsel %vm3050, %v3072, %v3073
      %v3075 = vrot.slane %v3030, 5
      %v3076 = vrot.slane %v3075, 4
      %v3077 = vrot.slane %v2714, 5
      %v3078 = vsel %vm3050, %v3076, %v3077
      %v3079 = vrot.slane %v3031, 5
      %v3080 = vrot.slane %v3079, 4
      %v3081 = vrot.slane %v2715, 5
      %v3082 = vsel %vm3050, %v3080, %v3081
      %s3083 = scalar_lea.vmem %s4, 8
      %v3084 = vld [vmem:[%s3083] sm:$0xf]
      %v3085 = vunpack.c.l.b16 %v3054
      %v3086 = vunpack.c.l.b16 %v3058
      %v3087 = vunpack.c.l.b16 %v3062
      %v3088 = vunpack.c.l.b16 %v3066
      %v3089 = vunpack.c.l.b16 %v3070
      %v3090 = vunpack.c.l.b16 %v3074
      %v3091 = vunpack.c.l.b16 %v3078
      %v3092 = vunpack.c.l.b16 %v3082
      %v3093 = vpack.c.b16 %v3086, %v3085
      %v3094 = vpack.c.b16 %v3088, %v3087
      %v3095 = vpack.c.b16 %v3090, %v3089
      %v3096 = vpack.c.b16 %v3092, %v3091
      %v3098 = vsel %vm2842, %v3093, 0
      %v3101 = vsel %vm2842, %v3094, 0
      %v3104 = vsel %vm2842, %v3095, 0
      %v3107 = vsel %vm2842, %v3096, 0
      %v3110 = vsel %vm2855, %v3084, 0
      %3112 = vmatprep.subr.bf16.mxu0 0
      %3113 = vmatpush1.bf16.msra.mxu0 %v3110
      %3114 = vmatprep.subr.bf16.mxu0 0
      %3115 = vmatpush1.bf16.msra.mxu0 0
      %3116 = vmatprep.subr.bf16.mxu0 0
      %3117 = vmatpush1.bf16.msra.mxu0 0
      %3118 = vmatprep.subr.bf16.mxu0 0
      %3119 = vmatpush1.bf16.msra.mxu0 0
      %3120 = vmatprep.subr.bf16.mxu0 0
      %3121 = vmatpush1.bf16.msra.mxu0 0
      %3122 = vmatprep.subr.bf16.mxu0 0
      %3123 = vmatpush1.bf16.msra.mxu0 0
      %3124 = vmatprep.subr.bf16.mxu0 0
      %3125 = vmatpush1.bf16.msra.mxu0 0
      %3126 = vmatprep.subr.bf16.mxu0 0
      %3127 = vmatpush1.bf16.msra.mxu0 0
      %3128 = vmatprep.subr.bf16.mxu0 0
      %3129 = vmatpush1.bf16.msra.mxu0 0
      %3130 = vmatprep.subr.bf16.mxu0 0
      %3131 = vmatpush1.bf16.msra.mxu0 0
      %3132 = vmatprep.subr.bf16.mxu0 0
      %3133 = vmatpush1.bf16.msra.mxu0 0
      %3134 = vmatprep.subr.bf16.mxu0 0
      %3135 = vmatpush1.bf16.msra.mxu0 0
      %3136 = vmatprep.subr.bf16.mxu0 0
      %3137 = vmatpush1.bf16.msra.mxu0 0
      %3138 = vmatprep.subr.bf16.mxu0 0
      %3139 = vmatpush1.bf16.msra.mxu0 0
      %3140 = vmatprep.subr.bf16.mxu0 0
      %3141 = vmatpush1.bf16.msra.mxu0 0
      %3142 = vmatprep.subr.bf16.mxu0 0
      %3143 = vmatpush1.bf16.msra.mxu0 0
      %3144 = vmatprep.mubr.bf16.mxu0 0
      %3145 = vmatmul.mubr.bf16.gmra.mrb[0].mxu0 %v3098
      %v3146 = vpop.f32.mrb[0].mxu0
      %v3147 = vadd.f32 0.0, %v3146
      %v3148 = vpop.f32.mrb[0].mxu0
      %v3149 = vpop.f32.mrb[0].mxu0
      %v3150 = vadd.f32 0.0, %v3149
      %v3151 = vpop.f32.mrb[0].mxu0
      %3152 = vmatprep.mubr.bf16.mxu0 0
      %3153 = vmatmul.mubr.bf16.gmra.mrb[0].mxu0 %v3101
      %v3154 = vpop.f32.mrb[0].mxu0
      %v3155 = vadd.f32 0.0, %v3154
      %v3156 = vpop.f32.mrb[0].mxu0
      %v3157 = vpop.f32.mrb[0].mxu0
      %v3158 = vadd.f32 0.0, %v3157
      %v3159 = vpop.f32.mrb[0].mxu0
      %3160 = vmatprep.mubr.bf16.mxu0 0
      %3161 = vmatmul.mubr.bf16.gmra.mrb[0].mxu0 %v3104
      %v3162 = vpop.f32.mrb[0].mxu0
      %v3163 = vadd.f32 0.0, %v3162
      %v3164 = vpop.f32.mrb[0].mxu0
      %v3165 = vpop.f32.mrb[0].mxu0
      %v3166 = vadd.f32 0.0, %v3165
      %v3167 = vpop.f32.mrb[0].mxu0
      %3168 = vmatprep.mubr.bf16.mxu0 0
      %3169 = vmatmul.mubr.bf16.gmra.mrb[0].mxu0 %v3107
      %v3170 = vpop.f32.mrb[0].mxu0
      %v3171 = vadd.f32 0.0, %v3170
      %v3172 = vpop.f32.mrb[0].mxu0
      %v3173 = vpop.f32.mrb[0].mxu0
      %v3174 = vadd.f32 0.0, %v3173
      %v3175 = vpop.f32.mrb[0].mxu0
      %3176 = vdwg.mxu0
      %v3177 = vadd.f32 %v2994, %v3147
      %v3178 = vadd.f32 %v2997, %v3150
      %v3179 = vadd.f32 %v3002, %v3155
      %v3180 = vadd.f32 %v3005, %v3158
      %v3181 = vadd.f32 %v3010, %v3163
      %v3182 = vadd.f32 %v3013, %v3166
      %v3183 = vadd.f32 %v3018, %v3171
      %v3184 = vadd.f32 %v3021, %v3174
      %v3185 = vld [vmem:[%s2614] sm:$0xf]
      %v3186 = vld [vmem:[%s2614 + $0x8] sm:$0xf]
      %v3187 = vld [vmem:[%s2614 + $0x10] sm:$0xf]
      %v3188 = vld [vmem:[%s2614 + $0x18] sm:$0xf]
      %v3189 = vld [vmem:[%s2614 + $0x20] sm:$0xf]
      %v3190 = vld [vmem:[%s2614 + $0x28] sm:$0xf]
      %v3191 = vld [vmem:[%s2614 + $0x30] sm:$0xf]
      %v3192 = vld [vmem:[%s2614 + $0x38] sm:$0xf]
      %s3193 = scalar_lea.vmem %s4, 12
      %v3194 = vld [vmem:[%s3193] sm:$0xf]
      %v3203 = vunpack.c.l.b16 %v3185
      %v3204 = vunpack.c.l.b16 %v3186
      %v3205 = vunpack.c.l.b16 %v3187
      %v3206 = vunpack.c.l.b16 %v3188
      %v3207 = vunpack.c.l.b16 %v3189
      %v3208 = vunpack.c.l.b16 %v3190
      %v3209 = vunpack.c.l.b16 %v3191
      %v3210 = vunpack.c.l.b16 %v3192
      %v3211 = vpack.c.b16 %v3204, %v3203
      %v3212 = vpack.c.b16 %v3206, %v3205
      %v3213 = vpack.c.b16 %v3208, %v3207
      %v3214 = vpack.c.b16 %v3210, %v3209
      %v3216 = vsel %vm2842, %v3211, 0
      %v3219 = vsel %vm2842, %v3212, 0
      %v3222 = vsel %vm2842, %v3213, 0
      %v3225 = vsel %vm2842, %v3214, 0
      %v3228 = vsel %vm2855, %v3194, 0
      %3230 = vmatprep.subr.bf16.mxu0 0
      %3231 = vmatpush1.bf16.msra.mxu0 %v3228
      %3232 = vmatprep.subr.bf16.mxu0 0
      %3233 = vmatpush1.bf16.msra.mxu0 0
      %3234 = vmatprep.subr.bf16.mxu0 0
      %3235 = vmatpush1.bf16.msra.mxu0 0
      %3236 = vmatprep.subr.bf16.mxu0 0
      %3237 = vmatpush1.bf16.msra.mxu0 0
      %3238 = vmatprep.subr.bf16.mxu0 0
      %3239 = vmatpush1.bf16.msra.mxu0 0
      %3240 = vmatprep.subr.bf16.mxu0 0
      %3241 = vmatpush1.bf16.msra.mxu0 0
      %3242 = vmatprep.subr.bf16.mxu0 0
      %3243 = vmatpush1.bf16.msra.mxu0 0
      %3244 = vmatprep.subr.bf16.mxu0 0
      %3245 = vmatpush1.bf16.msra.mxu0 0
      %3246 = vmatprep.subr.bf16.mxu0 0
      %3247 = vmatpush1.bf16.msra.mxu0 0
      %3248 = vmatprep.subr.bf16.mxu0 0
      %3249 = vmatpush1.bf16.msra.mxu0 0
      %3250 = vmatprep.subr.bf16.mxu0 0
      %3251 = vmatpush1.bf16.msra.mxu0 0
      %3252 = vmatprep.subr.bf16.mxu0 0
      %3253 = vmatpush1.bf16.msra.mxu0 0
      %3254 = vmatprep.subr.bf16.mxu0 0
      %3255 = vmatpush1.bf16.msra.mxu0 0
      %3256 = vmatprep.subr.bf16.mxu0 0
      %3257 = vmatpush1.bf16.msra.mxu0 0
      %3258 = vmatprep.subr.bf16.mxu0 0
      %3259 = vmatpush1.bf16.msra.mxu0 0
      %3260 = vmatprep.subr.bf16.mxu0 0
      %3261 = vmatpush1.bf16.msra.mxu0 0
      %3262 = vmatprep.mubr.bf16.mxu0 0
      %3263 = vmatmul.mubr.bf16.gmra.mrb[0].mxu0 %v3216
      %v3264 = vpop.f32.mrb[0].mxu0
      %v3265 = vadd.f32 0.0, %v3264
      %v3266 = vpop.f32.mrb[0].mxu0
      %v3267 = vpop.f32.mrb[0].mxu0
      %v3268 = vadd.f32 0.0, %v3267
      %v3269 = vpop.f32.mrb[0].mxu0
      %3270 = vmatprep.mubr.bf16.mxu0 0
      %3271 = vmatmul.mubr.bf16.gmra.mrb[0].mxu0 %v3219
      %v3272 = vpop.f32.mrb[0].mxu0
      %v3273 = vadd.f32 0.0, %v3272
      %v3274 = vpop.f32.mrb[0].mxu0
      %v3275 = vpop.f32.mrb[0].mxu0
      %v3276 = vadd.f32 0.0, %v3275
      %v3277 = vpop.f32.mrb[0].mxu0
      %3278 = vmatprep.mubr.bf16.mxu0 0
      %3279 = vmatmul.mubr.bf16.gmra.mrb[0].mxu0 %v3222
      %v3280 = vpop.f32.mrb[0].mxu0
      %v3281 = vadd.f32 0.0, %v3280
      %v3282 = vpop.f32.mrb[0].mxu0
      %v3283 = vpop.f32.mrb[0].mxu0
      %v3284 = vadd.f32 0.0, %v3283
      %v3285 = vpop.f32.mrb[0].mxu0
      %3286 = vmatprep.mubr.bf16.mxu0 0
      %3287 = vmatmul.mubr.bf16.gmra.mrb[0].mxu0 %v3225
      %v3288 = vpop.f32.mrb[0].mxu0
      %v3289 = vadd.f32 0.0, %v3288
      %v3290 = vpop.f32.mrb[0].mxu0
      %v3291 = vpop.f32.mrb[0].mxu0
      %v3292 = vadd.f32 0.0, %v3291
      %v3293 = vpop.f32.mrb[0].mxu0
      %3294 = vdwg.mxu0
      %v3295 = vadd.f32 %v3177, %v3265
      %v3296 = vadd.f32 %v3178, %v3268
      %v3297 = vadd.f32 %v3179, %v3273
      %v3298 = vadd.f32 %v3180, %v3276
      %v3299 = vadd.f32 %v3181, %v3281
      %v3300 = vadd.f32 %v3182, %v3284
      %v3301 = vadd.f32 %v3183, %v3289
      %v3302 = vadd.f32 %v3184, %v3292
      %v3303 = vld [vmem:[%s2614] sm:$0xf]
      %v3304 = vld [vmem:[%s2614 + $0x4] sm:$0x1]
      %v3305 = vld [vmem:[%s2614 + $0x8] sm:$0xf]
      %v3306 = vld [vmem:[%s2614 + $0xc] sm:$0x1]
      %v3307 = vld [vmem:[%s2614 + $0x10] sm:$0xf]
      %v3308 = vld [vmem:[%s2614 + $0x14] sm:$0x1]
      %v3309 = vld [vmem:[%s2614 + $0x18] sm:$0xf]
      %v3310 = vld [vmem:[%s2614 + $0x1c] sm:$0x1]
      %v3311 = vld [vmem:[%s2614 + $0x20] sm:$0xf]
      %v3312 = vld [vmem:[%s2614 + $0x24] sm:$0x1]
      %v3313 = vld [vmem:[%s2614 + $0x28] sm:$0xf]
      %v3314 = vld [vmem:[%s2614 + $0x2c] sm:$0x1]
      %v3315 = vld [vmem:[%s2614 + $0x30] sm:$0xf]
      %v3316 = vld [vmem:[%s2614 + $0x34] sm:$0x1]
      %v3317 = vld [vmem:[%s2614 + $0x38] sm:$0xf]
      %v3318 = vld [vmem:[%s2614 + $0x3c] sm:$0x1]
      %v3320 = vshrl.u32 %v3303, 16
      %v3322 = vrot.slane %v3320, 4
      %v3323 = vshll.u32 %v3303, 16
      %v3325 = vrot.slane %v3323, 5
      %v3326 = vor.u32 %v3322, %v3325
      %v3327 = vrot.slane %v3326, 4
      %v3329 = vshll.u32 %v3304, 16
      %v3331 = vrot.slane %v3329, 5
      %v3332 = vsel %vm745, %v3327, %v3331
      %v3334 = vshrl.u32 %v3305, 16
      %v3336 = vrot.slane %v3334, 4
      %v3337 = vshll.u32 %v3305, 16
      %v3339 = vrot.slane %v3337, 5
      %v3340 = vor.u32 %v3336, %v3339
      %v3341 = vrot.slane %v3340, 4
      %v3343 = vshll.u32 %v3306, 16
      %v3345 = vrot.slane %v3343, 5
      %v3346 = vsel %vm745, %v3341, %v3345
      %v3348 = vshrl.u32 %v3307, 16
      %v3350 = vrot.slane %v3348, 4
      %v3351 = vshll.u32 %v3307, 16
      %v3353 = vrot.slane %v3351, 5
      %v3354 = vor.u32 %v3350, %v3353
      %v3355 = vrot.slane %v3354, 4
      %v3357 = vshll.u32 %v3308, 16
      %v3359 = vrot.slane %v3357, 5
      %v3360 = vsel %vm745, %v3355, %v3359
      %v3362 = vshrl.u32 %v3309, 16
      %v3364 = vrot.slane %v3362, 4
      %v3365 = vshll.u32 %v3309, 16
      %v3367 = vrot.slane %v3365, 5
      %v3368 = vor.u32 %v3364, %v3367
      %v3369 = vrot.slane %v3368, 4
      %v3371 = vshll.u32 %v3310, 16
      %v3373 = vrot.slane %v3371, 5
      %v3374 = vsel %vm745, %v3369, %v3373
      %v3376 = vshrl.u32 %v3311, 16
      %v3378 = vrot.slane %v3376, 4
      %v3379 = vshll.u32 %v3311, 16
      %v3381 = vrot.slane %v3379, 5
      %v3382 = vor.u32 %v3378, %v3381
      %v3383 = vrot.slane %v3382, 4
      %v3385 = vshll.u32 %v3312, 16
      %v3387 = vrot.slane %v3385, 5
      %v3388 = vsel %vm745, %v3383, %v3387
      %v3390 = vshrl.u32 %v3313, 16
      %v3392 = vrot.slane %v3390, 4
      %v3393 = vshll.u32 %v3313, 16
      %v3395 = vrot.slane %v3393, 5
      %v3396 = vor.u32 %v3392, %v3395
      %v3397 = vrot.slane %v3396, 4
      %v3399 = vshll.u32 %v3314, 16
      %v3401 = vrot.slane %v3399, 5
      %v3402 = vsel %vm745, %v3397, %v3401
      %v3404 = vshrl.u32 %v3315, 16
      %v3406 = vrot.slane %v3404, 4
      %v3407 = vshll.u32 %v3315, 16
      %v3409 = vrot.slane %v3407, 5
      %v3410 = vor.u32 %v3406, %v3409
      %v3411 = vrot.slane %v3410, 4
      %v3413 = vshll.u32 %v3316, 16
      %v3415 = vrot.slane %v3413, 5
      %v3416 = vsel %vm745, %v3411, %v3415
      %v3418 = vshrl.u32 %v3317, 16
      %v3420 = vrot.slane %v3418, 4
      %v3421 = vshll.u32 %v3317, 16
      %v3423 = vrot.slane %v3421, 5
      %v3424 = vor.u32 %v3420, %v3423
      %v3425 = vrot.slane %v3424, 4
      %v3427 = vshll.u32 %v3318, 16
      %v3429 = vrot.slane %v3427, 5
      %v3430 = vsel %vm745, %v3425, %v3429
      %s3431 = scalar_lea.vmem %s4, 16
      %v3432 = vld [vmem:[%s3431] sm:$0xf]
      %v3433 = vunpack.c.l.b16 %v3332
      %v3434 = vunpack.c.l.b16 %v3346
      %v3435 = vunpack.c.l.b16 %v3360
      %v3436 = vunpack.c.l.b16 %v3374
      %v3437 = vunpack.c.l.b16 %v3388
      %v3438 = vunpack.c.l.b16 %v3402
      %v3439 = vunpack.c.l.b16 %v3416
      %v3440 = vunpack.c.l.b16 %v3430
      %v3441 = vpack.c.b16 %v3434, %v3433
      %v3442 = vpack.c.b16 %v3436, %v3435
      %v3443 = vpack.c.b16 %v3438, %v3437
      %v3444 = vpack.c.b16 %v3440, %v3439
      %v3446 = vsel %vm2842, %v3441, 0
      %v3449 = vsel %vm2842, %v3442, 0
      %v3452 = vsel %vm2842, %v3443, 0
      %v3455 = vsel %vm2842, %v3444, 0
      %v3458 = vsel %vm2855, %v3432, 0
      %3460 = vmatprep.subr.bf16.mxu0 0
      %3461 = vmatpush1.bf16.msra.mxu0 %v3458
      %3462 = vmatprep.subr.bf16.mxu0 0
      %3463 = vmatpush1.bf16.msra.mxu0 0
      %3464 = vmatprep.subr.bf16.mxu0 0
      %3465 = vmatpush1.bf16.msra.mxu0 0
      %3466 = vmatprep.subr.bf16.mxu0 0
      %3467 = vmatpush1.bf16.msra.mxu0 0
      %3468 = vmatprep.subr.bf16.mxu0 0
      %3469 = vmatpush1.bf16.msra.mxu0 0
      %3470 = vmatprep.subr.bf16.mxu0 0
      %3471 = vmatpush1.bf16.msra.mxu0 0
      %3472 = vmatprep.subr.bf16.mxu0 0
      %3473 = vmatpush1.bf16.msra.mxu0 0
      %3474 = vmatprep.subr.bf16.mxu0 0
      %3475 = vmatpush1.bf16.msra.mxu0 0
      %3476 = vmatprep.subr.bf16.mxu0 0
      %3477 = vmatpush1.bf16.msra.mxu0 0
      %3478 = vmatprep.subr.bf16.mxu0 0
      %3479 = vmatpush1.bf16.msra.mxu0 0
      %3480 = vmatprep.subr.bf16.mxu0 0
      %3481 = vmatpush1.bf16.msra.mxu0 0
      %3482 = vmatprep.subr.bf16.mxu0 0
      %3483 = vmatpush1.bf16.msra.mxu0 0
      %3484 = vmatprep.subr.bf16.mxu0 0
      %3485 = vmatpush1.bf16.msra.mxu0 0
      %3486 = vmatprep.subr.bf16.mxu0 0
      %3487 = vmatpush1.bf16.msra.mxu0 0
      %3488 = vmatprep.subr.bf16.mxu0 0
      %3489 = vmatpush1.bf16.msra.mxu0 0
      %3490 = vmatprep.subr.bf16.mxu0 0
      %3491 = vmatpush1.bf16.msra.mxu0 0
      %3492 = vmatprep.mubr.bf16.mxu0 0
      %3493 = vmatmul.mubr.bf16.gmra.mrb[0].mxu0 %v3446
      %v3494 = vpop.f32.mrb[0].mxu0
      %v3495 = vadd.f32 0.0, %v3494
      %v3496 = vpop.f32.mrb[0].mxu0
      %v3497 = vpop.f32.mrb[0].mxu0
      %v3498 = vadd.f32 0.0, %v3497
      %v3499 = vpop.f32.mrb[0].mxu0
      %3500 = vmatprep.mubr.bf16.mxu0 0
      %3501 = vmatmul.mubr.bf16.gmra.mrb[0].mxu0 %v3449
      %v3502 = vpop.f32.mrb[0].mxu0
      %v3503 = vadd.f32 0.0, %v3502
      %v3504 = vpop.f32.mrb[0].mxu0
      %v3505 = vpop.f32.mrb[0].mxu0
      %v3506 = vadd.f32 0.0, %v3505
      %v3507 = vpop.f32.mrb[0].mxu0
      %3508 = vmatprep.mubr.bf16.mxu0 0
      %3509 = vmatmul.mubr.bf16.gmra.mrb[0].mxu0 %v3452
      %v3510 = vpop.f32.mrb[0].mxu0
      %v3511 = vadd.f32 0.0, %v3510
      %v3512 = vpop.f32.mrb[0].mxu0
      %v3513 = vpop.f32.mrb[0].mxu0
      %v3514 = vadd.f32 0.0, %v3513
      %v3515 = vpop.f32.mrb[0].mxu0
      %3516 = vmatprep.mubr.bf16.mxu0 0
      %3517 = vmatmul.mubr.bf16.gmra.mrb[0].mxu0 %v3455
      %v3518 = vpop.f32.mrb[0].mxu0
      %v3519 = vadd.f32 0.0, %v3518
      %v3520 = vpop.f32.mrb[0].mxu0
      %v3521 = vpop.f32.mrb[0].mxu0
      %v3522 = vadd.f32 0.0, %v3521
      %v3523 = vpop.f32.mrb[0].mxu0
      %3524 = vdwg.mxu0
      %v3525 = vadd.f32 %v3295, %v3495
      %v3526 = vadd.f32 %v3296, %v3498
      %v3527 = vadd.f32 %v3297, %v3503
      %v3528 = vadd.f32 %v3298, %v3506
      %v3529 = vadd.f32 %v3299, %v3511
      %v3530 = vadd.f32 %v3300, %v3514
      %v3531 = vadd.f32 %v3301, %v3519
      %v3532 = vadd.f32 %v3302, %v3522
      %v3533 = vld [vmem:[%s2614] sm:$0xe]
      %v3534 = vld [vmem:[%s2614 + $0x8] sm:$0xe]
      %v3535 = vld [vmem:[%s2614 + $0x10] sm:$0xe]
      %v3536 = vld [vmem:[%s2614 + $0x18] sm:$0xe]
      %v3537 = vld [vmem:[%s2614 + $0x20] sm:$0xe]
      %v3538 = vld [vmem:[%s2614 + $0x28] sm:$0xe]
      %v3539 = vld [vmem:[%s2614 + $0x30] sm:$0xe]
      %v3540 = vld [vmem:[%s2614 + $0x38] sm:$0xe]
      %v3557 = vrot.slane %v3533, 5
      %v3558 = vrot.slane %v3557, 4
      %v3559 = vrot.slane %v3304, 5
      %v3560 = vsel %vm3050, %v3558, %v3559
      %v3561 = vrot.slane %v3534, 5
      %v3562 = vrot.slane %v3561, 4
      %v3563 = vrot.slane %v3306, 5
      %v3564 = vsel %vm3050, %v3562, %v3563
      %v3565 = vrot.slane %v3535, 5
      %v3566 = vrot.slane %v3565, 4
      %v3567 = vrot.slane %v3308, 5
      %v3568 = vsel %vm3050, %v3566, %v3567
      %v3569 = vrot.slane %v3536, 5
      %v3570 = vrot.slane %v3569, 4
      %v3571 = vrot.slane %v3310, 5
      %v3572 = vsel %vm3050, %v3570, %v3571
      %v3573 = vrot.slane %v3537, 5
      %v3574 = vrot.slane %v3573, 4
      %v3575 = vrot.slane %v3312, 5
      %v3576 = vsel %vm3050, %v3574, %v3575
      %v3577 = vrot.slane %v3538, 5
      %v3578 = vrot.slane %v3577, 4
      %v3579 = vrot.slane %v3314, 5
      %v3580 = vsel %vm3050, %v3578, %v3579
      %v3581 = vrot.slane %v3539, 5
      %v3582 = vrot.slane %v3581, 4
      %v3583 = vrot.slane %v3316, 5
      %v3584 = vsel %vm3050, %v3582, %v3583
      %v3585 = vrot.slane %v3540, 5
      %v3586 = vrot.slane %v3585, 4
      %v3587 = vrot.slane %v3318, 5
      %v3588 = vsel %vm3050, %v3586, %v3587
      %s3589 = scalar_lea.vmem %s4, 20
      %v3590 = vld [vmem:[%s3589] sm:$0xf]
      %v3591 = vunpack.c.l.b16 %v3560
      %v3592 = vunpack.c.l.b16 %v3564
      %v3593 = vunpack.c.l.b16 %v3568
      %v3594 = vunpack.c.l.b16 %v3572
      %v3595 = vunpack.c.l.b16 %v3576
      %v3596 = vunpack.c.l.b16 %v3580
      %v3597 = vunpack.c.l.b16 %v3584
      %v3598 = vunpack.c.l.b16 %v3588
      %v3599 = vpack.c.b16 %v3592, %v3591
      %v3600 = vpack.c.b16 %v3594, %v3593
      %v3601 = vpack.c.b16 %v3596, %v3595
      %v3602 = vpack.c.b16 %v3598, %v3597
      %v3604 = vsel %vm2842, %v3599, 0
      %v3607 = vsel %vm2842, %v3600, 0
      %v3610 = vsel %vm2842, %v3601, 0
      %v3613 = vsel %vm2842, %v3602, 0
      %v3616 = vsel %vm2855, %v3590, 0
      %3618 = vmatprep.subr.bf16.mxu0 0
      %3619 = vmatpush1.bf16.msra.mxu0 %v3616
      %3620 = vmatprep.subr.bf16.mxu0 0
      %3621 = vmatpush1.bf16.msra.mxu0 0
      %3622 = vmatprep.subr.bf16.mxu0 0
      %3623 = vmatpush1.bf16.msra.mxu0 0
      %3624 = vmatprep.subr.bf16.mxu0 0
      %3625 = vmatpush1.bf16.msra.mxu0 0
      %3626 = vmatprep.subr.bf16.mxu0 0
      %3627 = vmatpush1.bf16.msra.mxu0 0
      %3628 = vmatprep.subr.bf16.mxu0 0
      %3629 = vmatpush1.bf16.msra.mxu0 0
      %3630 = vmatprep.subr.bf16.mxu0 0
      %3631 = vmatpush1.bf16.msra.mxu0 0
      %3632 = vmatprep.subr.bf16.mxu0 0
      %3633 = vmatpush1.bf16.msra.mxu0 0
      %3634 = vmatprep.subr.bf16.mxu0 0
      %3635 = vmatpush1.bf16.msra.mxu0 0
      %3636 = vmatprep.subr.bf16.mxu0 0
      %3637 = vmatpush1.bf16.msra.mxu0 0
      %3638 = vmatprep.subr.bf16.mxu0 0
      %3639 = vmatpush1.bf16.msra.mxu0 0
      %3640 = vmatprep.subr.bf16.mxu0 0
      %3641 = vmatpush1.bf16.msra.mxu0 0
      %3642 = vmatprep.subr.bf16.mxu0 0
      %3643 = vmatpush1.bf16.msra.mxu0 0
      %3644 = vmatprep.subr.bf16.mxu0 0
      %3645 = vmatpush1.bf16.msra.mxu0 0
      %3646 = vmatprep.subr.bf16.mxu0 0
      %3647 = vmatpush1.bf16.msra.mxu0 0
      %3648 = vmatprep.subr.bf16.mxu0 0
      %3649 = vmatpush1.bf16.msra.mxu0 0
      %3650 = vmatprep.mubr.bf16.mxu0 0
      %3651 = vmatmul.mubr.bf16.gmra.mrb[0].mxu0 %v3604
      %v3652 = vpop.f32.mrb[0].mxu0
      %v3653 = vadd.f32 0.0, %v3652
      %v3654 = vpop.f32.mrb[0].mxu0
      %v3655 = vpop.f32.mrb[0].mxu0
      %v3656 = vadd.f32 0.0, %v3655
      %v3657 = vpop.f32.mrb[0].mxu0
      %3658 = vmatprep.mubr.bf16.mxu0 0
      %3659 = vmatmul.mubr.bf16.gmra.mrb[0].mxu0 %v3607
      %v3660 = vpop.f32.mrb[0].mxu0
      %v3661 = vadd.f32 0.0, %v3660
      %v3662 = vpop.f32.mrb[0].mxu0
      %v3663 = vpop.f32.mrb[0].mxu0
      %v3664 = vadd.f32 0.0, %v3663
      %v3665 = vpop.f32.mrb[0].mxu0
      %3666 = vmatprep.mubr.bf16.mxu0 0
      %3667 = vmatmul.mubr.bf16.gmra.mrb[0].mxu0 %v3610
      %v3668 = vpop.f32.mrb[0].mxu0
      %v3669 = vadd.f32 0.0, %v3668
      %v3670 = vpop.f32.mrb[0].mxu0
      %v3671 = vpop.f32.mrb[0].mxu0
      %v3672 = vadd.f32 0.0, %v3671
      %v3673 = vpop.f32.mrb[0].mxu0
      %3674 = vmatprep.mubr.bf16.mxu0 0
      %3675 = vmatmul.mubr.bf16.gmra.mrb[0].mxu0 %v3613
      %v3676 = vpop.f32.mrb[0].mxu0
      %v3677 = vadd.f32 0.0, %v3676
      %v3678 = vpop.f32.mrb[0].mxu0
      %v3679 = vpop.f32.mrb[0].mxu0
      %v3680 = vadd.f32 0.0, %v3679
      %v3681 = vpop.f32.mrb[0].mxu0
      %3682 = vdwg.mxu0
      %v3683 = vadd.f32 %v3525, %v3653
      %v3684 = vadd.f32 %v3526, %v3656
      %v3685 = vadd.f32 %v3527, %v3661
      %v3686 = vadd.f32 %v3528, %v3664
      %v3687 = vadd.f32 %v3529, %v3669
      %v3688 = vadd.f32 %v3530, %v3672
      %v3689 = vadd.f32 %v3531, %v3677
      %v3690 = vadd.f32 %v3532, %v3680
      %s3691 = scalar_lea.vmem [#allocation2], 16
      %v3692 = vld [vmem:[%s3691] sm:$0xf]
      %v3693 = vld [vmem:[%s3691 + $0x8] sm:$0xf]
      %v3694 = vld [vmem:[%s3691 + $0x10] sm:$0xf]
      %v3695 = vld [vmem:[%s3691 + $0x18] sm:$0xf]
      %v3696 = vld [vmem:[%s3691 + $0x20] sm:$0xf]
      %v3697 = vld [vmem:[%s3691 + $0x28] sm:$0xf]
      %v3698 = vld [vmem:[%s3691 + $0x30] sm:$0xf]
      %v3699 = vld [vmem:[%s3691 + $0x38] sm:$0xf]
      %s3700 = scalar_lea.vmem %s4, 24
      %v3701 = vld [vmem:[%s3700] sm:$0xf]
      %v3710 = vunpack.c.l.b16 %v3692
      %v3711 = vunpack.c.l.b16 %v3693
      %v3712 = vunpack.c.l.b16 %v3694
      %v3713 = vunpack.c.l.b16 %v3695
      %v3714 = vunpack.c.l.b16 %v3696
      %v3715 = vunpack.c.l.b16 %v3697
      %v3716 = vunpack.c.l.b16 %v3698
      %v3717 = vunpack.c.l.b16 %v3699
      %v3718 = vpack.c.b16 %v3711, %v3710
      %v3719 = vpack.c.b16 %v3713, %v3712
      %v3720 = vpack.c.b16 %v3715, %v3714
      %v3721 = vpack.c.b16 %v3717, %v3716
      %v3723 = vsel %vm2842, %v3718, 0
      %v3726 = vsel %vm2842, %v3719, 0
      %v3729 = vsel %vm2842, %v3720, 0
      %v3732 = vsel %vm2842, %v3721, 0
      %v3735 = vsel %vm2855, %v3701, 0
      %3737 = vmatprep.subr.bf16.mxu0 0
      %3738 = vmatpush1.bf16.msra.mxu0 %v3735
      %3739 = vmatprep.subr.bf16.mxu0 0
      %3740 = vmatpush1.bf16.msra.mxu0 0
      %3741 = vmatprep.subr.bf16.mxu0 0
      %3742 = vmatpush1.bf16.msra.mxu0 0
      %3743 = vmatprep.subr.bf16.mxu0 0
      %3744 = vmatpush1.bf16.msra.mxu0 0
      %3745 = vmatprep.subr.bf16.mxu0 0
      %3746 = vmatpush1.bf16.msra.mxu0 0
      %3747 = vmatprep.subr.bf16.mxu0 0
      %3748 = vmatpush1.bf16.msra.mxu0 0
      %3749 = vmatprep.subr.bf16.mxu0 0
      %3750 = vmatpush1.bf16.msra.mxu0 0
      %3751 = vmatprep.subr.bf16.mxu0 0
      %3752 = vmatpush1.bf16.msra.mxu0 0
      %3753 = vmatprep.subr.bf16.mxu0 0
      %3754 = vmatpush1.bf16.msra.mxu0 0
      %3755 = vmatprep.subr.bf16.mxu0 0
      %3756 = vmatpush1.bf16.msra.mxu0 0
      %3757 = vmatprep.subr.bf16.mxu0 0
      %3758 = vmatpush1.bf16.msra.mxu0 0
      %3759 = vmatprep.subr.bf16.mxu0 0
      %3760 = vmatpush1.bf16.msra.mxu0 0
      %3761 = vmatprep.subr.bf16.mxu0 0
      %3762 = vmatpush1.bf16.msra.mxu0 0
      %3763 = vmatprep.subr.bf16.mxu0 0
      %3764 = vmatpush1.bf16.msra.mxu0 0
      %3765 = vmatprep.subr.bf16.mxu0 0
      %3766 = vmatpush1.bf16.msra.mxu0 0
      %3767 = vmatprep.subr.bf16.mxu0 0
      %3768 = vmatpush1.bf16.msra.mxu0 0
      %3769 = vmatprep.mubr.bf16.mxu0 0
      %3770 = vmatmul.mubr.bf16.gmra.mrb[0].mxu0 %v3723
      %v3771 = vpop.f32.mrb[0].mxu0
      %v3772 = vadd.f32 0.0, %v3771
      %v3773 = vpop.f32.mrb[0].mxu0
      %v3774 = vpop.f32.mrb[0].mxu0
      %v3775 = vadd.f32 0.0, %v3774
      %v3776 = vpop.f32.mrb[0].mxu0
      %3777 = vmatprep.mubr.bf16.mxu0 0
      %3778 = vmatmul.mubr.bf16.gmra.mrb[0].mxu0 %v3726
      %v3779 = vpop.f32.mrb[0].mxu0
      %v3780 = vadd.f32 0.0, %v3779
      %v3781 = vpop.f32.mrb[0].mxu0
      %v3782 = vpop.f32.mrb[0].mxu0
      %v3783 = vadd.f32 0.0, %v3782
      %v3784 = vpop.f32.mrb[0].mxu0
      %3785 = vmatprep.mubr.bf16.mxu0 0
      %3786 = vmatmul.mubr.bf16.gmra.mrb[0].mxu0 %v3729
      %v3787 = vpop.f32.mrb[0].mxu0
      %v3788 = vadd.f32 0.0, %v3787
      %v3789 = vpop.f32.mrb[0].mxu0
      %v3790 = vpop.f32.mrb[0].mxu0
      %v3791 = vadd.f32 0.0, %v3790
      %v3792 = vpop.f32.mrb[0].mxu0
      %3793 = vmatprep.mubr.bf16.mxu0 0
      %3794 = vmatmul.mubr.bf16.gmra.mrb[0].mxu0 %v3732
      %v3795 = vpop.f32.mrb[0].mxu0
      %v3796 = vadd.f32 0.0, %v3795
      %v3797 = vpop.f32.mrb[0].mxu0
      %v3798 = vpop.f32.mrb[0].mxu0
      %v3799 = vadd.f32 0.0, %v3798
      %v3800 = vpop.f32.mrb[0].mxu0
      %3801 = vdwg.mxu0
      %v3802 = vadd.f32 %v3683, %v3772
      %v3803 = vadd.f32 %v3684, %v3775
      %v3804 = vadd.f32 %v3685, %v3780
      %v3805 = vadd.f32 %v3686, %v3783
      %v3806 = vadd.f32 %v3687, %v3788
      %v3807 = vadd.f32 %v3688, %v3791
      %v3808 = vadd.f32 %v3689, %v3796
      %v3809 = vadd.f32 %v3690, %v3799
      %v3810 = vld [vmem:[%s3691] sm:$0xf]
      %v3811 = vld [vmem:[%s3691 + $0x4] sm:$0x1]
      %v3812 = vld [vmem:[%s3691 + $0x8] sm:$0xf]
      %v3813 = vld [vmem:[%s3691 + $0xc] sm:$0x1]
      %v3814 = vld [vmem:[%s3691 + $0x10] sm:$0xf]
      %v3815 = vld [vmem:[%s3691 + $0x14] sm:$0x1]
      %v3816 = vld [vmem:[%s3691 + $0x18] sm:$0xf]
      %v3817 = vld [vmem:[%s3691 + $0x1c] sm:$0x1]
      %v3818 = vld [vmem:[%s3691 + $0x20] sm:$0xf]
      %v3819 = vld [vmem:[%s3691 + $0x24] sm:$0x1]
      %v3820 = vld [vmem:[%s3691 + $0x28] sm:$0xf]
      %v3821 = vld [vmem:[%s3691 + $0x2c] sm:$0x1]
      %v3822 = vld [vmem:[%s3691 + $0x30] sm:$0xf]
      %v3823 = vld [vmem:[%s3691 + $0x34] sm:$0x1]
      %v3824 = vld [vmem:[%s3691 + $0x38] sm:$0xf]
      %v3825 = vld [vmem:[%s3691 + $0x3c] sm:$0x1]
      %v3827 = vshrl.u32 %v3810, 16
      %v3829 = vrot.slane %v3827, 4
      %v3830 = vshll.u32 %v3810, 16
      %v3832 = vrot.slane %v3830, 5
      %v3833 = vor.u32 %v3829, %v3832
      %v3834 = vrot.slane %v3833, 4
      %v3836 = vshll.u32 %v3811, 16
      %v3838 = vrot.slane %v3836, 5
      %v3839 = vsel %vm745, %v3834, %v3838
      %v3841 = vshrl.u32 %v3812, 16
      %v3843 = vrot.slane %v3841, 4
      %v3844 = vshll.u32 %v3812, 16
      %v3846 = vrot.slane %v3844, 5
      %v3847 = vor.u32 %v3843, %v3846
      %v3848 = vrot.slane %v3847, 4
      %v3850 = vshll.u32 %v3813, 16
      %v3852 = vrot.slane %v3850, 5
      %v3853 = vsel %vm745, %v3848, %v3852
      %v3855 = vshrl.u32 %v3814, 16
      %v3857 = vrot.slane %v3855, 4
      %v3858 = vshll.u32 %v3814, 16
      %v3860 = vrot.slane %v3858, 5
      %v3861 = vor.u32 %v3857, %v3860
      %v3862 = vrot.slane %v3861, 4
      %v3864 = vshll.u32 %v3815, 16
      %v3866 = vrot.slane %v3864, 5
      %v3867 = vsel %vm745, %v3862, %v3866
      %v3869 = vshrl.u32 %v3816, 16
      %v3871 = vrot.slane %v3869, 4
      %v3872 = vshll.u32 %v3816, 16
      %v3874 = vrot.slane %v3872, 5
      %v3875 = vor.u32 %v3871, %v3874
      %v3876 = vrot.slane %v3875, 4
      %v3878 = vshll.u32 %v3817, 16
      %v3880 = vrot.slane %v3878, 5
      %v3881 = vsel %vm745, %v3876, %v3880
      %v3883 = vshrl.u32 %v3818, 16
      %v3885 = vrot.slane %v3883, 4
      %v3886 = vshll.u32 %v3818, 16
      %v3888 = vrot.slane %v3886, 5
      %v3889 = vor.u32 %v3885, %v3888
      %v3890 = vrot.slane %v3889, 4
      %v3892 = vshll.u32 %v3819, 16
      %v3894 = vrot.slane %v3892, 5
      %v3895 = vsel %vm745, %v3890, %v3894
      %v3897 = vshrl.u32 %v3820, 16
      %v3899 = vrot.slane %v3897, 4
      %v3900 = vshll.u32 %v3820, 16
      %v3902 = vrot.slane %v3900, 5
      %v3903 = vor.u32 %v3899, %v3902
      %v3904 = vrot.slane %v3903, 4
      %v3906 = vshll.u32 %v3821, 16
      %v3908 = vrot.slane %v3906, 5
      %v3909 = vsel %vm745, %v3904, %v3908
      %v3911 = vshrl.u32 %v3822, 16
      %v3913 = vrot.slane %v3911, 4
      %v3914 = vshll.u32 %v3822, 16
      %v3916 = vrot.slane %v3914, 5
      %v3917 = vor.u32 %v3913, %v3916
      %v3918 = vrot.slane %v3917, 4
      %v3920 = vshll.u32 %v3823, 16
      %v3922 = vrot.slane %v3920, 5
      %v3923 = vsel %vm745, %v3918, %v3922
      %v3925 = vshrl.u32 %v3824, 16
      %v3927 = vrot.slane %v3925, 4
      %v3928 = vshll.u32 %v3824, 16
      %v3930 = vrot.slane %v3928, 5
      %v3931 = vor.u32 %v3927, %v3930
      %v3932 = vrot.slane %v3931, 4
      %v3934 = vshll.u32 %v3825, 16
      %v3936 = vrot.slane %v3934, 5
      %v3937 = vsel %vm745, %v3932, %v3936
      %s3938 = scalar_lea.vmem %s4, 28
      %v3939 = vld [vmem:[%s3938] sm:$0xf]
      %v3940 = vunpack.c.l.b16 %v3839
      %v3941 = vunpack.c.l.b16 %v3853
      %v3942 = vunpack.c.l.b16 %v3867
      %v3943 = vunpack.c.l.b16 %v3881
      %v3944 = vunpack.c.l.b16 %v3895
      %v3945 = vunpack.c.l.b16 %v3909
      %v3946 = vunpack.c.l.b16 %v3923
      %v3947 = vunpack.c.l.b16 %v3937
      %v3948 = vpack.c.b16 %v3941, %v3940
      %v3949 = vpack.c.b16 %v3943, %v3942
      %v3950 = vpack.c.b16 %v3945, %v3944
      %v3951 = vpack.c.b16 %v3947, %v3946
      %v3953 = vsel %vm2842, %v3948, 0
      %v3956 = vsel %vm2842, %v3949, 0
      %v3959 = vsel %vm2842, %v3950, 0
      %v3962 = vsel %vm2842, %v3951, 0
      %v3965 = vsel %vm2855, %v3939, 0
      %3967 = vmatprep.subr.bf16.mxu0 0
      %3968 = vmatpush1.bf16.msra.mxu0 %v3965
      %3969 = vmatprep.subr.bf16.mxu0 0
      %3970 = vmatpush1.bf16.msra.mxu0 0
      %3971 = vmatprep.subr.bf16.mxu0 0
      %3972 = vmatpush1.bf16.msra.mxu0 0
      %3973 = vmatprep.subr.bf16.mxu0 0
      %3974 = vmatpush1.bf16.msra.mxu0 0
      %3975 = vmatprep.subr.bf16.mxu0 0
      %3976 = vmatpush1.bf16.msra.mxu0 0
      %3977 = vmatprep.subr.bf16.mxu0 0
      %3978 = vmatpush1.bf16.msra.mxu0 0
      %3979 = vmatprep.subr.bf16.mxu0 0
      %3980 = vmatpush1.bf16.msra.mxu0 0
      %3981 = vmatprep.subr.bf16.mxu0 0
      %3982 = vmatpush1.bf16.msra.mxu0 0
      %3983 = vmatprep.subr.bf16.mxu0 0
      %3984 = vmatpush1.bf16.msra.mxu0 0
      %3985 = vmatprep.subr.bf16.mxu0 0
      %3986 = vmatpush1.bf16.msra.mxu0 0
      %3987 = vmatprep.subr.bf16.mxu0 0
      %3988 = vmatpush1.bf16.msra.mxu0 0
      %3989 = vmatprep.subr.bf16.mxu0 0
      %3990 = vmatpush1.bf16.msra.mxu0 0
      %3991 = vmatprep.subr.bf16.mxu0 0
      %3992 = vmatpush1.bf16.msra.mxu0 0
      %3993 = vmatprep.subr.bf16.mxu0 0
      %3994 = vmatpush1.bf16.msra.mxu0 0
      %3995 = vmatprep.subr.bf16.mxu0 0
      %3996 = vmatpush1.bf16.msra.mxu0 0
      %3997 = vmatprep.subr.bf16.mxu0 0
      %3998 = vmatpush1.bf16.msra.mxu0 0
      %3999 = vmatprep.mubr.bf16.mxu0 0
      %4000 = vmatmul.mubr.bf16.gmra.mrb[0].mxu0 %v3953
      %v4001 = vpop.f32.mrb[0].mxu0
      %v4002 = vadd.f32 0.0, %v4001
      %v4003 = vpop.f32.mrb[0].mxu0
      %v4004 = vpop.f32.mrb[0].mxu0
      %v4005 = vadd.f32 0.0, %v4004
      %v4006 = vpop.f32.mrb[0].mxu0
      %4007 = vmatprep.mubr.bf16.mxu0 0
      %4008 = vmatmul.mubr.bf16.gmra.mrb[0].mxu0 %v3956
      %v4009 = vpop.f32.mrb[0].mxu0
      %v4010 = vadd.f32 0.0, %v4009
      %v4011 = vpop.f32.mrb[0].mxu0
      %v4012 = vpop.f32.mrb[0].mxu0
      %v4013 = vadd.f32 0.0, %v4012
      %v4014 = vpop.f32.mrb[0].mxu0
      %4015 = vmatprep.mubr.bf16.mxu0 0
      %4016 = vmatmul.mubr.bf16.gmra.mrb[0].mxu0 %v3959
      %v4017 = vpop.f32.mrb[0].mxu0
      %v4018 = vadd.f32 0.0, %v4017
      %v4019 = vpop.f32.mrb[0].mxu0
      %v4020 = vpop.f32.mrb[0].mxu0
      %v4021 = vadd.f32 0.0, %v4020
      %v4022 = vpop.f32.mrb[0].mxu0
      %4023 = vmatprep.mubr.bf16.mxu0 0
      %4024 = vmatmul.mubr.bf16.gmra.mrb[0].mxu0 %v3962
      %v4025 = vpop.f32.mrb[0].mxu0
      %v4026 = vadd.f32 0.0, %v4025
      %v4027 = vpop.f32.mrb[0].mxu0
      %v4028 = vpop.f32.mrb[0].mxu0
      %v4029 = vadd.f32 0.0, %v4028
      %v4030 = vpop.f32.mrb[0].mxu0
      %4031 = vdwg.mxu0
      %v4032 = vadd.f32 %v3802, %v4002
      %v4033 = vadd.f32 %v3803, %v4005
      %v4034 = vadd.f32 %v3804, %v4010
      %v4035 = vadd.f32 %v3805, %v4013
      %v4036 = vadd.f32 %v3806, %v4018
      %v4037 = vadd.f32 %v3807, %v4021
      %v4038 = vadd.f32 %v3808, %v4026
      %v4039 = vadd.f32 %v3809, %v4029
      %v4040 = vld [vmem:[%s3691] sm:$0xe]
      %v4041 = vld [vmem:[%s3691 + $0x8] sm:$0xe]
      %v4042 = vld [vmem:[%s3691 + $0x10] sm:$0xe]
      %v4043 = vld [vmem:[%s3691 + $0x18] sm:$0xe]
      %v4044 = vld [vmem:[%s3691 + $0x20] sm:$0xe]
      %v4045 = vld [vmem:[%s3691 + $0x28] sm:$0xe]
      %v4046 = vld [vmem:[%s3691 + $0x30] sm:$0xe]
      %v4047 = vld [vmem:[%s3691 + $0x38] sm:$0xe]
      %v4064 = vrot.slane %v4040, 5
      %v4065 = vrot.slane %v4064, 4
      %v4066 = vrot.slane %v3811, 5
      %v4067 = vsel %vm3050, %v4065, %v4066
      %v4068 = vrot.slane %v4041, 5
      %v4069 = vrot.slane %v4068, 4
      %v4070 = vrot.slane %v3813, 5
      %v4071 = vsel %vm3050, %v4069, %v4070
      %v4072 = vrot.slane %v4042, 5
      %v4073 = vrot.slane %v4072, 4
      %v4074 = vrot.slane %v3815, 5
      %v4075 = vsel %vm3050, %v4073, %v4074
      %v4076 = vrot.slane %v4043, 5
      %v4077 = vrot.slane %v4076, 4
      %v4078 = vrot.slane %v3817, 5
      %v4079 = vsel %vm3050, %v4077, %v4078
      %v4080 = vrot.slane %v4044, 5
      %v4081 = vrot.slane %v4080, 4
      %v4082 = vrot.slane %v3819, 5
      %v4083 = vsel %vm3050, %v4081, %v4082
      %v4084 = vrot.slane %v4045, 5
      %v4085 = vrot.slane %v4084, 4
      %v4086 = vrot.slane %v3821, 5
      %v4087 = vsel %vm3050, %v4085, %v4086
      %v4088 = vrot.slane %v4046, 5
      %v4089 = vrot.slane %v4088, 4
      %v4090 = vrot.slane %v3823, 5
      %v4091 = vsel %vm3050, %v4089, %v4090
      %v4092 = vrot.slane %v4047, 5
      %v4093 = vrot.slane %v4092, 4
      %v4094 = vrot.slane %v3825, 5
      %v4095 = vsel %vm3050, %v4093, %v4094
      %s4096 = scalar_lea.vmem %s4, 32
      %v4097 = vld [vmem:[%s4096] sm:$0xf]
      %v4098 = vunpack.c.l.b16 %v4067
      %v4099 = vunpack.c.l.b16 %v4071
      %v4100 = vunpack.c.l.b16 %v4075
      %v4101 = vunpack.c.l.b16 %v4079
      %v4102 = vunpack.c.l.b16 %v4083
      %v4103 = vunpack.c.l.b16 %v4087
      %v4104 = vunpack.c.l.b16 %v4091
      %v4105 = vunpack.c.l.b16 %v4095
      %v4106 = vpack.c.b16 %v4099, %v4098
      %v4107 = vpack.c.b16 %v4101, %v4100
      %v4108 = vpack.c.b16 %v4103, %v4102
      %v4109 = vpack.c.b16 %v4105, %v4104
      %v4111 = vsel %vm2842, %v4106, 0
      %v4114 = vsel %vm2842, %v4107, 0
      %v4117 = vsel %vm2842, %v4108, 0
      %v4120 = vsel %vm2842, %v4109, 0
      %v4123 = vsel %vm2855, %v4097, 0
      %4125 = vmatprep.subr.bf16.mxu0 0
      %4126 = vmatpush1.bf16.msra.mxu0 %v4123
      %4127 = vmatprep.subr.bf16.mxu0 0
      %4128 = vmatpush1.bf16.msra.mxu0 0
      %4129 = vmatprep.subr.bf16.mxu0 0
      %4130 = vmatpush1.bf16.msra.mxu0 0
      %4131 = vmatprep.subr.bf16.mxu0 0
      %4132 = vmatpush1.bf16.msra.mxu0 0
      %4133 = vmatprep.subr.bf16.mxu0 0
      %4134 = vmatpush1.bf16.msra.mxu0 0
      %4135 = vmatprep.subr.bf16.mxu0 0
      %4136 = vmatpush1.bf16.msra.mxu0 0
      %4137 = vmatprep.subr.bf16.mxu0 0
      %4138 = vmatpush1.bf16.msra.mxu0 0
      %4139 = vmatprep.subr.bf16.mxu0 0
      %4140 = vmatpush1.bf16.msra.mxu0 0
      %4141 = vmatprep.subr.bf16.mxu0 0
      %4142 = vmatpush1.bf16.msra.mxu0 0
      %4143 = vmatprep.subr.bf16.mxu0 0
      %4144 = vmatpush1.bf16.msra.mxu0 0
      %4145 = vmatprep.subr.bf16.mxu0 0
      %4146 = vmatpush1.bf16.msra.mxu0 0
      %4147 = vmatprep.subr.bf16.mxu0 0
      %4148 = vmatpush1.bf16.msra.mxu0 0
      %4149 = vmatprep.subr.bf16.mxu0 0
      %4150 = vmatpush1.bf16.msra.mxu0 0
      %4151 = vmatprep.subr.bf16.mxu0 0
      %4152 = vmatpush1.bf16.msra.mxu0 0
      %4153 = vmatprep.subr.bf16.mxu0 0
      %4154 = vmatpush1.bf16.msra.mxu0 0
      %4155 = vmatprep.subr.bf16.mxu0 0
      %4156 = vmatpush1.bf16.msra.mxu0 0
      %4157 = vmatprep.mubr.bf16.mxu0 0
      %4158 = vmatmul.mubr.bf16.gmra.mrb[0].mxu0 %v4111
      %v4159 = vpop.f32.mrb[0].mxu0
      %v4160 = vadd.f32 0.0, %v4159
      %v4161 = vpop.f32.mrb[0].mxu0
      %v4162 = vpop.f32.mrb[0].mxu0
      %v4163 = vadd.f32 0.0, %v4162
      %v4164 = vpop.f32.mrb[0].mxu0
      %4165 = vmatprep.mubr.bf16.mxu0 0
      %4166 = vmatmul.mubr.bf16.gmra.mrb[0].mxu0 %v4114
      %v4167 = vpop.f32.mrb[0].mxu0
      %v4168 = vadd.f32 0.0, %v4167
      %v4169 = vpop.f32.mrb[0].mxu0
      %v4170 = vpop.f32.mrb[0].mxu0
      %v4171 = vadd.f32 0.0, %v4170
      %v4172 = vpop.f32.mrb[0].mxu0
      %4173 = vmatprep.mubr.bf16.mxu0 0
      %4174 = vmatmul.mubr.bf16.gmra.mrb[0].mxu0 %v4117
      %v4175 = vpop.f32.mrb[0].mxu0
      %v4176 = vadd.f32 0.0, %v4175
      %v4177 = vpop.f32.mrb[0].mxu0
      %v4178 = vpop.f32.mrb[0].mxu0
      %v4179 = vadd.f32 0.0, %v4178
      %v4180 = vpop.f32.mrb[0].mxu0
      %4181 = vmatprep.mubr.bf16.mxu0 0
      %4182 = vmatmul.mubr.bf16.gmra.mrb[0].mxu0 %v4120
      %v4183 = vpop.f32.mrb[0].mxu0
      %v4184 = vadd.f32 0.0, %v4183
      %v4185 = vpop.f32.mrb[0].mxu0
      %v4186 = vpop.f32.mrb[0].mxu0
      %v4187 = vadd.f32 0.0, %v4186
      %v4188 = vpop.f32.mrb[0].mxu0
      %4189 = vdwg.mxu0
      %v4190 = vadd.f32 %v4032, %v4160
      %v4191 = vadd.f32 %v4033, %v4163
      %v4192 = vadd.f32 %v4034, %v4168
      %v4193 = vadd.f32 %v4035, %v4171
      %v4194 = vadd.f32 %v4036, %v4176
      %v4195 = vadd.f32 %v4037, %v4179
      %v4196 = vadd.f32 %v4038, %v4184
      %v4197 = vadd.f32 %v4039, %v4187
      %v4198 = vld [vmem:[%s5] sm:$0x1]
      %v4200 = vlaneseq
      %v4201 = vshrl.u32 %v4200, 7
      %v4202 = vsub.s32 0, %v4201
      %v4203 = vrot.slane %v4198, %v4202
      %v4205 = vmul.f32 %v4190, %v4203
      %v4206 = vmul.f32 %v4191, %v4203
      %v4207 = vmul.f32 %v4192, %v4203
      %v4208 = vmul.f32 %v4193, %v4203
      %v4209 = vmul.f32 %v4194, %v4203
      %v4210 = vmul.f32 %v4195, %v4203
      %v4211 = vmul.f32 %v4196, %v4203
      %v4212 = vmul.f32 %v4197, %v4203
      %v4213 = vld [vmem:[%s6] sm:$0x1]
      %v4215 = vlaneseq
      %v4216 = vshrl.u32 %v4215, 7
      %v4217 = vsub.s32 0, %v4216
      %v4218 = vrot.slane %v4213, %v4217
      %v4220 = vadd.f32 %v4205, %v4218
      %v4221 = vadd.f32 %v4206, %v4218
      %v4222 = vadd.f32 %v4207, %v4218
      %v4223 = vadd.f32 %v4208, %v4218
      %v4224 = vadd.f32 %v4209, %v4218
      %v4225 = vadd.f32 %v4210, %v4218
      %v4226 = vadd.f32 %v4211, %v4218
      %v4227 = vadd.f32 %v4212, %v4218
      %v4228 = vadd.f32 %v4220, %v2691
      %v4229 = vadd.f32 %v4221, %v2692
      %v4230 = vadd.f32 %v4222, %v2693
      %v4231 = vadd.f32 %v4223, %v2694
      %v4232 = vadd.f32 %v4224, %v2695
      %v4233 = vadd.f32 %v4225, %v2696
      %v4234 = vadd.f32 %v4226, %v2697
      %v4235 = vadd.f32 %v4227, %v2698
      %v4236 = vmax.f32 %v4228, 0.0
      %v4237 = vmax.f32 %v4229, 0.0
      %v4238 = vmax.f32 %v4230, 0.0
      %v4239 = vmax.f32 %v4231, 0.0
      %v4240 = vmax.f32 %v4232, 0.0
      %v4241 = vmax.f32 %v4233, 0.0
      %v4242 = vmax.f32 %v4234, 0.0
      %v4243 = vmax.f32 %v4235, 0.0
      %4244 = vst.msk [vmem:[%s364] sm:$0xff] %vm2842, %v4236
      %4245 = vst.msk [vmem:[%s364 + $0x8] sm:$0xff] %vm2842, %v4237
      %4246 = vst.msk [vmem:[%s364 + $0x10] sm:$0xff] %vm2842, %v4238
      %4247 = vst.msk [vmem:[%s364 + $0x18] sm:$0xff] %vm2842, %v4239
      %4248 = vst.msk [vmem:[%s364 + $0x20] sm:$0xff] %vm2842, %v4240
      %4249 = vst.msk [vmem:[%s364 + $0x28] sm:$0xff] %vm2842, %v4241
      %4250 = vst.msk [vmem:[%s364 + $0x30] sm:$0xff] %vm2842, %v4242
      %4251 = vst.msk [vmem:[%s364 + $0x38] sm:$0xff] %vm2842, %v4243
      %p4252 = scmp.lt.s32.totalorder %s21, 1
      %s4253 = scalar_select %p4252, %s21, 1
      %s4254 = smul.addr %s4253, 8
      %s4255 = smul.addr %s4254, 8
      %s4256 = scalar_lea.vmem %s10, %s4255
      // Predicated region
      $region61: #{residual_block_forward.1} parent=59 // pred_check
        %p4257 = pneg %p254
      $region62: #{residual_block_forward.1} parent=59 // pred_check_branch
        %4259 = sbr.rel (%p4257) target = $region64
      $region63: #{residual_block_forward.1} parent=59 // pred_region
        _
      $region64: #{residual_block_forward.1} parent=59 // pred_fallthru
        _
    $region60: #{residual_block_forward.1} parent=5 // pred_fallthru
      _
    %p4260 = scmp.le.s32.totalorder 2, %s16
    // Predicated region
    $region65: #{residual_block_forward.1} parent=5 // pred_check
      %p4261 = pneg %p4260
    $region66: #{residual_block_forward.1} parent=5 // pred_check_branch
      %4263 = sbr.rel (%p4261) target = $region68
    $region67: #{residual_block_forward.1} parent=5 // pred_region
      %s4264 = ssub.s32 %s16, 2
      // Predicated region
      $region69: #{residual_block_forward.1} parent=67 // pred_check
        %p4265 = pneg %p260
      $region70: #{residual_block_forward.1} parent=67 // pred_check_branch
        %4267 = sbr.rel (%p4265) target = $region72
      $region71: #{residual_block_forward.1} parent=67 // pred_region
        %p4268 = scmp.lt.s32.totalorder %s22, 1
        %s4269 = scalar_select %p4268, %s22, 1
        %s4270 = smul.addr %s4269, 8
        %s4271 = smul.addr %s4270, 8
        %s4272 = scalar_lea.vmem %s10, %s4271
      $region72: #{residual_block_forward.1} parent=67 // pred_fallthru
        _
    $region68: #{residual_block_forward.1} parent=5 // pred_fallthru
      _
  $region6: #{residual_block_forward.1} parent=0 // loop_footer
    %s20 = sadd.s32 1, %s16
  $region7: #{residual_block_forward.1} parent=0 // loop_footer_branch
    %15 = sbr.rel target = $region3
  $region8: #{residual_block_forward.1} parent=0 // loop_exit
    _

</llo_original>
